<compile_context>
chip_gen: v6e
topology: v6e:2x2x1
jax: 0.10.0
libtpu: 0.0.40
codegen_flags: <defaults>
</compile_context>

<pallas_src>
import functools
import math

import jax
import jax.numpy as jnp
import numpy as np
from jax.experimental import pallas as pl
from jax.experimental.pallas import tpu as pltpu


_COL0 = 16  # interior column offset inside padded scratch (bf16 packing aligned)


def _round_up(x, m):
    return (x + m - 1) // m * m


# ----------------------------------------------------------------------------
# In-kernel helpers (operate on VMEM refs / values)
# ----------------------------------------------------------------------------
def _zero_halo(ref, H, W, Wc):
    """Zero only the halo strips read by the 3x3 taps but not overwritten by
    the interior store.  All column offsets/extents are even, so the bf16
    stores stay at 32-bit sublane granularity.  Done every grid step (cheap),
    which keeps the kernel correct for any grid order / megacore sharding."""
    C = ref.shape[-1]
    c0 = _COL0
    row_w = Wc + 4                   # covers columns [c0-2, c0+Wc+2)
    rs = (Wc - W) + 2                # right strip width (even)
    zrow = jnp.zeros((1, row_w, C), ref.dtype)
    ref[0:1, c0 - 2:c0 - 2 + row_w, :] = zrow
    ref[H + 1:H + 2, c0 - 2:c0 - 2 + row_w, :] = zrow
    ref[1:H + 1, c0 - 2:c0, :] = jnp.zeros((H, 2, C), ref.dtype)
    ref[1:H + 1, c0 + W:c0 + W + rs, :] = jnp.zeros((H, rs, C), ref.dtype)


def _conv3x3_flat(src_refs, w_ref, b_ref, *, H, Wc):
    """3x3 'same' conv + bias + ReLU as ONE deep-K MXU matmul.

    src_refs: list of zero-halo padded VMEM refs (bf16).  The 9 taps of every
    source are assembled (in registers) into a single im2col slab
    (H*Wc, 9*sum(Cin)) and contracted in one matmul against w_ref
    (9*sum(Cin), Cout).  Per-tap channel order is the order of src_refs, which
    matches the packed weight layout (decoder: [decoder_path, shortcut]).
    Returns (H*Wc, Cout) f32 (bf16 MXU inputs, f32 accumulate + epilogue).
    """
    parts = []
    for dy in range(3):
        # One aligned full-width read per source per dy; tap windows are
        # register slices of the f32 band (cheap, layout-friendly).
        bands = [r[dy:dy + H, :, :].astype(jnp.float32) for r in src_refs]
        for dx in range(3):
            lo = _COL0 - 1 + dx
            for band in bands:
                parts.append(band[:, lo:lo + Wc, :])
    col = jnp.concatenate(parts, axis=-1)                 # (H, Wc, K)
    col = col.reshape(H * Wc, col.shape[-1]).astype(w_ref.dtype)
    y = jnp.dot(col, w_ref[...], preferred_element_type=jnp.float32)
    return jnp.maximum(y + b_ref[...], 0.0)               # f32 epilogue


def _crop(y_flat, H, Wc, W):
    """(H*Wc, C) f32 -> (H, W, C) f32 (drop width-padding columns)."""
    return y_flat.reshape(H, Wc, -1)[:, :W, :]


# ----------------------------------------------------------------------------
# Kernel 1: fused encoder block (conv3x3+ReLU, conv3x3+ReLU, optional 2x2 pool)
# ----------------------------------------------------------------------------
def _enc_block_kernel(x_ref, w1_ref, b1_ref, w2_ref, b2_ref, *rest,
                      H, W, Wc, Cout, has_pool):
    if has_pool:
        out_s_ref, out_p_ref, xpad_ref, hpad_ref, rrow_ref = rest
    else:
        out_s_ref, xpad_ref, hpad_ref = rest

    _zero_halo(xpad_ref, H, W, Wc)
    _zero_halo(hpad_ref, H, W, Wc)

    # Interior write (bf16, no cast); halo stays zero.
    xpad_ref[1:H + 1, _COL0:_COL0 + W, :] = x_ref[0]

    # conv1 -> intermediate stays in VMEM (bf16, zero halo for conv2).
    h = _crop(_conv3x3_flat([xpad_ref], w1_ref, b1_ref, H=H, Wc=Wc), H, Wc, W)
    hpad_ref[1:H + 1, _COL0:_COL0 + W, :] = h.astype(hpad_ref.dtype)

    # conv2
    y = _crop(_conv3x3_flat([hpad_ref], w2_ref, b2_ref, H=H, Wc=Wc), H, Wc, W)
    out_s_ref[0] = y.astype(out_s_ref.dtype)

    # Fused 2x2 max-pool epilogue (rows via leading-dim reshape, columns via
    # stride-2 VMEM reads); all math stays in f32 before the final cast.
    if has_pool:
        Hh, Wh = H // 2, W // 2
        y4 = y.reshape(Hh, 2, W, Cout)
        rrow_ref[...] = jnp.maximum(y4[:, 0], y4[:, 1])
        p = jnp.maximum(rrow_ref[:, pl.ds(0, Wh, stride=2), :],
                        rrow_ref[:, pl.ds(1, Wh, stride=2), :])
        out_p_ref[0] = p.astype(out_p_ref.dtype)


def _encoder_block_pallas(x, p, has_pool, storage_dtype):
    N, H, W, Cin = x.shape
    Cout = p["w1"].shape[-1]
    Wc = _round_up(W, 8)
    Wp = _round_up(_COL0 + Wc + 2, 8)

    out_shape = [jax.ShapeDtypeStruct((N, H, W, Cout), storage_dtype)]
    out_specs = [pl.BlockSpec((1, H, W, Cout), lambda n: (n, 0, 0, 0))]
    scratch = [pltpu.VMEM((H + 2, Wp, Cin), storage_dtype),
               pltpu.VMEM((H + 2, Wp, Cout), storage_dtype)]
    if has_pool:
        out_shape.append(jax.ShapeDtypeStruct((N, H // 2, W // 2, Cout),
                                              storage_dtype))
        out_specs.append(pl.BlockSpec((1, H // 2, W // 2, Cout),
                                      lambda n: (n, 0, 0, 0)))
        scratch.append(pltpu.VMEM((H // 2, W, Cout), jnp.float32))

    itemsize = jnp.dtype(storage_dtype).itemsize
    flops = 2 * N * H * W * 9 * (Cin + Cout) * Cout
    bytes_accessed = int(N * H * W * Cin * itemsize
                         + (int(p["w1"].size) + int(p["w2"].size)) * itemsize
                         + sum(int(np.prod(s.shape)) for s in out_shape) * itemsize)

    single = not has_pool
    outs = pl.pallas_call(
        functools.partial(_enc_block_kernel, H=H, W=W, Wc=Wc, Cout=Cout,
                          has_pool=has_pool),
        out_shape=out_shape[0] if single else tuple(out_shape),
        grid_spec=pltpu.PrefetchScalarGridSpec(
            num_scalar_prefetch=0,
            grid=(N,),
            in_specs=[
                pl.BlockSpec((1, H, W, Cin), lambda n: (n, 0, 0, 0)),
                pl.BlockSpec((9 * Cin, Cout), lambda n: (0, 0)),
                pl.BlockSpec((1, Cout), lambda n: (0, 0)),
                pl.BlockSpec((9 * Cout, Cout), lambda n: (0, 0)),
                pl.BlockSpec((1, Cout), lambda n: (0, 0)),
            ],
            out_specs=out_specs[0] if single else tuple(out_specs),
            scratch_shapes=scratch,
        ),
        compiler_params=pltpu.CompilerParams(dimension_semantics=("parallel",)),
        cost_estimate=pl.CostEstimate(flops=int(flops), transcendentals=0,
                                      bytes_accessed=bytes_accessed),
    )(x, p["w1"], p["b1"], p["w2"], p["b2"])

    if has_pool:
        shortcut, pooled = outs
        return pooled, shortcut
    return outs, outs


# ----------------------------------------------------------------------------
# Kernel 2: fused decoder block (concat-free conv3x3+ReLU, conv3x3+ReLU,
#           and — for the last block — the final 1x1 conv epilogue)
# ----------------------------------------------------------------------------
def _dec_block_kernel(d_ref, s_ref, w1_ref, b1_ref, w2_ref, b2_ref, *rest,
                      H, W, Wc, C, fuse_last):
    if fuse_last:
        wl_ref, bl_ref, out_ref, dpad_ref, spad_ref = rest
    else:
        out_ref, dpad_ref, spad_ref = rest

    _zero_halo(dpad_ref, H, W, Wc)
    _zero_halo(spad_ref, H, W, Wc)
    dpad_ref[1:H + 1, _COL0:_COL0 + W, :] = d_ref[0]
    spad_ref[1:H + 1, _COL0:_COL0 + W, :] = s_ref[0]

    # conv1 over the virtual concat([decoder, shortcut], channel): both
    # sources are interleaved per tap into one im2col, so the concat never
    # exists in HBM and the contraction runs as one K = 9*2C matmul.
    h = _crop(_conv3x3_flat([dpad_ref, spad_ref], w1_ref, b1_ref, H=H, Wc=Wc),
              H, Wc, W)
    # Reuse dpad (already consumed, halo still zero) for the intermediate.
    dpad_ref[1:H + 1, _COL0:_COL0 + W, :] = h.astype(dpad_ref.dtype)

    y_flat = _conv3x3_flat([dpad_ref], w2_ref, b2_ref, H=H, Wc=Wc)

    if fuse_last:
        # Fused final 1x1 conv: consumes the bf16-rounded activation (same
        # storage point as the unfused path), f32 accumulate + bias, no ReLU.
        z = jnp.dot(y_flat.astype(wl_ref.dtype), wl_ref[...],
                    preferred_element_type=jnp.float32) + bl_ref[...]
        out_ref[0] = _crop(z, H, Wc, W).astype(out_ref.dtype)
    else:
        out_ref[0] = _crop(y_flat, H, Wc, W).astype(out_ref.dtype)


def _decoder_block_pallas(d, s, p, storage_dtype, last_w=None, last_b=None):
    N, H, W, C = d.shape
    Wc = _round_up(W, 8)
    Wp = _round_up(_COL0 + Wc + 2, 8)
    fuse_last = last_w is not None
    out_ch = last_w.shape[-1] if fuse_last else C
    out_dtype = jnp.float32 if fuse_last else storage_dtype

    in_specs = [
        pl.BlockSpec((1, H, W, C), lambda n: (n, 0, 0, 0)),
        pl.BlockSpec((1, H, W, C), lambda n: (n, 0, 0, 0)),
        pl.BlockSpec((9 * 2 * C, C), lambda n: (0, 0)),
        pl.BlockSpec((1, C), lambda n: (0, 0)),
        pl.BlockSpec((9 * C, C), lambda n: (0, 0)),
        pl.BlockSpec((1, C), lambda n: (0, 0)),
    ]
    args = [d, s, p["w1"], p["b1"], p["w2"], p["b2"]]
    if fuse_last:
        in_specs += [pl.BlockSpec((C, out_ch), lambda n: (0, 0)),
                     pl.BlockSpec((1, out_ch), lambda n: (0, 0))]
        args += [last_w, last_b]

    itemsize = jnp.dtype(storage_dtype).itemsize
    flops = 2 * N * H * W * 9 * (3 * C) * C
    if fuse_last:
        flops += 2 * N * H * W * C * out_ch
    bytes_accessed = int((2 * N * H * W * C + int(p["w1"].size)
                          + int(p["w2"].size)) * itemsize
                         + N * H * W * out_ch * jnp.dtype(out_dtype).itemsize)

    return pl.pallas_call(
        functools.partial(_dec_block_kernel, H=H, W=W, Wc=Wc, C=C,
                          fuse_last=fuse_last),
        out_shape=jax.ShapeDtypeStruct((N, H, W, out_ch), out_dtype),
        grid_spec=pltpu.PrefetchScalarGridSpec(
            num_scalar_prefetch=0,
            grid=(N,),
            in_specs=in_specs,
            out_specs=pl.BlockSpec((1, H, W, out_ch), lambda n: (n, 0, 0, 0)),
            scratch_shapes=[
                pltpu.VMEM((H + 2, Wp, C), storage_dtype),
                pltpu.VMEM((H + 2, Wp, C), storage_dtype),
            ],
        ),
        compiler_params=pltpu.CompilerParams(dimension_semantics=("parallel",)),
        cost_estimate=pl.CostEstimate(flops=int(flops), transcendentals=0,
                                      bytes_accessed=bytes_accessed),
    )(*args)


# ----------------------------------------------------------------------------
# Kernel 3: fused matmul + bias (+ReLU)  (transposed 2x2 conv, standalone 1x1)
# ----------------------------------------------------------------------------
def _matmul_bias_kernel(x_ref, w_ref, b_ref, o_ref, *, relu):
    y = jnp.dot(x_ref[...], w_ref[...], preferred_element_type=jnp.float32)
    y = y + b_ref[...]                 # f32 epilogue
    if relu:
        y = jnp.maximum(y, 0.0)
    o_ref[...] = y.astype(o_ref.dtype)


def _mm_pallas(x, w, b2d, relu=False, out_dtype=None):
    """(M, K) @ (K, N) + bias (+ReLU); bf16 operands, f32 accumulation.

    Ragged M handled by zero padding; weights/bias blocks have a constant
    index_map so they stay resident across the M grid.
    TODO(synk): K/N-tile with an f32 VMEM accumulator for v7x-scale shapes.
    """
    M, K = x.shape
    _, N = w.shape
    out_dtype = x.dtype if out_dtype is None else out_dtype
    if M >= 1024:
        tm = 512
    elif M > 256:
        tm = 256
    else:
        tm = _round_up(M, 8)
    Mp = _round_up(M, tm)
    xp = jnp.pad(x, ((0, Mp - M), (0, 0))) if Mp != M else x

    flops = 2 * Mp * K * N
    bytes_accessed = int(Mp * K * xp.dtype.itemsize + K * N * w.dtype.itemsize
                         + Mp * N * jnp.dtype(out_dtype).itemsize)

    y = pl.pallas_call(
        functools.partial(_matmul_bias_kernel, relu=relu),
        out_shape=jax.ShapeDtypeStruct((Mp, N), out_dtype),
        grid_spec=pltpu.PrefetchScalarGridSpec(
            num_scalar_prefetch=0,
            grid=(Mp // tm,),
            in_specs=[
                pl.BlockSpec((tm, K), lambda i: (i, 0)),
                pl.BlockSpec((K, N), lambda i: (0, 0)),
                pl.BlockSpec((1, N), lambda i: (0, 0)),
            ],
            out_specs=pl.BlockSpec((tm, N), lambda i: (i, 0)),
        ),
        compiler_params=pltpu.CompilerParams(dimension_semantics=("parallel",)),
        cost_estimate=pl.CostEstimate(flops=int(flops), transcendentals=0,
                                      bytes_accessed=bytes_accessed),
    )(xp, w, b2d)
    return y[:M] if Mp != M else y


# ----------------------------------------------------------------------------
# Pure-JAX references (same packed weights / same bf16 storage points)
# ----------------------------------------------------------------------------
def _mm_ref(x, w, b2d, relu=False):
    y = jnp.dot(x, w, precision=jax.lax.Precision.HIGHEST) + b2d
    if relu:
        y = jnp.maximum(y, 0.0)
    return y


def _conv3x3_ref(x, w_packed, b2d, relu=True):
    # x: (N,H,W,Cin) f32; w_packed: (9*Cin, Cout)
    N, H, W, _ = x.shape
    xp = jnp.pad(x, ((0, 0), (1, 1), (1, 1), (0, 0)))
    col = jnp.concatenate([xp[:, dy:dy + H, dx:dx + W, :]
                           for dy in range(3) for dx in range(3)], axis=-1)
    y = jnp.einsum("nhwk,kc->nhwc", col, w_packed.astype(jnp.float32),
                   precision=jax.lax.Precision.HIGHEST)
    y = y + b2d.reshape(1, 1, 1, -1)
    return jnp.maximum(y, 0.0) if relu else y


def _encoder_block_ref(x, p, has_pool, storage_dtype):
    N, H, W, _ = x.shape
    xf = x.astype(jnp.float32)
    h = _conv3x3_ref(xf, p["w1"], p["b1"])
    h = h.astype(storage_dtype).astype(jnp.float32)
    y = _conv3x3_ref(h, p["w2"], p["b2"])
    Cout = y.shape[-1]
    shortcut = y.astype(storage_dtype)
    if has_pool:
        pooled = jnp.max(y.reshape(N, H // 2, 2, W // 2, 2, Cout),
                         axis=(2, 4)).astype(storage_dtype)
        return pooled, shortcut
    return shortcut, shortcut


def _decoder_block_ref(d, s, p, storage_dtype, last_w=None, last_b=None):
    x = jnp.concatenate([d, s], axis=-1).astype(jnp.float32)
    h = _conv3x3_ref(x, p["w1"], p["b1"])
    h = h.astype(storage_dtype).astype(jnp.float32)
    y = _conv3x3_ref(h, p["w2"], p["b2"])
    if last_w is not None:
        yb = y.astype(storage_dtype).astype(jnp.float32)
        z = jnp.einsum("nhwc,cd->nhwd", yb, last_w.astype(jnp.float32),
                       precision=jax.lax.Precision.HIGHEST)
        return z + last_b.reshape(1, 1, 1, -1)
    return y.astype(storage_dtype)


# ----------------------------------------------------------------------------
# Layer wrappers shared by both paths
# ----------------------------------------------------------------------------
def upconv2x2(x, wu, bu, storage_dtype, use_pallas):
    """ConvTranspose2d(k=2, s=2). x: (N,H,W,Cin); wu: packed (Cin, 4*Cout)."""
    N, H, W, Cin = x.shape
    Cout = wu.shape[-1] // 4
    xm = x.reshape(N * H * W, Cin)
    if use_pallas:
        y = _mm_pallas(xm, wu, bu, relu=False, out_dtype=storage_dtype)
    else:
        y = _mm_ref(xm.astype(jnp.float32), wu.astype(jnp.float32),
                    bu).astype(storage_dtype)
    # sub-pixel shuffle (pure data-movement glue, XLA)
    y = (y.reshape(N, H, W, 2, 2, Cout)
           .transpose(0, 1, 3, 2, 4, 5)
           .reshape(N, 2 * H, 2 * W, Cout))
    return y


def conv1x1(x, w, b2d, use_pallas):
    # Only used when the network has no decoder blocks (num_levels == 1);
    # otherwise the 1x1 conv is fused into the last decoder kernel.
    N, H, W, Cin = x.shape
    xm = x.reshape(N * H * W, Cin)
    if use_pallas:
        y = _mm_pallas(xm, w, b2d, relu=False, out_dtype=jnp.float32)
    else:
        y = _mm_ref(xm.astype(jnp.float32), w.astype(jnp.float32), b2d)
    return y.reshape(N, H, W, -1)


# ----------------------------------------------------------------------------
# Parameter initialization (torch layouts) and one-time prepacking
# ----------------------------------------------------------------------------
def _xavier_normal(key, shape, fan_in, fan_out):
    std = math.sqrt(2.0 / (fan_in + fan_out))
    return std * jax.random.normal(key, shape, dtype=jnp.float32)


def init_unet_params(key, out_channels, in_channels, num_levels, start_channels):
    params = {"down": [], "up": []}
    pool_flags = []
    outs = None
    for i in range(num_levels):
        ins = in_channels if i == 0 else outs
        outs = start_channels * 2 ** i
        key, k1, k2 = jax.random.split(key, 3)
        params["down"].append({
            "w1": _xavier_normal(k1, (outs, ins, 3, 3), ins * 9, outs * 9),
            "b1": jnp.zeros((outs,), jnp.float32),
            "w2": _xavier_normal(k2, (outs, outs, 3, 3), outs * 9, outs * 9),
            "b2": jnp.zeros((outs,), jnp.float32),
        })
        pool_flags.append(i < num_levels - 1)
    for i in range(num_levels - 1):
        ins = outs
        outs = ins // 2
        key, ku, k1, k2 = jax.random.split(key, 4)
        params["up"].append({
            "wu": _xavier_normal(ku, (ins, outs, 2, 2), outs * 4, ins * 4),
            "bu": jnp.zeros((outs,), jnp.float32),
            "w1": _xavier_normal(k1, (outs, 2 * outs, 3, 3), 2 * outs * 9, outs * 9),
            "b1": jnp.zeros((outs,), jnp.float32),
            "w2": _xavier_normal(k2, (outs, outs, 3, 3), outs * 9, outs * 9),
            "b2": jnp.zeros((outs,), jnp.float32),
        })
    key, kl = jax.random.split(key)
    params["last_w"] = _xavier_normal(kl, (out_channels, outs, 1, 1),
                                      outs, out_channels)
    params["last_b"] = jnp.zeros((out_channels,), jnp.float32)
    return params, pool_flags


def pack_unet_params(params, storage_dtype=jnp.bfloat16):
    """One-time weight transpose/reshape/cast to kernel-native layouts."""
    packed = {"down": [], "up": []}
    for p in params["down"]:
        Cout, Cin = p["w1"].shape[:2]
        packed["down"].append({
            "w1": jnp.transpose(p["w1"], (2, 3, 1, 0))
                    .reshape(9 * Cin, Cout).astype(storage_dtype),
            "b1": p["b1"].reshape(1, Cout).astype(jnp.float32),
            "w2": jnp.transpose(p["w2"], (2, 3, 1, 0))
                    .reshape(9 * Cout, Cout).astype(storage_dtype),
            "b2": p["b2"].reshape(1, Cout).astype(jnp.float32),
        })
    for p in params["up"]:
        Cin_u, Cout = p["wu"].shape[:2]
        packed["up"].append({
            "wu": jnp.transpose(p["wu"], (0, 2, 3, 1))
                    .reshape(Cin_u, 4 * Cout).astype(storage_dtype),
            "bu": jnp.tile(p["bu"], 4).reshape(1, 4 * Cout).astype(jnp.float32),
            # torch.cat((decoder_path, shortcut), 1): per-tap input channel
            # order [decoder (Cout), shortcut (Cout)], matching the kernel.
            "w1": jnp.transpose(p["w1"], (2, 3, 1, 0))
                    .reshape(9 * 2 * Cout, Cout).astype(storage_dtype),
            "b1": p["b1"].reshape(1, Cout).astype(jnp.float32),
            "w2": jnp.transpose(p["w2"], (2, 3, 1, 0))
                    .reshape(9 * Cout, Cout).astype(storage_dtype),
            "b2": p["b2"].reshape(1, Cout).astype(jnp.float32),
        })
    out_ch, c_last = params["last_w"].shape[:2]
    packed["last_w"] = params["last_w"].reshape(out_ch, c_last).T.astype(storage_dtype)
    packed["last_b"] = params["last_b"].reshape(1, out_ch).astype(jnp.float32)
    return packed


# ----------------------------------------------------------------------------
# UNet forward
# ----------------------------------------------------------------------------
def unet_forward(packed, pool_flags, x_nchw, use_pallas=True,
                 storage_dtype=jnp.bfloat16):
    enc_block = _encoder_block_pallas if use_pallas else _encoder_block_ref
    dec_block = _decoder_block_pallas if use_pallas else _decoder_block_ref

    x = jnp.transpose(x_nchw, (0, 2, 3, 1)).astype(storage_dtype)  # NCHW -> NHWC
    encoder_outs = []
    for p, has_pool in zip(packed["down"], pool_flags):
        x, shortcut = enc_block(x, p, has_pool, storage_dtype)
        encoder_outs.append(shortcut)

    n_up = len(packed["up"])
    for i, p in enumerate(packed["up"]):
        shortcut = encoder_outs[-(i + 2)]
        d = upconv2x2(x, p["wu"], p["bu"], storage_dtype, use_pallas)
        if i == n_up - 1:   # fuse the final 1x1 conv into the last block
            x = dec_block(d, shortcut, p, storage_dtype,
                          last_w=packed["last_w"], last_b=packed["last_b"])
        else:
            x = dec_block(d, shortcut, p, storage_dtype)

    if n_up == 0:
        x = conv1x1(x, packed["last_w"], packed["last_b"], use_pallas)
    return jnp.transpose(x, (0, 3, 1, 2))                          # NHWC -> NCHW


# ----------------------------------------------------------------------------
if __name__ == "__main__":
    key = jax.random.PRNGKey(0)
    kp, kx = jax.random.split(key)

    # UNet(out_channels=2, in_channels=3, num_levels=3, start_channels=8)
    N, Cin, H, W = 2, 3, 16, 16
    out_channels, num_levels, start_channels = 2, 3, 8

    raw_params, pool_flags = init_unet_params(kp, out_channels, Cin,
                                              num_levels, start_channels)
    packed = pack_unet_params(raw_params, storage_dtype=jnp.bfloat16)
    x = jax.random.normal(kx, (N, Cin, H, W), dtype=jnp.float32)

    y = unet_forward(packed, pool_flags, x, use_pallas=True)
    y = jax.block_until_ready(y)

    assert y.shape == (N, out_channels, H, W), y.shape
    assert bool(jnp.all(jnp.isfinite(y)))

    # numerical smoke check against the same math (same bf16 storage points,
    # f32 accumulation) in plain JAX
    y_ref = unet_forward(packed, pool_flags, x, use_pallas=False)
    np.testing.assert_allclose(np.asarray(y, np.float32),
                               np.asarray(y_ref, np.float32),
                               rtol=3e-2, atol=3e-2)

    print("KERNEL_OK")
</pallas_src>

<mosaic_0001>
module attributes {stable_mosaic.version = 11 : i64} {
  func.func @_enc_block_kernel(%arg0: i32, %arg1: memref<1x16x16x3xbf16, #tpu.memory_space<vmem>>, %arg2: memref<27x8xbf16, #tpu.memory_space<vmem>>, %arg3: memref<1x8xf32, #tpu.memory_space<vmem>>, %arg4: memref<72x8xbf16, #tpu.memory_space<vmem>>, %arg5: memref<1x8xf32, #tpu.memory_space<vmem>>, %arg6: memref<1x16x16x8xbf16, #tpu.memory_space<vmem>>, %arg7: memref<1x8x8x8xbf16, #tpu.memory_space<vmem>>, %arg8: memref<18x40x3xbf16, #tpu.memory_space<vmem>>, %arg9: memref<18x40x8xbf16, #tpu.memory_space<vmem>>, %arg10: memref<8x16x8xf32, #tpu.memory_space<vmem>>) attributes {dimension_semantics = [#tpu.dimension_semantics<parallel>], iteration_bounds = array<i64: 2>, scalar_prefetch = 0 : i64, scratch_operands = 3 : i64, tpu.core_type = #tpu.core_type<tc>, window_params = [{transform_indices = @transform_0, window_bounds = array<i64: 1, 16, 16, 3>}, {pipeline_mode = #tpu.pipeline_mode<synchronous>, transform_indices = @transform_1, window_bounds = array<i64: 27, 8>}, {pipeline_mode = #tpu.pipeline_mode<synchronous>, transform_indices = @transform_2, window_bounds = array<i64: 1, 8>}, {pipeline_mode = #tpu.pipeline_mode<synchronous>, transform_indices = @transform_3, window_bounds = array<i64: 72, 8>}, {pipeline_mode = #tpu.pipeline_mode<synchronous>, transform_indices = @transform_4, window_bounds = array<i64: 1, 8>}, {transform_indices = @transform_5, window_bounds = array<i64: 1, 16, 16, 8>}, {transform_indices = @transform_6, window_bounds = array<i64: 1, 8, 8, 8>}]} {
    %cst = arith.constant 0.000000e+00 : bf16
    %0 = vector.broadcast %cst : bf16 to vector<1x20x3xbf16>
    %c0 = arith.constant 0 : index
    %c14 = arith.constant 14 : index
    %c0_0 = arith.constant 0 : index
    %1 = vector.load %arg8[%c0, %c14, %c0_0] : memref<18x40x3xbf16, #tpu.memory_space<vmem>>, vector<1x20x3xbf16>
    tpu.vector_store %arg8[%c0, %c14, %c0_0], %0 {strides = array<i32>} : memref<18x40x3xbf16, #tpu.memory_space<vmem>>, vector<1x20x3xbf16>,
    %c17 = arith.constant 17 : index
    %c14_1 = arith.constant 14 : index
    %c0_2 = arith.constant 0 : index
    %2 = vector.load %arg8[%c17, %c14_1, %c0_2] : memref<18x40x3xbf16, #tpu.memory_space<vmem>>, vector<1x20x3xbf16>
    tpu.vector_store %arg8[%c17, %c14_1, %c0_2], %0 {strides = array<i32>} : memref<18x40x3xbf16, #tpu.memory_space<vmem>>, vector<1x20x3xbf16>,
    %cst_3 = arith.constant 0.000000e+00 : bf16
    %3 = vector.broadcast %cst_3 : bf16 to vector<16x2x3xbf16>
    %c1 = arith.constant 1 : index
    %c14_4 = arith.constant 14 : index
    %c0_5 = arith.constant 0 : index
    %4 = vector.load %arg8[%c1, %c14_4, %c0_5] : memref<18x40x3xbf16, #tpu.memory_space<vmem>>, vector<16x2x3xbf16>
    tpu.vector_store %arg8[%c1, %c14_4, %c0_5], %3 {strides = array<i32>} : memref<18x40x3xbf16, #tpu.memory_space<vmem>>, vector<16x2x3xbf16>,
    %cst_6 = arith.constant 0.000000e+00 : bf16
    %5 = vector.broadcast %cst_6 : bf16 to vector<16x2x3xbf16>
    %c1_7 = arith.constant 1 : index
    %c32 = arith.constant 32 : index
    %c0_8 = arith.constant 0 : index
    %6 = vector.load %arg8[%c1_7, %c32, %c0_8] : memref<18x40x3xbf16, #tpu.memory_space<vmem>>, vector<16x2x3xbf16>
    tpu.vector_store %arg8[%c1_7, %c32, %c0_8], %5 {strides = array<i32>} : memref<18x40x3xbf16, #tpu.memory_space<vmem>>, vector<16x2x3xbf16>,
    %cst_9 = arith.constant 0.000000e+00 : bf16
    %7 = vector.broadcast %cst_9 : bf16 to vector<1x20x8xbf16>
    %c0_10 = arith.constant 0 : index
    %c14_11 = arith.constant 14 : index
    %c0_12 = arith.constant 0 : index
    %8 = vector.load %arg9[%c0_10, %c14_11, %c0_12] : memref<18x40x8xbf16, #tpu.memory_space<vmem>>, vector<1x20x8xbf16>
    tpu.vector_store %arg9[%c0_10, %c14_11, %c0_12], %7 {strides = array<i32>} : memref<18x40x8xbf16, #tpu.memory_space<vmem>>, vector<1x20x8xbf16>,
    %c17_13 = arith.constant 17 : index
    %c14_14 = arith.constant 14 : index
    %c0_15 = arith.constant 0 : index
    %9 = vector.load %arg9[%c17_13, %c14_14, %c0_15] : memref<18x40x8xbf16, #tpu.memory_space<vmem>>, vector<1x20x8xbf16>
    tpu.vector_store %arg9[%c17_13, %c14_14, %c0_15], %7 {strides = array<i32>} : memref<18x40x8xbf16, #tpu.memory_space<vmem>>, vector<1x20x8xbf16>,
    %cst_16 = arith.constant 0.000000e+00 : bf16
    %10 = vector.broadcast %cst_16 : bf16 to vector<16x2x8xbf16>
    %c1_17 = arith.constant 1 : index
    %c14_18 = arith.constant 14 : index
    %c0_19 = arith.constant 0 : index
    %11 = vector.load %arg9[%c1_17, %c14_18, %c0_19] : memref<18x40x8xbf16, #tpu.memory_space<vmem>>, vector<16x2x8xbf16>
    tpu.vector_store %arg9[%c1_17, %c14_18, %c0_19], %10 {strides = array<i32>} : memref<18x40x8xbf16, #tpu.memory_space<vmem>>, vector<16x2x8xbf16>,
    %cst_20 = arith.constant 0.000000e+00 : bf16
    %12 = vector.broadcast %cst_20 : bf16 to vector<16x2x8xbf16>
    %c1_21 = arith.constant 1 : index
    %c32_22 = arith.constant 32 : index
    %c0_23 = arith.constant 0 : index
    %13 = vector.load %arg9[%c1_21, %c32_22, %c0_23] : memref<18x40x8xbf16, #tpu.memory_space<vmem>>, vector<16x2x8xbf16>
    tpu.vector_store %arg9[%c1_21, %c32_22, %c0_23], %12 {strides = array<i32>} : memref<18x40x8xbf16, #tpu.memory_space<vmem>>, vector<16x2x8xbf16>,
    %c0_24 = arith.constant 0 : index
    %c0_25 = arith.constant 0 : index
    %c0_26 = arith.constant 0 : index
    %c0_27 = arith.constant 0 : index
    %14 = vector.load %arg1[%c0_24, %c0_25, %c0_26, %c0_27] : memref<1x16x16x3xbf16, #tpu.memory_space<vmem>>, vector<1x16x16x3xbf16>
    %15 = vector.shape_cast %14 : vector<1x16x16x3xbf16> to vector<16x16x3xbf16>
    %c1_28 = arith.constant 1 : index
    %c16 = arith.constant 16 : index
    %c0_29 = arith.constant 0 : index
    %16 = vector.load %arg8[%c1_28, %c16, %c0_29] : memref<18x40x3xbf16, #tpu.memory_space<vmem>>, vector<16x16x3xbf16>
    tpu.vector_store %arg8[%c1_28, %c16, %c0_29], %15 {strides = array<i32>} : memref<18x40x3xbf16, #tpu.memory_space<vmem>>, vector<16x16x3xbf16>,
    %c0_30 = arith.constant 0 : index
    %c0_31 = arith.constant 0 : index
    %c0_32 = arith.constant 0 : index
    %17 = vector.load %arg8[%c0_30, %c0_31, %c0_32] : memref<18x40x3xbf16, #tpu.memory_space<vmem>>, vector<16x40x3xbf16>
    %18 = arith.extf %17 : vector<16x40x3xbf16> to vector<16x40x3xf32>
    %19 = vector.extract_strided_slice %18 {offsets = [0, 15, 0], sizes = [16, 16, 3], strides = [1, 1, 1]} : vector<16x40x3xf32> to vector<16x16x3xf32>
    %20 = vector.extract_strided_slice %18 {offsets = [0, 16, 0], sizes = [16, 16, 3], strides = [1, 1, 1]} : vector<16x40x3xf32> to vector<16x16x3xf32>
    %21 = vector.extract_strided_slice %18 {offsets = [0, 17, 0], sizes = [16, 16, 3], strides = [1, 1, 1]} : vector<16x40x3xf32> to vector<16x16x3xf32>
    %c1_33 = arith.constant 1 : index
    %c0_34 = arith.constant 0 : index
    %c0_35 = arith.constant 0 : index
    %22 = vector.load %arg8[%c1_33, %c0_34, %c0_35] : memref<18x40x3xbf16, #tpu.memory_space<vmem>>, vector<16x40x3xbf16>
    %23 = arith.extf %22 : vector<16x40x3xbf16> to vector<16x40x3xf32>
    %24 = vector.extract_strided_slice %23 {offsets = [0, 15, 0], sizes = [16, 16, 3], strides = [1, 1, 1]} : vector<16x40x3xf32> to vector<16x16x3xf32>
    %25 = vector.extract_strided_slice %23 {offsets = [0, 16, 0], sizes = [16, 16, 3], strides = [1, 1, 1]} : vector<16x40x3xf32> to vector<16x16x3xf32>
    %26 = vector.extract_strided_slice %23 {offsets = [0, 17, 0], sizes = [16, 16, 3], strides = [1, 1, 1]} : vector<16x40x3xf32> to vector<16x16x3xf32>
    %c2 = arith.constant 2 : index
    %c0_36 = arith.constant 0 : index
    %c0_37 = arith.constant 0 : index
    %27 = vector.load %arg8[%c2, %c0_36, %c0_37] : memref<18x40x3xbf16, #tpu.memory_space<vmem>>, vector<16x40x3xbf16>
    %28 = arith.extf %27 : vector<16x40x3xbf16> to vector<16x40x3xf32>
    %29 = vector.extract_strided_slice %28 {offsets = [0, 15, 0], sizes = [16, 16, 3], strides = [1, 1, 1]} : vector<16x40x3xf32> to vector<16x16x3xf32>
    %30 = vector.extract_strided_slice %28 {offsets = [0, 16, 0], sizes = [16, 16, 3], strides = [1, 1, 1]} : vector<16x40x3xf32> to vector<16x16x3xf32>
    %31 = vector.extract_strided_slice %28 {offsets = [0, 17, 0], sizes = [16, 16, 3], strides = [1, 1, 1]} : vector<16x40x3xf32> to vector<16x16x3xf32>
    %32 = tpu.concatenate %19, %20, %21, %24, %25, %26, %29, %30, %31 in 2 : vector<16x16x3xf32>, vector<16x16x3xf32>, vector<16x16x3xf32>, vector<16x16x3xf32>, vector<16x16x3xf32>, vector<16x16x3xf32>, vector<16x16x3xf32>, vector<16x16x3xf32>, vector<16x16x3xf32> -> vector<16x16x27xf32>
    %33 = vector.shape_cast %32 : vector<16x16x27xf32> to vector<256x27xf32>
    %34 = arith.truncf %33 : vector<256x27xf32> to vector<256x27xbf16>
    %c0_38 = arith.constant 0 : index
    %c0_39 = arith.constant 0 : index
    %35 = vector.load %arg2[%c0_38, %c0_39] : memref<27x8xbf16, #tpu.memory_space<vmem>>, vector<27x8xbf16>
    %cst_40 = arith.constant dense<0.000000e+00> : vector<256x8xf32>
    %36 = tpu.matmul %34, %35, %cst_40 {dimension_numbers = #tpu.dot_dimension_numbers<[1], [0], [0], [1], [0, 0, 1, 1], [], []>} : vector<256x27xbf16>, vector<27x8xbf16>, vector<256x8xf32> -> vector<256x8xf32>
    %c0_41 = arith.constant 0 : index
    %c0_42 = arith.constant 0 : index
    %37 = vector.load %arg3[%c0_41, %c0_42] : memref<1x8xf32, #tpu.memory_space<vmem>>, vector<1x8xf32>
    %38 = vector.broadcast %37 : vector<1x8xf32> to vector<256x8xf32>
    %39 = arith.addf %36, %38 : vector<256x8xf32>
    %cst_43 = arith.constant 0.000000e+00 : f32
    %40 = vector.broadcast %cst_43 : f32 to vector<256x8xf32>
    %41 = arith.maximumf %39, %40 : vector<256x8xf32>
    %42 = vector.shape_cast %41 : vector<256x8xf32> to vector<16x16x8xf32>
    %43 = arith.truncf %42 : vector<16x16x8xf32> to vector<16x16x8xbf16>
    %c1_44 = arith.constant 1 : index
    %c16_45 = arith.constant 16 : index
    %c0_46 = arith.constant 0 : index
    %44 = vector.load %arg9[%c1_44, %c16_45, %c0_46] : memref<18x40x8xbf16, #tpu.memory_space<vmem>>, vector<16x16x8xbf16>
    tpu.vector_store %arg9[%c1_44, %c16_45, %c0_46], %43 {strides = array<i32>} : memref<18x40x8xbf16, #tpu.memory_space<vmem>>, vector<16x16x8xbf16>,
    %c0_47 = arith.constant 0 : index
    %c0_48 = arith.constant 0 : index
    %c0_49 = arith.constant 0 : index
    %45 = vector.load %arg9[%c0_47, %c0_48, %c0_49] : memref<18x40x8xbf16, #tpu.memory_space<vmem>>, vector<16x40x8xbf16>
    %46 = arith.extf %45 : vector<16x40x8xbf16> to vector<16x40x8xf32>
    %47 = vector.extract_strided_slice %46 {offsets = [0, 15, 0], sizes = [16, 16, 8], strides = [1, 1, 1]} : vector<16x40x8xf32> to vector<16x16x8xf32>
    %48 = vector.extract_strided_slice %46 {offsets = [0, 16, 0], sizes = [16, 16, 8], strides = [1, 1, 1]} : vector<16x40x8xf32> to vector<16x16x8xf32>
    %49 = vector.extract_strided_slice %46 {offsets = [0, 17, 0], sizes = [16, 16, 8], strides = [1, 1, 1]} : vector<16x40x8xf32> to vector<16x16x8xf32>
    %c1_50 = arith.constant 1 : index
    %c0_51 = arith.constant 0 : index
    %c0_52 = arith.constant 0 : index
    %50 = vector.load %arg9[%c1_50, %c0_51, %c0_52] : memref<18x40x8xbf16, #tpu.memory_space<vmem>>, vector<16x40x8xbf16>
    %51 = arith.extf %50 : vector<16x40x8xbf16> to vector<16x40x8xf32>
    %52 = vector.extract_strided_slice %51 {offsets = [0, 15, 0], sizes = [16, 16, 8], strides = [1, 1, 1]} : vector<16x40x8xf32> to vector<16x16x8xf32>
    %53 = vector.extract_strided_slice %51 {offsets = [0, 16, 0], sizes = [16, 16, 8], strides = [1, 1, 1]} : vector<16x40x8xf32> to vector<16x16x8xf32>
    %54 = vector.extract_strided_slice %51 {offsets = [0, 17, 0], sizes = [16, 16, 8], strides = [1, 1, 1]} : vector<16x40x8xf32> to vector<16x16x8xf32>
    %c2_53 = arith.constant 2 : index
    %c0_54 = arith.constant 0 : index
    %c0_55 = arith.constant 0 : index
    %55 = vector.load %arg9[%c2_53, %c0_54, %c0_55] : memref<18x40x8xbf16, #tpu.memory_space<vmem>>, vector<16x40x8xbf16>
    %56 = arith.extf %55 : vector<16x40x8xbf16> to vector<16x40x8xf32>
    %57 = vector.extract_strided_slice %56 {offsets = [0, 15, 0], sizes = [16, 16, 8], strides = [1, 1, 1]} : vector<16x40x8xf32> to vector<16x16x8xf32>
    %58 = vector.extract_strided_slice %56 {offsets = [0, 16, 0], sizes = [16, 16, 8], strides = [1, 1, 1]} : vector<16x40x8xf32> to vector<16x16x8xf32>
    %59 = vector.extract_strided_slice %56 {offsets = [0, 17, 0], sizes = [16, 16, 8], strides = [1, 1, 1]} : vector<16x40x8xf32> to vector<16x16x8xf32>
    %60 = tpu.concatenate %47, %48, %49, %52, %53, %54, %57, %58, %59 in 2 : vector<16x16x8xf32>, vector<16x16x8xf32>, vector<16x16x8xf32>, vector<16x16x8xf32>, vector<16x16x8xf32>, vector<16x16x8xf32>, vector<16x16x8xf32>, vector<16x16x8xf32>, vector<16x16x8xf32> -> vector<16x16x72xf32>
    %61 = vector.shape_cast %60 : vector<16x16x72xf32> to vector<256x72xf32>
    %62 = arith.truncf %61 : vector<256x72xf32> to vector<256x72xbf16>
    %c0_56 = arith.constant 0 : index
    %c0_57 = arith.constant 0 : index
    %63 = vector.load %arg4[%c0_56, %c0_57] : memref<72x8xbf16, #tpu.memory_space<vmem>>, vector<72x8xbf16>
    %cst_58 = arith.constant dense<0.000000e+00> : vector<256x8xf32>
    %64 = tpu.matmul %62, %63, %cst_58 {dimension_numbers = #tpu.dot_dimension_numbers<[1], [0], [0], [1], [0, 0, 1, 1], [], []>} : vector<256x72xbf16>, vector<72x8xbf16>, vector<256x8xf32> -> vector<256x8xf32>
    %c0_59 = arith.constant 0 : index
    %c0_60 = arith.constant 0 : index
    %65 = vector.load %arg5[%c0_59, %c0_60] : memref<1x8xf32, #tpu.memory_space<vmem>>, vector<1x8xf32>
    %66 = vector.broadcast %65 : vector<1x8xf32> to vector<256x8xf32>
    %67 = arith.addf %64, %66 : vector<256x8xf32>
    %cst_61 = arith.constant 0.000000e+00 : f32
    %68 = vector.broadcast %cst_61 : f32 to vector<256x8xf32>
    %69 = arith.maximumf %67, %68 : vector<256x8xf32>
    %70 = vector.shape_cast %69 : vector<256x8xf32> to vector<16x16x8xf32>
    %71 = arith.truncf %70 : vector<16x16x8xf32> to vector<16x16x8xbf16>
    %c0_62 = arith.constant 0 : index
    %c0_63 = arith.constant 0 : index
    %c0_64 = arith.constant 0 : index
    %c0_65 = arith.constant 0 : index
    %72 = vector.load %arg6[%c0_62, %c0_63, %c0_64, %c0_65] : memref<1x16x16x8xbf16, #tpu.memory_space<vmem>>, vector<1x16x16x8xbf16>
    %73 = vector.shape_cast %72 : vector<1x16x16x8xbf16> to vector<16x16x8xbf16>
    %74 = vector.shape_cast %71 : vector<16x16x8xbf16> to vector<1x16x16x8xbf16>
    tpu.vector_store %arg6[%c0_62, %c0_63, %c0_64, %c0_65], %74 {strides = array<i32>} : memref<1x16x16x8xbf16, #tpu.memory_space<vmem>>, vector<1x16x16x8xbf16>,
    %75 = vector.shape_cast %70 : vector<16x16x8xf32> to vector<8x2x16x8xf32>
    %76 = vector.extract_strided_slice %75 {offsets = [0, 0, 0, 0], sizes = [8, 1, 16, 8], strides = [1, 1, 1, 1]} : vector<8x2x16x8xf32> to vector<8x1x16x8xf32>
    %77 = vector.shape_cast %76 : vector<8x1x16x8xf32> to vector<8x16x8xf32>
    %78 = vector.extract_strided_slice %75 {offsets = [0, 1, 0, 0], sizes = [8, 1, 16, 8], strides = [1, 1, 1, 1]} : vector<8x2x16x8xf32> to vector<8x1x16x8xf32>
    %79 = vector.shape_cast %78 : vector<8x1x16x8xf32> to vector<8x16x8xf32>
    %80 = arith.maximumf %77, %79 : vector<8x16x8xf32>
    %c0_66 = arith.constant 0 : index
    %c0_67 = arith.constant 0 : index
    %c0_68 = arith.constant 0 : index
    %81 = vector.load %arg10[%c0_66, %c0_67, %c0_68] : memref<8x16x8xf32, #tpu.memory_space<vmem>>, vector<8x16x8xf32>
    tpu.vector_store %arg10[%c0_66, %c0_67, %c0_68], %80 {strides = array<i32>} : memref<8x16x8xf32, #tpu.memory_space<vmem>>, vector<8x16x8xf32>,
    %c0_69 = arith.constant 0 : index
    %c0_70 = arith.constant 0 : index
    %c0_71 = arith.constant 0 : index
    %82 = tpu.strided_load %arg10[%c0_69, %c0_70, %c0_71] {strides = array<i32: 1, 2, 1>} : memref<8x16x8xf32, #tpu.memory_space<vmem>>, vector<8x8x8xf32>
    %c0_72 = arith.constant 0 : index
    %c1_73 = arith.constant 1 : index
    %c0_74 = arith.constant 0 : index
    %83 = tpu.strided_load %arg10[%c0_72, %c1_73, %c0_74] {strides = array<i32: 1, 2, 1>} : memref<8x16x8xf32, #tpu.memory_space<vmem>>, vector<8x8x8xf32>
    %84 = arith.maximumf %82, %83 : vector<8x8x8xf32>
    %85 = arith.truncf %84 : vector<8x8x8xf32> to vector<8x8x8xbf16>
    %c0_75 = arith.constant 0 : index
    %c0_76 = arith.constant 0 : index
    %c0_77 = arith.constant 0 : index
    %c0_78 = arith.constant 0 : index
    %86 = vector.load %arg7[%c0_75, %c0_76, %c0_77, %c0_78] : memref<1x8x8x8xbf16, #tpu.memory_space<vmem>>, vector<1x8x8x8xbf16>
    %87 = vector.shape_cast %86 : vector<1x8x8x8xbf16> to vector<8x8x8xbf16>
    %88 = vector.shape_cast %85 : vector<8x8x8xbf16> to vector<1x8x8x8xbf16>
    tpu.vector_store %arg7[%c0_75, %c0_76, %c0_77, %c0_78], %88 {strides = array<i32>} : memref<1x8x8x8xbf16, #tpu.memory_space<vmem>>, vector<1x8x8x8xbf16>,
    return
  }
  func.func @transform_0(%arg0: i32) -> (i32, i32, i32, i32) {
    %c0_i32 = arith.constant 0 : i32
    %c0_i32_0 = arith.constant 0 : i32
    %c0_i32_1 = arith.constant 0 : i32
    %c0_i32_2 = arith.constant 0 : i32
    return %arg0, %c0_i32, %c0_i32_0, %c0_i32_1 : i32, i32, i32, i32
  }
  func.func @transform_1(%arg0: i32) -> (i32, i32) {
    %c0_i32 = arith.constant 0 : i32
    %c0_i32_0 = arith.constant 0 : i32
    %c0_i32_1 = arith.constant 0 : i32
    return %c0_i32, %c0_i32_0 : i32, i32
  }
  func.func @transform_2(%arg0: i32) -> (i32, i32) {
    %c0_i32 = arith.constant 0 : i32
    %c0_i32_0 = arith.constant 0 : i32
    %c0_i32_1 = arith.constant 0 : i32
    return %c0_i32, %c0_i32_0 : i32, i32
  }
  func.func @transform_3(%arg0: i32) -> (i32, i32) {
    %c0_i32 = arith.constant 0 : i32
    %c0_i32_0 = arith.constant 0 : i32
    %c0_i32_1 = arith.constant 0 : i32
    return %c0_i32, %c0_i32_0 : i32, i32
  }
  func.func @transform_4(%arg0: i32) -> (i32, i32) {
    %c0_i32 = arith.constant 0 : i32
    %c0_i32_0 = arith.constant 0 : i32
    %c0_i32_1 = arith.constant 0 : i32
    return %c0_i32, %c0_i32_0 : i32, i32
  }
  func.func @transform_5(%arg0: i32) -> (i32, i32, i32, i32) {
    %c0_i32 = arith.constant 0 : i32
    %c0_i32_0 = arith.constant 0 : i32
    %c0_i32_1 = arith.constant 0 : i32
    %c0_i32_2 = arith.constant 0 : i32
    return %arg0, %c0_i32, %c0_i32_0, %c0_i32_1 : i32, i32, i32, i32
  }
  func.func @transform_6(%arg0: i32) -> (i32, i32, i32, i32) {
    %c0_i32 = arith.constant 0 : i32
    %c0_i32_0 = arith.constant 0 : i32
    %c0_i32_1 = arith.constant 0 : i32
    %c0_i32_2 = arith.constant 0 : i32
    return %arg0, %c0_i32, %c0_i32_0, %c0_i32_1 : i32, i32, i32, i32
  }
}

</mosaic_0001>

<llo_original>
// kernel: tpu_custom_call.1
$region0: #{tpu_custom_call.1}
  #allocation0 [shape = 'u32[]', space=smem, size = 0x4, offset = 0x4, fixed_abs, tag = 'smem constant byte address 0x4 - core index']
  #allocation1 [shape = 'u32[144,128]{1,0:T(1,128)}', space=vmem, size = 0x12000, scoped, tag = 'internal scratch']
  #allocation2 [shape = 'bf16[18,40,3]{2,1,0:T(8,128)(2,1)}', space=vmem, size = 0x2d000, scoped, tag = 'scratch operand']
  #allocation3 [shape = 'bf16[18,40,8]{2,1,0:T(8,128)(2,1)}', space=vmem, size = 0x2d000, scoped, tag = 'scratch operand']
  #allocation4 [shape = 'f32[8,16,8]{2,1,0:T(8,128)}', space=vmem, size = 0x10000, scoped, tag = 'scratch operand']
  %s0 = inlined_call_operand.vmem [shape: bf16[2,16,16,3], index: 0, kind: input, shape index: {}]
  %s1 = inlined_call_operand.vmem [shape: bf16[27,8], index: 1, kind: input, shape index: {}]
  %s2 = inlined_call_operand.vmem [shape: f32[1,8], index: 2, kind: input, shape index: {}]
  %s3 = inlined_call_operand.vmem [shape: bf16[72,8], index: 3, kind: input, shape index: {}]
  %s4 = inlined_call_operand.vmem [shape: f32[1,8], index: 4, kind: input, shape index: {}]
  %s5 = inlined_call_operand.vmem [shape: bf16[2,16,16,8], index: 5, kind: output, shape index: {0}]
  %s6 = inlined_call_operand.hbm [shape: bf16[2,8,8,8], index: 6, kind: output, shape index: {1}]
  %7 = xla_tuple %s5, %s6
  %s8 = sld [smem:[#allocation0]]
  $region61: #{tpu_custom_call.1} parent=0
    _
  %s10 = ssub.s32 1, %s8
  %s11 = scalar_select 0, %s10, %s8
  $region1: #{tpu_custom_call.1} parent=0
    #allocation5 [shape = 'u8[32768]{0}', space=vmem, size = 0x8000, scoped, tag = 'output window, operand 1']
    #allocation6 [shape = 's32[2]{0}', space=sflag, size = 0x8, scoped, tag = 'scoped memory for tpu_custom_call.1']
    %12 = vsyncpa [#allocation6], 0
    %s13 = scalar_lea.sflag [#allocation6], 1
    %14 = vsyncpa %s13, 0
    loop: start=0, step=1, limit=4
    $region2: #{tpu_custom_call.1} parent=1 // loop_pre_header
      _
    $region3: #{tpu_custom_call.1} parent=1 // loop_header
      %s16 = sphi 0, %s20
      %p17 = scmp.ge.s32.totalorder %s16, 4
      %s26 = sphi 0, %s28
      %s29 = sphi 0, %s26
      %s30 = sphi 0, %s29
      %s46 = sphi 0, %s30
      %s50 = sphi 0, %s50
      %s52 = sphi 0, %s50
      %s53 = sphi 0, %s52
      %s67 = sphi 0, %s53
      %s71 = sphi 0, %s71
      %s73 = sphi 0, %s71
      %s74 = sphi 0, %s73
      %s88 = sphi 0, %s74
      %s92 = sphi 0, %s92
      %s94 = sphi 0, %s92
      %s95 = sphi 0, %s94
      %s109 = sphi 0, %s95
      %s113 = sphi 0, %s113
      %s115 = sphi 0, %s113
      %s116 = sphi 0, %s115
      %s130 = sphi 0, %s116
      %s136 = sphi 0, %s138
      %s139 = sphi 0, %s136
      %s140 = sphi 0, %s139
      %s156 = sphi 0, %s140
      %s162 = sphi 0, %s164
      %s165 = sphi 0, %s162
      %s166 = sphi 0, %s165
      %s182 = sphi 0, %s166
    $region4: #{tpu_custom_call.1} parent=1 // loop_header_branch
      %19 = sbr.rel (%p17) target = $region8
    $region5: #{tpu_custom_call.1} parent=1 // loop_body
      %s21 = ssub.s32 %s16, 1
      %s22 = ssub.s32 %s16, 2
      %s23 = sadd.s32 %s16, 1
      %s24 = ssub.s32 %s16, %s23
      %p25 = scmp.eq.s32.totalorder %s24, 0
      %s27 = sadd.s32 %s26, 1
      %s28 = scalar_select %p25, %s26, %s27
      %p31 = pneg %p25
      %p32 = scmp.eq.s32.totalorder %s16, 1
      %p33 = por %p31, %p32
      %p34 = scmp.ne.s32.totalorder %s26, %s29
      %p35 = scmp.eq.s32.totalorder %s16, 0
      %p36 = por %p34, %p35
      %p37 = scmp.ne.s32.totalorder %s26, %s29
      %p38 = scmp.eq.s32.totalorder %s21, 1
      %p39 = por %p37, %p38
      %p40 = scmp.ne.s32.totalorder %s29, %s30
      %p41 = scmp.eq.s32.totalorder %s21, 0
      %p42 = por %p40, %p41
      %p43 = scmp.ne.s32.totalorder %s29, %s30
      %p44 = scmp.eq.s32.totalorder %s22, 1
      %p45 = por %p43, %p44
      %p47 = scmp.ne.s32.totalorder %s30, %s46
      %p48 = scmp.eq.s32.totalorder %s22, 0
      %p49 = por %p47, %p48
      %s51 = sadd.s32 %s50, 1
      %p54 = scmp.eq.s32.totalorder %s16, 1
      %p55 = scmp.ne.s32.totalorder %s50, %s52
      %p56 = scmp.eq.s32.totalorder %s16, 0
      %p57 = por %p55, %p56
      %p58 = scmp.ne.s32.totalorder %s50, %s52
      %p59 = scmp.eq.s32.totalorder %s21, 1
      %p60 = por %p58, %p59
      %p61 = scmp.ne.s32.totalorder %s52, %s53
      %p62 = scmp.eq.s32.totalorder %s21, 0
      %p63 = por %p61, %p62
      %p64 = scmp.ne.s32.totalorder %s52, %s53
      %p65 = scmp.eq.s32.totalorder %s22, 1
      %p66 = por %p64, %p65
      %p68 = scmp.ne.s32.totalorder %s53, %s67
      %p69 = scmp.eq.s32.totalorder %s22, 0
      %p70 = por %p68, %p69
      %s72 = sadd.s32 %s71, 1
      %p75 = scmp.eq.s32.totalorder %s16, 1
      %p76 = scmp.ne.s32.totalorder %s71, %s73
      %p77 = scmp.eq.s32.totalorder %s16, 0
      %p78 = por %p76, %p77
      %p79 = scmp.ne.s32.totalorder %s71, %s73
      %p80 = scmp.eq.s32.totalorder %s21, 1
      %p81 = por %p79, %p80
      %p82 = scmp.ne.s32.totalorder %s73, %s74
      %p83 = scmp.eq.s32.totalorder %s21, 0
      %p84 = por %p82, %p83
      %p85 = scmp.ne.s32.totalorder %s73, %s74
      %p86 = scmp.eq.s32.totalorder %s22, 1
      %p87 = por %p85, %p86
      %p89 = scmp.ne.s32.totalorder %s74, %s88
      %p90 = scmp.eq.s32.totalorder %s22, 0
      %p91 = por %p89, %p90
      %s93 = sadd.s32 %s92, 1
      %p96 = scmp.eq.s32.totalorder %s16, 1
      %p97 = scmp.ne.s32.totalorder %s92, %s94
      %p98 = scmp.eq.s32.totalorder %s16, 0
      %p99 = por %p97, %p98
      %p100 = scmp.ne.s32.totalorder %s92, %s94
      %p101 = scmp.eq.s32.totalorder %s21, 1
      %p102 = por %p100, %p101
      %p103 = scmp.ne.s32.totalorder %s94, %s95
      %p104 = scmp.eq.s32.totalorder %s21, 0
      %p105 = por %p103, %p104
      %p106 = scmp.ne.s32.totalorder %s94, %s95
      %p107 = scmp.eq.s32.totalorder %s22, 1
      %p108 = por %p106, %p107
      %p110 = scmp.ne.s32.totalorder %s95, %s109
      %p111 = scmp.eq.s32.totalorder %s22, 0
      %p112 = por %p110, %p111
      %s114 = sadd.s32 %s113, 1
      %p117 = scmp.eq.s32.totalorder %s16, 1
      %p118 = scmp.ne.s32.totalorder %s113, %s115
      %p119 = scmp.eq.s32.totalorder %s16, 0
      %p120 = por %p118, %p119
      %p121 = scmp.ne.s32.totalorder %s113, %s115
      %p122 = scmp.eq.s32.totalorder %s21, 1
      %p123 = por %p121, %p122
      %p124 = scmp.ne.s32.totalorder %s115, %s116
      %p125 = scmp.eq.s32.totalorder %s21, 0
      %p126 = por %p124, %p125
      %p127 = scmp.ne.s32.totalorder %s115, %s116
      %p128 = scmp.eq.s32.totalorder %s22, 1
      %p129 = por %p127, %p128
      %p131 = scmp.ne.s32.totalorder %s116, %s130
      %p132 = scmp.eq.s32.totalorder %s22, 0
      %p133 = por %p131, %p132
      %s134 = ssub.s32 %s16, %s23
      %p135 = scmp.eq.s32.totalorder %s134, 0
      %s137 = sadd.s32 %s136, 1
      %s138 = scalar_select %p135, %s136, %s137
      %p141 = pneg %p135
      %p142 = scmp.eq.s32.totalorder %s16, 1
      %p143 = por %p141, %p142
      %p144 = scmp.ne.s32.totalorder %s136, %s139
      %p145 = scmp.eq.s32.totalorder %s16, 0
      %p146 = por %p144, %p145
      %p147 = scmp.ne.s32.totalorder %s136, %s139
      %p148 = scmp.eq.s32.totalorder %s21, 1
      %p149 = por %p147, %p148
      %p150 = scmp.ne.s32.totalorder %s139, %s140
      %p151 = scmp.eq.s32.totalorder %s21, 0
      %p152 = por %p150, %p151
      %p153 = scmp.ne.s32.totalorder %s139, %s140
      %p154 = scmp.eq.s32.totalorder %s22, 1
      %p155 = por %p153, %p154
      %p157 = scmp.ne.s32.totalorder %s140, %s156
      %p158 = scmp.eq.s32.totalorder %s22, 0
      %p159 = por %p157, %p158
      %s160 = ssub.s32 %s16, %s23
      %p161 = scmp.eq.s32.totalorder %s160, 0
      %s163 = sadd.s32 %s162, 1
      %s164 = scalar_select %p161, %s162, %s163
      %p167 = pneg %p161
      %p168 = scmp.eq.s32.totalorder %s16, 1
      %p169 = por %p167, %p168
      %p170 = scmp.ne.s32.totalorder %s162, %s165
      %p171 = scmp.eq.s32.totalorder %s16, 0
      %p172 = por %p170, %p171
      %p173 = scmp.ne.s32.totalorder %s162, %s165
      %p174 = scmp.eq.s32.totalorder %s21, 1
      %p175 = por %p173, %p174
      %p176 = scmp.ne.s32.totalorder %s165, %s166
      %p177 = scmp.eq.s32.totalorder %s21, 0
      %p178 = por %p176, %p177
      %p179 = scmp.ne.s32.totalorder %s165, %s166
      %p180 = scmp.eq.s32.totalorder %s22, 1
      %p181 = por %p179, %p180
      %p183 = scmp.ne.s32.totalorder %s166, %s182
      %p184 = scmp.eq.s32.totalorder %s22, 0
      %p185 = por %p183, %p184
      %p186 = scmp.le.s32.totalorder 1, %s16
      %p187 = scmp.lt.s32.totalorder %s16, 3
      %p188 = pnand %p186, %p187
      %p189 = pneg %p188
      // Predicated region
      $region9: #{tpu_custom_call.1} parent=5 // pred_check
        _
      $region10: #{tpu_custom_call.1} parent=5 // pred_check_branch
        %191 = sbr.rel (%p188) target = $region12
      $region11: #{tpu_custom_call.1} parent=5 // pred_region
        %s192 = ssub.s32 %s16, 1
        // Predicated region
        $region13: #{tpu_custom_call.1} parent=11 // pred_check
          %p193 = pneg %p63
        $region14: #{tpu_custom_call.1} parent=11 // pred_check_branch
          %195 = sbr.rel (%p193) target = $region16
        $region15: #{tpu_custom_call.1} parent=11 // pred_region
          _
        $region16: #{tpu_custom_call.1} parent=11 // pred_fallthru
          _
        // Predicated region
        $region17: #{tpu_custom_call.1} parent=11 // pred_check
          %p196 = pneg %p84
        $region18: #{tpu_custom_call.1} parent=11 // pred_check_branch
          %198 = sbr.rel (%p196) target = $region20
        $region19: #{tpu_custom_call.1} parent=11 // pred_region
          _
        $region20: #{tpu_custom_call.1} parent=11 // pred_fallthru
          _
        // Predicated region
        $region21: #{tpu_custom_call.1} parent=11 // pred_check
          %p199 = pneg %p105
        $region22: #{tpu_custom_call.1} parent=11 // pred_check_branch
          %201 = sbr.rel (%p199) target = $region24
        $region23: #{tpu_custom_call.1} parent=11 // pred_region
          _
        $region24: #{tpu_custom_call.1} parent=11 // pred_fallthru
          _
        // Predicated region
        $region25: #{tpu_custom_call.1} parent=11 // pred_check
          %p202 = pneg %p126
        $region26: #{tpu_custom_call.1} parent=11 // pred_check_branch
          %204 = sbr.rel (%p202) target = $region28
        $region27: #{tpu_custom_call.1} parent=11 // pred_region
          _
        $region28: #{tpu_custom_call.1} parent=11 // pred_fallthru
          _
      $region12: #{tpu_custom_call.1} parent=5 // pred_fallthru
        _
      %p205 = scmp.lt.s32.totalorder %s16, 2
      // Predicated region
      $region29: #{tpu_custom_call.1} parent=5 // pred_check
        %p206 = pneg %p205
      $region30: #{tpu_custom_call.1} parent=5 // pred_check_branch
        %208 = sbr.rel (%p206) target = $region32
      $region31: #{tpu_custom_call.1} parent=5 // pred_region
        // Predicated region
        $region33: #{tpu_custom_call.1} parent=31 // pred_check
          %p209 = pneg %p36
        $region34: #{tpu_custom_call.1} parent=31 // pred_check_branch
          %211 = sbr.rel (%p209) target = $region36
        $region35: #{tpu_custom_call.1} parent=31 // pred_region
          %p212 = scmp.lt.s32.totalorder %s16, 1
          %s213 = scalar_select %p212, %s16, 1
          %s214 = smul.addr %s213, 32
          %s215 = smul.addr %s214, 4
          %s216 = scalar_lea.vmem %s0, %s215
        $region36: #{tpu_custom_call.1} parent=31 // pred_fallthru
          _
      $region32: #{tpu_custom_call.1} parent=5 // pred_fallthru
        _
      %p217 = scmp.le.s32.totalorder 1, %s16
      %p218 = scmp.lt.s32.totalorder %s16, 3
      %p219 = pnand %p217, %p218
      %p220 = pneg %p219
      // Predicated region
      $region37: #{tpu_custom_call.1} parent=5 // pred_check
        _
      $region38: #{tpu_custom_call.1} parent=5 // pred_check_branch
        %222 = sbr.rel (%p219) target = $region40
      $region39: #{tpu_custom_call.1} parent=5 // pred_region
        %s223 = ssub.s32 %s16, 1
        %p224 = scmp.lt.s32.totalorder %s21, 1
        %s225 = scalar_select %p224, %s21, 1
        %s226 = smul.addr %s225, 32
        %s227 = smul.addr %s226, 4
        %s228 = scalar_lea.vmem %s0, %s227
        %p229 = pneg %p42
        %p230 = pneg %p39
        %p231 = pneg %p63
        %p232 = pneg %p60
        %p233 = pneg %p84
        %p234 = pneg %p81
        %p235 = pneg %p105
        %p236 = pneg %p102
        %p237 = pneg %p126
        %p238 = pneg %p123
        %p239 = pneg %p152
        %p240 = pneg %p149
        %p241 = scmp.lt.s32.totalorder %s21, 1
        %s242 = scalar_select %p241, %s21, 1
        %s243 = smul.addr %s242, 32
        %s244 = smul.addr %s243, 4
        %s245 = scalar_lea.vmem %s5, %s244
        %p246 = pneg %p178
        %p247 = pneg %p175
        %s248 = sand.u32 %s165, 1
        %s249 = scalar_lea.sflag [#allocation6], %s248
        %s250 = sand.u32 %s165, 1
        %s251 = smul.addr %s250, 32
        %s252 = scalar_lea.vmem [#allocation5], %s251
        %p253 = scmp.lt.s32.totalorder %s21, 1
        %s254 = scalar_select %p253, %s21, 1
        %s255 = smul.addr %s254, 32
        %s256 = smul.addr %s255, 4
        %s257 = scalar_lea.vmem %s0, %s256
        %p258 = scmp.lt.s32.totalorder %s21, 1
        %s259 = scalar_select %p258, %s21, 1
        %s260 = smul.addr %s259, 32
        %s261 = smul.addr %s260, 4
        %s262 = scalar_lea.vmem %s5, %s261
        %vm264 = vcmask 19459
        %265 = vst.msk [vmem:[#allocation2 + $0x4] sm:$0x8] %vm264, 0
        %vm266 = vcmask 19456
        %267 = vst.msk [vmem:[#allocation2 + $0x8] sm:$0xf] %vm266, 0
        %268 = vst.msk [vmem:[#allocation2 + $0xc] sm:$0xf] %vm266, 0
        %vm269 = vcmask 16384
        %270 = vst.msk [vmem:[#allocation2 + $0x10] sm:$0x1] %vm269, 0
        %s271 = scalar_lea.vmem [#allocation2], 340
        %272 = vst.msk [vmem:[%s271 + $0x4] sm:$0x8] %vm264, 0
        %273 = vst.msk [vmem:[%s271 + $0x8] sm:$0xf] %vm266, 0
        %274 = vst.msk [vmem:[%s271 + $0xc] sm:$0xf] %vm266, 0
        %275 = vst.msk [vmem:[%s271 + $0x10] sm:$0x1] %vm269, 0
        %s276 = scalar_lea.vmem [#allocation2], 20
        %277 = vst.msk [vmem:[%s276 + $0x4] sm:$0x8] %vm264, 0
        %278 = vst.msk [vmem:[%s276 + $0x18] sm:$0x8] %vm264, 0
        %279 = vst.msk [vmem:[%s276 + $0x2c] sm:$0x8] %vm264, 0
        %280 = vst.msk [vmem:[%s276 + $0x40] sm:$0x8] %vm264, 0
        %281 = vst.msk [vmem:[%s276 + $0x54] sm:$0x8] %vm264, 0
        %282 = vst.msk [vmem:[%s276 + $0x68] sm:$0x8] %vm264, 0
        %283 = vst.msk [vmem:[%s276 + $0x7c] sm:$0x8] %vm264, 0
        %284 = vst.msk [vmem:[%s276 + $0x90] sm:$0x8] %vm264, 0
        %285 = vst.msk [vmem:[%s276 + $0xa4] sm:$0x8] %vm264, 0
        %286 = vst.msk [vmem:[%s276 + $0xb8] sm:$0x8] %vm264, 0
        %287 = vst.msk [vmem:[%s276 + $0xcc] sm:$0x8] %vm264, 0
        %288 = vst.msk [vmem:[%s276 + $0xe0] sm:$0x8] %vm264, 0
        %289 = vst.msk [vmem:[%s276 + $0xf4] sm:$0x8] %vm264, 0
        %290 = vst.msk [vmem:[%s276 + $0x108] sm:$0x8] %vm264, 0
        %291 = vst.msk [vmem:[%s276 + $0x11c] sm:$0x8] %vm264, 0
        %292 = vst.msk [vmem:[%s276 + $0x130] sm:$0x8] %vm264, 0
        %293 = vst.msk [vmem:[%s276 + $0x10] sm:$0x1] %vm269, 0
        %294 = vst.msk [vmem:[%s276 + $0x24] sm:$0x1] %vm269, 0
        %295 = vst.msk [vmem:[%s276 + $0x38] sm:$0x1] %vm269, 0
        %296 = vst.msk [vmem:[%s276 + $0x4c] sm:$0x1] %vm269, 0
        %297 = vst.msk [vmem:[%s276 + $0x60] sm:$0x1] %vm269, 0
        %298 = vst.msk [vmem:[%s276 + $0x74] sm:$0x1] %vm269, 0
        %299 = vst.msk [vmem:[%s276 + $0x88] sm:$0x1] %vm269, 0
        %300 = vst.msk [vmem:[%s276 + $0x9c] sm:$0x1] %vm269, 0
        %301 = vst.msk [vmem:[%s276 + $0xb0] sm:$0x1] %vm269, 0
        %302 = vst.msk [vmem:[%s276 + $0xc4] sm:$0x1] %vm269, 0
        %303 = vst.msk [vmem:[%s276 + $0xd8] sm:$0x1] %vm269, 0
        %304 = vst.msk [vmem:[%s276 + $0xec] sm:$0x1] %vm269, 0
        %305 = vst.msk [vmem:[%s276 + $0x100] sm:$0x1] %vm269, 0
        %306 = vst.msk [vmem:[%s276 + $0x114] sm:$0x1] %vm269, 0
        %307 = vst.msk [vmem:[%s276 + $0x128] sm:$0x1] %vm269, 0
        %308 = vst.msk [vmem:[%s276 + $0x13c] sm:$0x1] %vm269, 0
        %vm309 = vcmask 60419
        %310 = vst.msk [vmem:[#allocation3 + $0x4] sm:$0x8] %vm309, 0
        %vm311 = vcmask 60416
        %312 = vst.msk [vmem:[#allocation3 + $0x8] sm:$0xf] %vm311, 0
        %313 = vst.msk [vmem:[#allocation3 + $0xc] sm:$0xf] %vm311, 0
        %vm314 = vcmask 57344
        %315 = vst.msk [vmem:[#allocation3 + $0x10] sm:$0x1] %vm314, 0
        %s316 = scalar_lea.vmem [#allocation3], 340
        %317 = vst.msk [vmem:[%s316 + $0x4] sm:$0x8] %vm309, 0
        %318 = vst.msk [vmem:[%s316 + $0x8] sm:$0xf] %vm311, 0
        %319 = vst.msk [vmem:[%s316 + $0xc] sm:$0xf] %vm311, 0
        %320 = vst.msk [vmem:[%s316 + $0x10] sm:$0x1] %vm314, 0
        %s321 = scalar_lea.vmem [#allocation3], 20
        %322 = vst.msk [vmem:[%s321 + $0x4] sm:$0x8] %vm309, 0
        %323 = vst.msk [vmem:[%s321 + $0x18] sm:$0x8] %vm309, 0
        %324 = vst.msk [vmem:[%s321 + $0x2c] sm:$0x8] %vm309, 0
        %325 = vst.msk [vmem:[%s321 + $0x40] sm:$0x8] %vm309, 0
        %326 = vst.msk [vmem:[%s321 + $0x54] sm:$0x8] %vm309, 0
        %327 = vst.msk [vmem:[%s321 + $0x68] sm:$0x8] %vm309, 0
        %328 = vst.msk [vmem:[%s321 + $0x7c] sm:$0x8] %vm309, 0
        %329 = vst.msk [vmem:[%s321 + $0x90] sm:$0x8] %vm309, 0
        %330 = vst.msk [vmem:[%s321 + $0xa4] sm:$0x8] %vm309, 0
        %331 = vst.msk [vmem:[%s321 + $0xb8] sm:$0x8] %vm309, 0
        %332 = vst.msk [vmem:[%s321 + $0xcc] sm:$0x8] %vm309, 0
        %333 = vst.msk [vmem:[%s321 + $0xe0] sm:$0x8] %vm309, 0
        %334 = vst.msk [vmem:[%s321 + $0xf4] sm:$0x8] %vm309, 0
        %335 = vst.msk [vmem:[%s321 + $0x108] sm:$0x8] %vm309, 0
        %336 = vst.msk [vmem:[%s321 + $0x11c] sm:$0x8] %vm309, 0
        %337 = vst.msk [vmem:[%s321 + $0x130] sm:$0x8] %vm309, 0
        %338 = vst.msk [vmem:[%s321 + $0x10] sm:$0x1] %vm314, 0
        %339 = vst.msk [vmem:[%s321 + $0x24] sm:$0x1] %vm314, 0
        %340 = vst.msk [vmem:[%s321 + $0x38] sm:$0x1] %vm314, 0
        %341 = vst.msk [vmem:[%s321 + $0x4c] sm:$0x1] %vm314, 0
        %342 = vst.msk [vmem:[%s321 + $0x60] sm:$0x1] %vm314, 0
        %343 = vst.msk [vmem:[%s321 + $0x74] sm:$0x1] %vm314, 0
        %344 = vst.msk [vmem:[%s321 + $0x88] sm:$0x1] %vm314, 0
        %345 = vst.msk [vmem:[%s321 + $0x9c] sm:$0x1] %vm314, 0
        %346 = vst.msk [vmem:[%s321 + $0xb0] sm:$0x1] %vm314, 0
        %347 = vst.msk [vmem:[%s321 + $0xc4] sm:$0x1] %vm314, 0
        %348 = vst.msk [vmem:[%s321 + $0xd8] sm:$0x1] %vm314, 0
        %349 = vst.msk [vmem:[%s321 + $0xec] sm:$0x1] %vm314, 0
        %350 = vst.msk [vmem:[%s321 + $0x100] sm:$0x1] %vm314, 0
        %351 = vst.msk [vmem:[%s321 + $0x114] sm:$0x1] %vm314, 0
        %352 = vst.msk [vmem:[%s321 + $0x128] sm:$0x1] %vm314, 0
        %353 = vst.msk [vmem:[%s321 + $0x13c] sm:$0x1] %vm314, 0
        %v354 = vld [vmem:[%s257] sm:$0xf]
        %v355 = vld [vmem:[%s257 + $0x4] sm:$0xf]
        %v356 = vld [vmem:[%s257 + $0x8] sm:$0xf]
        %v357 = vld [vmem:[%s257 + $0xc] sm:$0xf]
        %v358 = vld [vmem:[%s257 + $0x10] sm:$0xf]
        %v359 = vld [vmem:[%s257 + $0x14] sm:$0xf]
        %v360 = vld [vmem:[%s257 + $0x18] sm:$0xf]
        %v361 = vld [vmem:[%s257 + $0x1c] sm:$0xf]
        %v362 = vld [vmem:[%s257 + $0x20] sm:$0xf]
        %v363 = vld [vmem:[%s257 + $0x24] sm:$0xf]
        %v364 = vld [vmem:[%s257 + $0x28] sm:$0xf]
        %v365 = vld [vmem:[%s257 + $0x2c] sm:$0xf]
        %v366 = vld [vmem:[%s257 + $0x30] sm:$0xf]
        %v367 = vld [vmem:[%s257 + $0x34] sm:$0xf]
        %v368 = vld [vmem:[%s257 + $0x38] sm:$0xf]
        %v369 = vld [vmem:[%s257 + $0x3c] sm:$0xf]
        %v370 = vld [vmem:[%s257 + $0x40] sm:$0xf]
        %v371 = vld [vmem:[%s257 + $0x44] sm:$0xf]
        %v372 = vld [vmem:[%s257 + $0x48] sm:$0xf]
        %v373 = vld [vmem:[%s257 + $0x4c] sm:$0xf]
        %v374 = vld [vmem:[%s257 + $0x50] sm:$0xf]
        %v375 = vld [vmem:[%s257 + $0x54] sm:$0xf]
        %v376 = vld [vmem:[%s257 + $0x58] sm:$0xf]
        %v377 = vld [vmem:[%s257 + $0x5c] sm:$0xf]
        %v378 = vld [vmem:[%s257 + $0x60] sm:$0xf]
        %v379 = vld [vmem:[%s257 + $0x64] sm:$0xf]
        %v380 = vld [vmem:[%s257 + $0x68] sm:$0xf]
        %v381 = vld [vmem:[%s257 + $0x6c] sm:$0xf]
        %v382 = vld [vmem:[%s257 + $0x70] sm:$0xf]
        %v383 = vld [vmem:[%s257 + $0x74] sm:$0xf]
        %v384 = vld [vmem:[%s257 + $0x78] sm:$0xf]
        %v385 = vld [vmem:[%s257 + $0x7c] sm:$0xf]
        %386 = vst.msk [vmem:[%s276 + $0x8] sm:$0xf] %vm266, %v354
        %387 = vst.msk [vmem:[%s276 + $0xc] sm:$0xf] %vm266, %v355
        %388 = vst.msk [vmem:[%s276 + $0x1c] sm:$0xf] %vm266, %v356
        %389 = vst.msk [vmem:[%s276 + $0x20] sm:$0xf] %vm266, %v357
        %390 = vst.msk [vmem:[%s276 + $0x30] sm:$0xf] %vm266, %v358
        %391 = vst.msk [vmem:[%s276 + $0x34] sm:$0xf] %vm266, %v359
        %392 = vst.msk [vmem:[%s276 + $0x44] sm:$0xf] %vm266, %v360
        %393 = vst.msk [vmem:[%s276 + $0x48] sm:$0xf] %vm266, %v361
        %394 = vst.msk [vmem:[%s276 + $0x58] sm:$0xf] %vm266, %v362
        %395 = vst.msk [vmem:[%s276 + $0x5c] sm:$0xf] %vm266, %v363
        %396 = vst.msk [vmem:[%s276 + $0x6c] sm:$0xf] %vm266, %v364
        %397 = vst.msk [vmem:[%s276 + $0x70] sm:$0xf] %vm266, %v365
        %398 = vst.msk [vmem:[%s276 + $0x80] sm:$0xf] %vm266, %v366
        %399 = vst.msk [vmem:[%s276 + $0x84] sm:$0xf] %vm266, %v367
        %400 = vst.msk [vmem:[%s276 + $0x94] sm:$0xf] %vm266, %v368
        %401 = vst.msk [vmem:[%s276 + $0x98] sm:$0xf] %vm266, %v369
        %402 = vst.msk [vmem:[%s276 + $0xa8] sm:$0xf] %vm266, %v370
        %403 = vst.msk [vmem:[%s276 + $0xac] sm:$0xf] %vm266, %v371
        %404 = vst.msk [vmem:[%s276 + $0xbc] sm:$0xf] %vm266, %v372
        %405 = vst.msk [vmem:[%s276 + $0xc0] sm:$0xf] %vm266, %v373
        %406 = vst.msk [vmem:[%s276 + $0xd0] sm:$0xf] %vm266, %v374
        %407 = vst.msk [vmem:[%s276 + $0xd4] sm:$0xf] %vm266, %v375
        %408 = vst.msk [vmem:[%s276 + $0xe4] sm:$0xf] %vm266, %v376
        %409 = vst.msk [vmem:[%s276 + $0xe8] sm:$0xf] %vm266, %v377
        %410 = vst.msk [vmem:[%s276 + $0xf8] sm:$0xf] %vm266, %v378
        %411 = vst.msk [vmem:[%s276 + $0xfc] sm:$0xf] %vm266, %v379
        %412 = vst.msk [vmem:[%s276 + $0x10c] sm:$0xf] %vm266, %v380
        %413 = vst.msk [vmem:[%s276 + $0x110] sm:$0xf] %vm266, %v381
        %414 = vst.msk [vmem:[%s276 + $0x120] sm:$0xf] %vm266, %v382
        %415 = vst.msk [vmem:[%s276 + $0x124] sm:$0xf] %vm266, %v383
        %416 = vst.msk [vmem:[%s276 + $0x134] sm:$0xf] %vm266, %v384
        %417 = vst.msk [vmem:[%s276 + $0x138] sm:$0xf] %vm266, %v385
        %v418 = vld [vmem:[#allocation2 + $0x4] sm:$0xf]
        %v419 = vld [vmem:[#allocation2 + $0x8] sm:$0xf]
        %v420 = vld [vmem:[#allocation2 + $0xc] sm:$0xf]
        %v421 = vld [vmem:[#allocation2 + $0x10] sm:$0xf]
        %v422 = vld [vmem:[#allocation2 + $0x18] sm:$0xf]
        %v423 = vld [vmem:[#allocation2 + $0x1c] sm:$0xf]
        %v424 = vld [vmem:[#allocation2 + $0x20] sm:$0xf]
        %v425 = vld [vmem:[#allocation2 + $0x24] sm:$0xf]
        %v426 = vld [vmem:[#allocation2 + $0x2c] sm:$0xf]
        %v427 = vld [vmem:[#allocation2 + $0x30] sm:$0xf]
        %v428 = vld [vmem:[#allocation2 + $0x34] sm:$0xf]
        %v429 = vld [vmem:[#allocation2 + $0x38] sm:$0xf]
        %v430 = vld [vmem:[#allocation2 + $0x40] sm:$0xf]
        %v431 = vld [vmem:[#allocation2 + $0x44] sm:$0xf]
        %v432 = vld [vmem:[#allocation2 + $0x48] sm:$0xf]
        %v433 = vld [vmem:[#allocation2 + $0x4c] sm:$0xf]
        %v434 = vld [vmem:[#allocation2 + $0x54] sm:$0xf]
        %v435 = vld [vmem:[#allocation2 + $0x58] sm:$0xf]
        %v436 = vld [vmem:[#allocation2 + $0x5c] sm:$0xf]
        %v437 = vld [vmem:[#allocation2 + $0x60] sm:$0xf]
        %v438 = vld [vmem:[#allocation2 + $0x68] sm:$0xf]
        %v439 = vld [vmem:[#allocation2 + $0x6c] sm:$0xf]
        %v440 = vld [vmem:[#allocation2 + $0x70] sm:$0xf]
        %v441 = vld [vmem:[#allocation2 + $0x74] sm:$0xf]
        %v442 = vld [vmem:[#allocation2 + $0x7c] sm:$0xf]
        %v443 = vld [vmem:[#allocation2 + $0x80] sm:$0xf]
        %v444 = vld [vmem:[#allocation2 + $0x84] sm:$0xf]
        %v445 = vld [vmem:[#allocation2 + $0x88] sm:$0xf]
        %v446 = vld [vmem:[#allocation2 + $0x90] sm:$0xf]
        %v447 = vld [vmem:[#allocation2 + $0x94] sm:$0xf]
        %v448 = vld [vmem:[#allocation2 + $0x98] sm:$0xf]
        %v449 = vld [vmem:[#allocation2 + $0x9c] sm:$0xf]
        %v450 = vld [vmem:[#allocation2 + $0xa4] sm:$0xf]
        %v451 = vld [vmem:[#allocation2 + $0xa8] sm:$0xf]
        %v452 = vld [vmem:[#allocation2 + $0xac] sm:$0xf]
        %v453 = vld [vmem:[#allocation2 + $0xb0] sm:$0xf]
        %v454 = vld [vmem:[#allocation2 + $0xb8] sm:$0xf]
        %v455 = vld [vmem:[#allocation2 + $0xbc] sm:$0xf]
        %v456 = vld [vmem:[#allocation2 + $0xc0] sm:$0xf]
        %v457 = vld [vmem:[#allocation2 + $0xc4] sm:$0xf]
        %v458 = vld [vmem:[#allocation2 + $0xcc] sm:$0xf]
        %v459 = vld [vmem:[#allocation2 + $0xd0] sm:$0xf]
        %v460 = vld [vmem:[#allocation2 + $0xd4] sm:$0xf]
        %v461 = vld [vmem:[#allocation2 + $0xd8] sm:$0xf]
        %v462 = vld [vmem:[#allocation2 + $0xe0] sm:$0xf]
        %v463 = vld [vmem:[#allocation2 + $0xe4] sm:$0xf]
        %v464 = vld [vmem:[#allocation2 + $0xe8] sm:$0xf]
        %v465 = vld [vmem:[#allocation2 + $0xec] sm:$0xf]
        %v466 = vld [vmem:[#allocation2 + $0xf4] sm:$0xf]
        %v467 = vld [vmem:[#allocation2 + $0xf8] sm:$0xf]
        %v468 = vld [vmem:[#allocation2 + $0xfc] sm:$0xf]
        %v469 = vld [vmem:[#allocation2 + $0x100] sm:$0xf]
        %v470 = vld [vmem:[#allocation2 + $0x108] sm:$0xf]
        %v471 = vld [vmem:[#allocation2 + $0x10c] sm:$0xf]
        %v472 = vld [vmem:[#allocation2 + $0x110] sm:$0xf]
        %v473 = vld [vmem:[#allocation2 + $0x114] sm:$0xf]
        %v474 = vld [vmem:[#allocation2 + $0x11c] sm:$0xf]
        %v475 = vld [vmem:[#allocation2 + $0x120] sm:$0xf]
        %v476 = vld [vmem:[#allocation2 + $0x124] sm:$0xf]
        %v477 = vld [vmem:[#allocation2 + $0x128] sm:$0xf]
        %v478 = vld [vmem:[#allocation2 + $0x130] sm:$0xf]
        %v479 = vld [vmem:[#allocation2 + $0x134] sm:$0xf]
        %v480 = vld [vmem:[#allocation2 + $0x138] sm:$0xf]
        %v481 = vld [vmem:[#allocation2 + $0x13c] sm:$0xf]
        %v482 = vunpack.c.l.bf16 %v418
        %v483 = vunpack.c.l.bf16 %v419
        %v484 = vunpack.c.l.bf16 %v420
        %v485 = vunpack.c.l.bf16 %v421
        %v486 = vunpack.c.l.bf16 %v422
        %v487 = vunpack.c.l.bf16 %v423
        %v488 = vunpack.c.l.bf16 %v424
        %v489 = vunpack.c.l.bf16 %v425
        %v490 = vunpack.c.l.bf16 %v426
        %v491 = vunpack.c.l.bf16 %v427
        %v492 = vunpack.c.l.bf16 %v428
        %v493 = vunpack.c.l.bf16 %v429
        %v494 = vunpack.c.l.bf16 %v430
        %v495 = vunpack.c.l.bf16 %v431
        %v496 = vunpack.c.l.bf16 %v432
        %v497 = vunpack.c.l.bf16 %v433
        %v498 = vunpack.c.l.bf16 %v434
        %v499 = vunpack.c.l.bf16 %v435
        %v500 = vunpack.c.l.bf16 %v436
        %v501 = vunpack.c.l.bf16 %v437
        %v502 = vunpack.c.l.bf16 %v438
        %v503 = vunpack.c.l.bf16 %v439
        %v504 = vunpack.c.l.bf16 %v440
        %v505 = vunpack.c.l.bf16 %v441
        %v506 = vunpack.c.l.bf16 %v442
        %v507 = vunpack.c.l.bf16 %v443
        %v508 = vunpack.c.l.bf16 %v444
        %v509 = vunpack.c.l.bf16 %v445
        %v510 = vunpack.c.l.bf16 %v446
        %v511 = vunpack.c.l.bf16 %v447
        %v512 = vunpack.c.l.bf16 %v448
        %v513 = vunpack.c.l.bf16 %v449
        %v514 = vunpack.c.l.bf16 %v450
        %v515 = vunpack.c.l.bf16 %v451
        %v516 = vunpack.c.l.bf16 %v452
        %v517 = vunpack.c.l.bf16 %v453
        %v518 = vunpack.c.l.bf16 %v454
        %v519 = vunpack.c.l.bf16 %v455
        %v520 = vunpack.c.l.bf16 %v456
        %v521 = vunpack.c.l.bf16 %v457
        %v522 = vunpack.c.l.bf16 %v458
        %v523 = vunpack.c.l.bf16 %v459
        %v524 = vunpack.c.l.bf16 %v460
        %v525 = vunpack.c.l.bf16 %v461
        %v526 = vunpack.c.l.bf16 %v462
        %v527 = vunpack.c.l.bf16 %v463
        %v528 = vunpack.c.l.bf16 %v464
        %v529 = vunpack.c.l.bf16 %v465
        %v530 = vunpack.c.l.bf16 %v466
        %v531 = vunpack.c.l.bf16 %v467
        %v532 = vunpack.c.l.bf16 %v468
        %v533 = vunpack.c.l.bf16 %v469
        %v534 = vunpack.c.l.bf16 %v470
        %v535 = vunpack.c.l.bf16 %v471
        %v536 = vunpack.c.l.bf16 %v472
        %v537 = vunpack.c.l.bf16 %v473
        %v538 = vunpack.c.l.bf16 %v474
        %v539 = vunpack.c.l.bf16 %v475
        %v540 = vunpack.c.l.bf16 %v476
        %v541 = vunpack.c.l.bf16 %v477
        %v542 = vunpack.c.l.bf16 %v478
        %v543 = vunpack.c.l.bf16 %v479
        %v544 = vunpack.c.l.bf16 %v480
        %v545 = vunpack.c.l.bf16 %v481
        %v546 = vld [vmem:[%s276 + $0x4] sm:$0xf]
        %v547 = vld [vmem:[%s276 + $0x8] sm:$0xf]
        %v548 = vld [vmem:[%s276 + $0xc] sm:$0xf]
        %v549 = vld [vmem:[%s276 + $0x10] sm:$0xf]
        %v550 = vld [vmem:[%s276 + $0x18] sm:$0xf]
        %v551 = vld [vmem:[%s276 + $0x1c] sm:$0xf]
        %v552 = vld [vmem:[%s276 + $0x20] sm:$0xf]
        %v553 = vld [vmem:[%s276 + $0x24] sm:$0xf]
        %v554 = vld [vmem:[%s276 + $0x2c] sm:$0xf]
        %v555 = vld [vmem:[%s276 + $0x30] sm:$0xf]
        %v556 = vld [vmem:[%s276 + $0x34] sm:$0xf]
        %v557 = vld [vmem:[%s276 + $0x38] sm:$0xf]
        %v558 = vld [vmem:[%s276 + $0x40] sm:$0xf]
        %v559 = vld [vmem:[%s276 + $0x44] sm:$0xf]
        %v560 = vld [vmem:[%s276 + $0x48] sm:$0xf]
        %v561 = vld [vmem:[%s276 + $0x4c] sm:$0xf]
        %v562 = vld [vmem:[%s276 + $0x54] sm:$0xf]
        %v563 = vld [vmem:[%s276 + $0x58] sm:$0xf]
        %v564 = vld [vmem:[%s276 + $0x5c] sm:$0xf]
        %v565 = vld [vmem:[%s276 + $0x60] sm:$0xf]
        %v566 = vld [vmem:[%s276 + $0x68] sm:$0xf]
        %v567 = vld [vmem:[%s276 + $0x6c] sm:$0xf]
        %v568 = vld [vmem:[%s276 + $0x70] sm:$0xf]
        %v569 = vld [vmem:[%s276 + $0x74] sm:$0xf]
        %v570 = vld [vmem:[%s276 + $0x7c] sm:$0xf]
        %v571 = vld [vmem:[%s276 + $0x80] sm:$0xf]
        %v572 = vld [vmem:[%s276 + $0x84] sm:$0xf]
        %v573 = vld [vmem:[%s276 + $0x88] sm:$0xf]
        %v574 = vld [vmem:[%s276 + $0x90] sm:$0xf]
        %v575 = vld [vmem:[%s276 + $0x94] sm:$0xf]
        %v576 = vld [vmem:[%s276 + $0x98] sm:$0xf]
        %v577 = vld [vmem:[%s276 + $0x9c] sm:$0xf]
        %v578 = vld [vmem:[%s276 + $0xa4] sm:$0xf]
        %v579 = vld [vmem:[%s276 + $0xa8] sm:$0xf]
        %v580 = vld [vmem:[%s276 + $0xac] sm:$0xf]
        %v581 = vld [vmem:[%s276 + $0xb0] sm:$0xf]
        %v582 = vld [vmem:[%s276 + $0xb8] sm:$0xf]
        %v583 = vld [vmem:[%s276 + $0xbc] sm:$0xf]
        %v584 = vld [vmem:[%s276 + $0xc0] sm:$0xf]
        %v585 = vld [vmem:[%s276 + $0xc4] sm:$0xf]
        %v586 = vld [vmem:[%s276 + $0xcc] sm:$0xf]
        %v587 = vld [vmem:[%s276 + $0xd0] sm:$0xf]
        %v588 = vld [vmem:[%s276 + $0xd4] sm:$0xf]
        %v589 = vld [vmem:[%s276 + $0xd8] sm:$0xf]
        %v590 = vld [vmem:[%s276 + $0xe0] sm:$0xf]
        %v591 = vld [vmem:[%s276 + $0xe4] sm:$0xf]
        %v592 = vld [vmem:[%s276 + $0xe8] sm:$0xf]
        %v593 = vld [vmem:[%s276 + $0xec] sm:$0xf]
        %v594 = vld [vmem:[%s276 + $0xf4] sm:$0xf]
        %v595 = vld [vmem:[%s276 + $0xf8] sm:$0xf]
        %v596 = vld [vmem:[%s276 + $0xfc] sm:$0xf]
        %v597 = vld [vmem:[%s276 + $0x100] sm:$0xf]
        %v598 = vld [vmem:[%s276 + $0x108] sm:$0xf]
        %v599 = vld [vmem:[%s276 + $0x10c] sm:$0xf]
        %v600 = vld [vmem:[%s276 + $0x110] sm:$0xf]
        %v601 = vld [vmem:[%s276 + $0x114] sm:$0xf]
        %v602 = vld [vmem:[%s276 + $0x11c] sm:$0xf]
        %v603 = vld [vmem:[%s276 + $0x120] sm:$0xf]
        %v604 = vld [vmem:[%s276 + $0x124] sm:$0xf]
        %v605 = vld [vmem:[%s276 + $0x128] sm:$0xf]
        %v606 = vld [vmem:[%s276 + $0x130] sm:$0xf]
        %v607 = vld [vmem:[%s276 + $0x134] sm:$0xf]
        %v608 = vld [vmem:[%s276 + $0x138] sm:$0xf]
        %v609 = vld [vmem:[%s276 + $0x13c] sm:$0xf]
        %v610 = vunpack.c.l.bf16 %v546
        %v611 = vunpack.c.l.bf16 %v547
        %v612 = vunpack.c.l.bf16 %v548
        %v613 = vunpack.c.l.bf16 %v549
        %v614 = vunpack.c.l.bf16 %v550
        %v615 = vunpack.c.l.bf16 %v551
        %v616 = vunpack.c.l.bf16 %v552
        %v617 = vunpack.c.l.bf16 %v553
        %v618 = vunpack.c.l.bf16 %v554
        %v619 = vunpack.c.l.bf16 %v555
        %v620 = vunpack.c.l.bf16 %v556
        %v621 = vunpack.c.l.bf16 %v557
        %v622 = vunpack.c.l.bf16 %v558
        %v623 = vunpack.c.l.bf16 %v559
        %v624 = vunpack.c.l.bf16 %v560
        %v625 = vunpack.c.l.bf16 %v561
        %v626 = vunpack.c.l.bf16 %v562
        %v627 = vunpack.c.l.bf16 %v563
        %v628 = vunpack.c.l.bf16 %v564
        %v629 = vunpack.c.l.bf16 %v565
        %v630 = vunpack.c.l.bf16 %v566
        %v631 = vunpack.c.l.bf16 %v567
        %v632 = vunpack.c.l.bf16 %v568
        %v633 = vunpack.c.l.bf16 %v569
        %v634 = vunpack.c.l.bf16 %v570
        %v635 = vunpack.c.l.bf16 %v571
        %v636 = vunpack.c.l.bf16 %v572
        %v637 = vunpack.c.l.bf16 %v573
        %v638 = vunpack.c.l.bf16 %v574
        %v639 = vunpack.c.l.bf16 %v575
        %v640 = vunpack.c.l.bf16 %v576
        %v641 = vunpack.c.l.bf16 %v577
        %v642 = vunpack.c.l.bf16 %v578
        %v643 = vunpack.c.l.bf16 %v579
        %v644 = vunpack.c.l.bf16 %v580
        %v645 = vunpack.c.l.bf16 %v581
        %v646 = vunpack.c.l.bf16 %v582
        %v647 = vunpack.c.l.bf16 %v583
        %v648 = vunpack.c.l.bf16 %v584
        %v649 = vunpack.c.l.bf16 %v585
        %v650 = vunpack.c.l.bf16 %v586
        %v651 = vunpack.c.l.bf16 %v587
        %v652 = vunpack.c.l.bf16 %v588
        %v653 = vunpack.c.l.bf16 %v589
        %v654 = vunpack.c.l.bf16 %v590
        %v655 = vunpack.c.l.bf16 %v591
        %v656 = vunpack.c.l.bf16 %v592
        %v657 = vunpack.c.l.bf16 %v593
        %v658 = vunpack.c.l.bf16 %v594
        %v659 = vunpack.c.l.bf16 %v595
        %v660 = vunpack.c.l.bf16 %v596
        %v661 = vunpack.c.l.bf16 %v597
        %v662 = vunpack.c.l.bf16 %v598
        %v663 = vunpack.c.l.bf16 %v599
        %v664 = vunpack.c.l.bf16 %v600
        %v665 = vunpack.c.l.bf16 %v601
        %v666 = vunpack.c.l.bf16 %v602
        %v667 = vunpack.c.l.bf16 %v603
        %v668 = vunpack.c.l.bf16 %v604
        %v669 = vunpack.c.l.bf16 %v605
        %v670 = vunpack.c.l.bf16 %v606
        %v671 = vunpack.c.l.bf16 %v607
        %v672 = vunpack.c.l.bf16 %v608
        %v673 = vunpack.c.l.bf16 %v609
        %s674 = scalar_lea.vmem [#allocation2], 40
        %v675 = vld [vmem:[%s674 + $0x4] sm:$0xf]
        %v676 = vld [vmem:[%s674 + $0x8] sm:$0xf]
        %v677 = vld [vmem:[%s674 + $0xc] sm:$0xf]
        %v678 = vld [vmem:[%s674 + $0x10] sm:$0xf]
        %v679 = vld [vmem:[%s674 + $0x18] sm:$0xf]
        %v680 = vld [vmem:[%s674 + $0x1c] sm:$0xf]
        %v681 = vld [vmem:[%s674 + $0x20] sm:$0xf]
        %v682 = vld [vmem:[%s674 + $0x24] sm:$0xf]
        %v683 = vld [vmem:[%s674 + $0x2c] sm:$0xf]
        %v684 = vld [vmem:[%s674 + $0x30] sm:$0xf]
        %v685 = vld [vmem:[%s674 + $0x34] sm:$0xf]
        %v686 = vld [vmem:[%s674 + $0x38] sm:$0xf]
        %v687 = vld [vmem:[%s674 + $0x40] sm:$0xf]
        %v688 = vld [vmem:[%s674 + $0x44] sm:$0xf]
        %v689 = vld [vmem:[%s674 + $0x48] sm:$0xf]
        %v690 = vld [vmem:[%s674 + $0x4c] sm:$0xf]
        %v691 = vld [vmem:[%s674 + $0x54] sm:$0xf]
        %v692 = vld [vmem:[%s674 + $0x58] sm:$0xf]
        %v693 = vld [vmem:[%s674 + $0x5c] sm:$0xf]
        %v694 = vld [vmem:[%s674 + $0x60] sm:$0xf]
        %v695 = vld [vmem:[%s674 + $0x68] sm:$0xf]
        %v696 = vld [vmem:[%s674 + $0x6c] sm:$0xf]
        %v697 = vld [vmem:[%s674 + $0x70] sm:$0xf]
        %v698 = vld [vmem:[%s674 + $0x74] sm:$0xf]
        %v699 = vld [vmem:[%s674 + $0x7c] sm:$0xf]
        %v700 = vld [vmem:[%s674 + $0x80] sm:$0xf]
        %v701 = vld [vmem:[%s674 + $0x84] sm:$0xf]
        %v702 = vld [vmem:[%s674 + $0x88] sm:$0xf]
        %v703 = vld [vmem:[%s674 + $0x90] sm:$0xf]
        %v704 = vld [vmem:[%s674 + $0x94] sm:$0xf]
        %v705 = vld [vmem:[%s674 + $0x98] sm:$0xf]
        %v706 = vld [vmem:[%s674 + $0x9c] sm:$0xf]
        %v707 = vld [vmem:[%s674 + $0xa4] sm:$0xf]
        %v708 = vld [vmem:[%s674 + $0xa8] sm:$0xf]
        %v709 = vld [vmem:[%s674 + $0xac] sm:$0xf]
        %v710 = vld [vmem:[%s674 + $0xb0] sm:$0xf]
        %v711 = vld [vmem:[%s674 + $0xb8] sm:$0xf]
        %v712 = vld [vmem:[%s674 + $0xbc] sm:$0xf]
        %v713 = vld [vmem:[%s674 + $0xc0] sm:$0xf]
        %v714 = vld [vmem:[%s674 + $0xc4] sm:$0xf]
        %v715 = vld [vmem:[%s674 + $0xcc] sm:$0xf]
        %v716 = vld [vmem:[%s674 + $0xd0] sm:$0xf]
        %v717 = vld [vmem:[%s674 + $0xd4] sm:$0xf]
        %v718 = vld [vmem:[%s674 + $0xd8] sm:$0xf]
        %v719 = vld [vmem:[%s674 + $0xe0] sm:$0xf]
        %v720 = vld [vmem:[%s674 + $0xe4] sm:$0xf]
        %v721 = vld [vmem:[%s674 + $0xe8] sm:$0xf]
        %v722 = vld [vmem:[%s674 + $0xec] sm:$0xf]
        %v723 = vld [vmem:[%s674 + $0xf4] sm:$0xf]
        %v724 = vld [vmem:[%s674 + $0xf8] sm:$0xf]
        %v725 = vld [vmem:[%s674 + $0xfc] sm:$0xf]
        %v726 = vld [vmem:[%s674 + $0x100] sm:$0xf]
        %v727 = vld [vmem:[%s674 + $0x108] sm:$0xf]
        %v728 = vld [vmem:[%s674 + $0x10c] sm:$0xf]
        %v729 = vld [vmem:[%s674 + $0x110] sm:$0xf]
        %v730 = vld [vmem:[%s674 + $0x114] sm:$0xf]
        %v731 = vld [vmem:[%s674 + $0x11c] sm:$0xf]
        %v732 = vld [vmem:[%s674 + $0x120] sm:$0xf]
        %v733 = vld [vmem:[%s674 + $0x124] sm:$0xf]
        %v734 = vld [vmem:[%s674 + $0x128] sm:$0xf]
        %v735 = vld [vmem:[%s674 + $0x130] sm:$0xf]
        %v736 = vld [vmem:[%s674 + $0x134] sm:$0xf]
        %v737 = vld [vmem:[%s674 + $0x138] sm:$0xf]
        %v738 = vld [vmem:[%s674 + $0x13c] sm:$0xf]
        %v739 = vunpack.c.l.bf16 %v675
        %v740 = vunpack.c.l.bf16 %v676
        %v741 = vunpack.c.l.bf16 %v677
        %v742 = vunpack.c.l.bf16 %v678
        %v743 = vunpack.c.l.bf16 %v679
        %v744 = vunpack.c.l.bf16 %v680
        %v745 = vunpack.c.l.bf16 %v681
        %v746 = vunpack.c.l.bf16 %v682
        %v747 = vunpack.c.l.bf16 %v683
        %v748 = vunpack.c.l.bf16 %v684
        %v749 = vunpack.c.l.bf16 %v685
        %v750 = vunpack.c.l.bf16 %v686
        %v751 = vunpack.c.l.bf16 %v687
        %v752 = vunpack.c.l.bf16 %v688
        %v753 = vunpack.c.l.bf16 %v689
        %v754 = vunpack.c.l.bf16 %v690
        %v755 = vunpack.c.l.bf16 %v691
        %v756 = vunpack.c.l.bf16 %v692
        %v757 = vunpack.c.l.bf16 %v693
        %v758 = vunpack.c.l.bf16 %v694
        %v759 = vunpack.c.l.bf16 %v695
        %v760 = vunpack.c.l.bf16 %v696
        %v761 = vunpack.c.l.bf16 %v697
        %v762 = vunpack.c.l.bf16 %v698
        %v763 = vunpack.c.l.bf16 %v699
        %v764 = vunpack.c.l.bf16 %v700
        %v765 = vunpack.c.l.bf16 %v701
        %v766 = vunpack.c.l.bf16 %v702
        %v767 = vunpack.c.l.bf16 %v703
        %v768 = vunpack.c.l.bf16 %v704
        %v769 = vunpack.c.l.bf16 %v705
        %v770 = vunpack.c.l.bf16 %v706
        %v771 = vunpack.c.l.bf16 %v707
        %v772 = vunpack.c.l.bf16 %v708
        %v773 = vunpack.c.l.bf16 %v709
        %v774 = vunpack.c.l.bf16 %v710
        %v775 = vunpack.c.l.bf16 %v711
        %v776 = vunpack.c.l.bf16 %v712
        %v777 = vunpack.c.l.bf16 %v713
        %v778 = vunpack.c.l.bf16 %v714
        %v779 = vunpack.c.l.bf16 %v715
        %v780 = vunpack.c.l.bf16 %v716
        %v781 = vunpack.c.l.bf16 %v717
        %v782 = vunpack.c.l.bf16 %v718
        %v783 = vunpack.c.l.bf16 %v719
        %v784 = vunpack.c.l.bf16 %v720
        %v785 = vunpack.c.l.bf16 %v721
        %v786 = vunpack.c.l.bf16 %v722
        %v787 = vunpack.c.l.bf16 %v723
        %v788 = vunpack.c.l.bf16 %v724
        %v789 = vunpack.c.l.bf16 %v725
        %v790 = vunpack.c.l.bf16 %v726
        %v791 = vunpack.c.l.bf16 %v727
        %v792 = vunpack.c.l.bf16 %v728
        %v793 = vunpack.c.l.bf16 %v729
        %v794 = vunpack.c.l.bf16 %v730
        %v795 = vunpack.c.l.bf16 %v731
        %v796 = vunpack.c.l.bf16 %v732
        %v797 = vunpack.c.l.bf16 %v733
        %v798 = vunpack.c.l.bf16 %v734
        %v799 = vunpack.c.l.bf16 %v735
        %v800 = vunpack.c.l.bf16 %v736
        %v801 = vunpack.c.l.bf16 %v737
        %v802 = vunpack.c.l.bf16 %v738
        %vm835 = vcmask 1046528
        %v836 = vrot.slane %v483, 1
        %v837 = vrot.slane %v484, 1
        %v838 = vsel %vm835, %v836, %v837
        %v839 = vrot.slane %v487, 1
        %v840 = vrot.slane %v488, 1
        %v841 = vsel %vm835, %v839, %v840
        %v842 = vrot.slane %v491, 1
        %v843 = vrot.slane %v492, 1
        %v844 = vsel %vm835, %v842, %v843
        %v845 = vrot.slane %v495, 1
        %v846 = vrot.slane %v496, 1
        %v847 = vsel %vm835, %v845, %v846
        %v848 = vrot.slane %v499, 1
        %v849 = vrot.slane %v500, 1
        %v850 = vsel %vm835, %v848, %v849
        %v851 = vrot.slane %v503, 1
        %v852 = vrot.slane %v504, 1
        %v853 = vsel %vm835, %v851, %v852
        %v854 = vrot.slane %v507, 1
        %v855 = vrot.slane %v508, 1
        %v856 = vsel %vm835, %v854, %v855
        %v857 = vrot.slane %v511, 1
        %v858 = vrot.slane %v512, 1
        %v859 = vsel %vm835, %v857, %v858
        %v860 = vrot.slane %v515, 1
        %v861 = vrot.slane %v516, 1
        %v862 = vsel %vm835, %v860, %v861
        %v863 = vrot.slane %v519, 1
        %v864 = vrot.slane %v520, 1
        %v865 = vsel %vm835, %v863, %v864
        %v866 = vrot.slane %v523, 1
        %v867 = vrot.slane %v524, 1
        %v868 = vsel %vm835, %v866, %v867
        %v869 = vrot.slane %v527, 1
        %v870 = vrot.slane %v528, 1
        %v871 = vsel %vm835, %v869, %v870
        %v872 = vrot.slane %v531, 1
        %v873 = vrot.slane %v532, 1
        %v874 = vsel %vm835, %v872, %v873
        %v875 = vrot.slane %v535, 1
        %v876 = vrot.slane %v536, 1
        %v877 = vsel %vm835, %v875, %v876
        %v878 = vrot.slane %v539, 1
        %v879 = vrot.slane %v540, 1
        %v880 = vsel %vm835, %v878, %v879
        %v881 = vrot.slane %v543, 1
        %v882 = vrot.slane %v544, 1
        %v883 = vsel %vm835, %v881, %v882
        %884 = vrot.lane.b32.xlu0 %v836, 3
        %v885 = vpop.permute.xlu0 %884
        %886 = vrot.lane.b32.xlu0 %v838, 3
        %v887 = vpop.permute.xlu0 %886
        %888 = vrot.lane.b32.xlu0 %v837, 3
        %v889 = vpop.permute.xlu0 %888
        %890 = vrot.lane.b32.xlu0 %v839, 3
        %v891 = vpop.permute.xlu0 %890
        %892 = vrot.lane.b32.xlu0 %v841, 3
        %v893 = vpop.permute.xlu0 %892
        %894 = vrot.lane.b32.xlu0 %v840, 3
        %v895 = vpop.permute.xlu0 %894
        %896 = vrot.lane.b32.xlu0 %v842, 3
        %v897 = vpop.permute.xlu0 %896
        %898 = vrot.lane.b32.xlu0 %v844, 3
        %v899 = vpop.permute.xlu0 %898
        %900 = vrot.lane.b32.xlu0 %v843, 3
        %v901 = vpop.permute.xlu0 %900
        %902 = vrot.lane.b32.xlu0 %v845, 3
        %v903 = vpop.permute.xlu0 %902
        %904 = vrot.lane.b32.xlu0 %v847, 3
        %v905 = vpop.permute.xlu0 %904
        %906 = vrot.lane.b32.xlu0 %v846, 3
        %v907 = vpop.permute.xlu0 %906
        %908 = vrot.lane.b32.xlu0 %v848, 3
        %v909 = vpop.permute.xlu0 %908
        %910 = vrot.lane.b32.xlu0 %v850, 3
        %v911 = vpop.permute.xlu0 %910
        %912 = vrot.lane.b32.xlu0 %v849, 3
        %v913 = vpop.permute.xlu0 %912
        %914 = vrot.lane.b32.xlu0 %v851, 3
        %v915 = vpop.permute.xlu0 %914
        %916 = vrot.lane.b32.xlu0 %v853, 3
        %v917 = vpop.permute.xlu0 %916
        %918 = vrot.lane.b32.xlu0 %v852, 3
        %v919 = vpop.permute.xlu0 %918
        %920 = vrot.lane.b32.xlu0 %v854, 3
        %v921 = vpop.permute.xlu0 %920
        %922 = vrot.lane.b32.xlu0 %v856, 3
        %v923 = vpop.permute.xlu0 %922
        %924 = vrot.lane.b32.xlu0 %v855, 3
        %v925 = vpop.permute.xlu0 %924
        %926 = vrot.lane.b32.xlu0 %v857, 3
        %v927 = vpop.permute.xlu0 %926
        %928 = vrot.lane.b32.xlu0 %v859, 3
        %v929 = vpop.permute.xlu0 %928
        %930 = vrot.lane.b32.xlu0 %v858, 3
        %v931 = vpop.permute.xlu0 %930
        %932 = vrot.lane.b32.xlu0 %v860, 3
        %v933 = vpop.permute.xlu0 %932
        %934 = vrot.lane.b32.xlu0 %v862, 3
        %v935 = vpop.permute.xlu0 %934
        %936 = vrot.lane.b32.xlu0 %v861, 3
        %v937 = vpop.permute.xlu0 %936
        %938 = vrot.lane.b32.xlu0 %v863, 3
        %v939 = vpop.permute.xlu0 %938
        %940 = vrot.lane.b32.xlu0 %v865, 3
        %v941 = vpop.permute.xlu0 %940
        %942 = vrot.lane.b32.xlu0 %v864, 3
        %v943 = vpop.permute.xlu0 %942
        %944 = vrot.lane.b32.xlu0 %v866, 3
        %v945 = vpop.permute.xlu0 %944
        %946 = vrot.lane.b32.xlu0 %v868, 3
        %v947 = vpop.permute.xlu0 %946
        %948 = vrot.lane.b32.xlu0 %v867, 3
        %v949 = vpop.permute.xlu0 %948
        %950 = vrot.lane.b32.xlu0 %v869, 3
        %v951 = vpop.permute.xlu0 %950
        %952 = vrot.lane.b32.xlu0 %v871, 3
        %v953 = vpop.permute.xlu0 %952
        %954 = vrot.lane.b32.xlu0 %v870, 3
        %v955 = vpop.permute.xlu0 %954
        %956 = vrot.lane.b32.xlu0 %v872, 3
        %v957 = vpop.permute.xlu0 %956
        %958 = vrot.lane.b32.xlu0 %v874, 3
        %v959 = vpop.permute.xlu0 %958
        %960 = vrot.lane.b32.xlu0 %v873, 3
        %v961 = vpop.permute.xlu0 %960
        %962 = vrot.lane.b32.xlu0 %v875, 3
        %v963 = vpop.permute.xlu0 %962
        %964 = vrot.lane.b32.xlu0 %v877, 3
        %v965 = vpop.permute.xlu0 %964
        %966 = vrot.lane.b32.xlu0 %v876, 3
        %v967 = vpop.permute.xlu0 %966
        %968 = vrot.lane.b32.xlu0 %v878, 3
        %v969 = vpop.permute.xlu0 %968
        %970 = vrot.lane.b32.xlu0 %v880, 3
        %v971 = vpop.permute.xlu0 %970
        %972 = vrot.lane.b32.xlu0 %v879, 3
        %v973 = vpop.permute.xlu0 %972
        %974 = vrot.lane.b32.xlu0 %v881, 3
        %v975 = vpop.permute.xlu0 %974
        %976 = vrot.lane.b32.xlu0 %v883, 3
        %v977 = vpop.permute.xlu0 %976
        %978 = vrot.lane.b32.xlu0 %v882, 3
        %v979 = vpop.permute.xlu0 %978
        %vm1044 = vcmask 1045504
        %v1045 = vrot.slane %v483, 2
        %v1046 = vrot.slane %v484, 2
        %v1047 = vsel %vm1044, %v1045, %v1046
        %v1048 = vrot.slane %v485, 2
        %v1049 = vsel %vm1044, %v1046, %v1048
        %v1050 = vrot.slane %v487, 2
        %v1051 = vrot.slane %v488, 2
        %v1052 = vsel %vm1044, %v1050, %v1051
        %v1053 = vrot.slane %v489, 2
        %v1054 = vsel %vm1044, %v1051, %v1053
        %v1055 = vrot.slane %v491, 2
        %v1056 = vrot.slane %v492, 2
        %v1057 = vsel %vm1044, %v1055, %v1056
        %v1058 = vrot.slane %v493, 2
        %v1059 = vsel %vm1044, %v1056, %v1058
        %v1060 = vrot.slane %v495, 2
        %v1061 = vrot.slane %v496, 2
        %v1062 = vsel %vm1044, %v1060, %v1061
        %v1063 = vrot.slane %v497, 2
        %v1064 = vsel %vm1044, %v1061, %v1063
        %v1065 = vrot.slane %v499, 2
        %v1066 = vrot.slane %v500, 2
        %v1067 = vsel %vm1044, %v1065, %v1066
        %v1068 = vrot.slane %v501, 2
        %v1069 = vsel %vm1044, %v1066, %v1068
        %v1070 = vrot.slane %v503, 2
        %v1071 = vrot.slane %v504, 2
        %v1072 = vsel %vm1044, %v1070, %v1071
        %v1073 = vrot.slane %v505, 2
        %v1074 = vsel %vm1044, %v1071, %v1073
        %v1075 = vrot.slane %v507, 2
        %v1076 = vrot.slane %v508, 2
        %v1077 = vsel %vm1044, %v1075, %v1076
        %v1078 = vrot.slane %v509, 2
        %v1079 = vsel %vm1044, %v1076, %v1078
        %v1080 = vrot.slane %v511, 2
        %v1081 = vrot.slane %v512, 2
        %v1082 = vsel %vm1044, %v1080, %v1081
        %v1083 = vrot.slane %v513, 2
        %v1084 = vsel %vm1044, %v1081, %v1083
        %v1085 = vrot.slane %v515, 2
        %v1086 = vrot.slane %v516, 2
        %v1087 = vsel %vm1044, %v1085, %v1086
        %v1088 = vrot.slane %v517, 2
        %v1089 = vsel %vm1044, %v1086, %v1088
        %v1090 = vrot.slane %v519, 2
        %v1091 = vrot.slane %v520, 2
        %v1092 = vsel %vm1044, %v1090, %v1091
        %v1093 = vrot.slane %v521, 2
        %v1094 = vsel %vm1044, %v1091, %v1093
        %v1095 = vrot.slane %v523, 2
        %v1096 = vrot.slane %v524, 2
        %v1097 = vsel %vm1044, %v1095, %v1096
        %v1098 = vrot.slane %v525, 2
        %v1099 = vsel %vm1044, %v1096, %v1098
        %v1100 = vrot.slane %v527, 2
        %v1101 = vrot.slane %v528, 2
        %v1102 = vsel %vm1044, %v1100, %v1101
        %v1103 = vrot.slane %v529, 2
        %v1104 = vsel %vm1044, %v1101, %v1103
        %v1105 = vrot.slane %v531, 2
        %v1106 = vrot.slane %v532, 2
        %v1107 = vsel %vm1044, %v1105, %v1106
        %v1108 = vrot.slane %v533, 2
        %v1109 = vsel %vm1044, %v1106, %v1108
        %v1110 = vrot.slane %v535, 2
        %v1111 = vrot.slane %v536, 2
        %v1112 = vsel %vm1044, %v1110, %v1111
        %v1113 = vrot.slane %v537, 2
        %v1114 = vsel %vm1044, %v1111, %v1113
        %v1115 = vrot.slane %v539, 2
        %v1116 = vrot.slane %v540, 2
        %v1117 = vsel %vm1044, %v1115, %v1116
        %v1118 = vrot.slane %v541, 2
        %v1119 = vsel %vm1044, %v1116, %v1118
        %v1120 = vrot.slane %v543, 2
        %v1121 = vrot.slane %v544, 2
        %v1122 = vsel %vm1044, %v1120, %v1121
        %v1123 = vrot.slane %v545, 2
        %v1124 = vsel %vm1044, %v1121, %v1123
        %1125 = vrot.lane.b32.xlu0 %v1045, 6
        %v1126 = vpop.permute.xlu0 %1125
        %1127 = vrot.lane.b32.xlu0 %v1047, 6
        %v1128 = vpop.permute.xlu0 %1127
        %1129 = vrot.lane.b32.xlu0 %v1049, 6
        %v1130 = vpop.permute.xlu0 %1129
        %1131 = vrot.lane.b32.xlu0 %v1050, 6
        %v1132 = vpop.permute.xlu0 %1131
        %1133 = vrot.lane.b32.xlu0 %v1052, 6
        %v1134 = vpop.permute.xlu0 %1133
        %1135 = vrot.lane.b32.xlu0 %v1054, 6
        %v1136 = vpop.permute.xlu0 %1135
        %1137 = vrot.lane.b32.xlu0 %v1055, 6
        %v1138 = vpop.permute.xlu0 %1137
        %1139 = vrot.lane.b32.xlu0 %v1057, 6
        %v1140 = vpop.permute.xlu0 %1139
        %1141 = vrot.lane.b32.xlu0 %v1059, 6
        %v1142 = vpop.permute.xlu0 %1141
        %1143 = vrot.lane.b32.xlu0 %v1060, 6
        %v1144 = vpop.permute.xlu0 %1143
        %1145 = vrot.lane.b32.xlu0 %v1062, 6
        %v1146 = vpop.permute.xlu0 %1145
        %1147 = vrot.lane.b32.xlu0 %v1064, 6
        %v1148 = vpop.permute.xlu0 %1147
        %1149 = vrot.lane.b32.xlu0 %v1065, 6
        %v1150 = vpop.permute.xlu0 %1149
        %1151 = vrot.lane.b32.xlu0 %v1067, 6
        %v1152 = vpop.permute.xlu0 %1151
        %1153 = vrot.lane.b32.xlu0 %v1069, 6
        %v1154 = vpop.permute.xlu0 %1153
        %1155 = vrot.lane.b32.xlu0 %v1070, 6
        %v1156 = vpop.permute.xlu0 %1155
        %1157 = vrot.lane.b32.xlu0 %v1072, 6
        %v1158 = vpop.permute.xlu0 %1157
        %1159 = vrot.lane.b32.xlu0 %v1074, 6
        %v1160 = vpop.permute.xlu0 %1159
        %1161 = vrot.lane.b32.xlu0 %v1075, 6
        %v1162 = vpop.permute.xlu0 %1161
        %1163 = vrot.lane.b32.xlu0 %v1077, 6
        %v1164 = vpop.permute.xlu0 %1163
        %1165 = vrot.lane.b32.xlu0 %v1079, 6
        %v1166 = vpop.permute.xlu0 %1165
        %1167 = vrot.lane.b32.xlu0 %v1080, 6
        %v1168 = vpop.permute.xlu0 %1167
        %1169 = vrot.lane.b32.xlu0 %v1082, 6
        %v1170 = vpop.permute.xlu0 %1169
        %1171 = vrot.lane.b32.xlu0 %v1084, 6
        %v1172 = vpop.permute.xlu0 %1171
        %1173 = vrot.lane.b32.xlu0 %v1085, 6
        %v1174 = vpop.permute.xlu0 %1173
        %1175 = vrot.lane.b32.xlu0 %v1087, 6
        %v1176 = vpop.permute.xlu0 %1175
        %1177 = vrot.lane.b32.xlu0 %v1089, 6
        %v1178 = vpop.permute.xlu0 %1177
        %1179 = vrot.lane.b32.xlu0 %v1090, 6
        %v1180 = vpop.permute.xlu0 %1179
        %1181 = vrot.lane.b32.xlu0 %v1092, 6
        %v1182 = vpop.permute.xlu0 %1181
        %1183 = vrot.lane.b32.xlu0 %v1094, 6
        %v1184 = vpop.permute.xlu0 %1183
        %1185 = vrot.lane.b32.xlu0 %v1095, 6
        %v1186 = vpop.permute.xlu0 %1185
        %1187 = vrot.lane.b32.xlu0 %v1097, 6
        %v1188 = vpop.permute.xlu0 %1187
        %1189 = vrot.lane.b32.xlu0 %v1099, 6
        %v1190 = vpop.permute.xlu0 %1189
        %1191 = vrot.lane.b32.xlu0 %v1100, 6
        %v1192 = vpop.permute.xlu0 %1191
        %1193 = vrot.lane.b32.xlu0 %v1102, 6
        %v1194 = vpop.permute.xlu0 %1193
        %1195 = vrot.lane.b32.xlu0 %v1104, 6
        %v1196 = vpop.permute.xlu0 %1195
        %1197 = vrot.lane.b32.xlu0 %v1105, 6
        %v1198 = vpop.permute.xlu0 %1197
        %1199 = vrot.lane.b32.xlu0 %v1107, 6
        %v1200 = vpop.permute.xlu0 %1199
        %1201 = vrot.lane.b32.xlu0 %v1109, 6
        %v1202 = vpop.permute.xlu0 %1201
        %1203 = vrot.lane.b32.xlu0 %v1110, 6
        %v1204 = vpop.permute.xlu0 %1203
        %1205 = vrot.lane.b32.xlu0 %v1112, 6
        %v1206 = vpop.permute.xlu0 %1205
        %1207 = vrot.lane.b32.xlu0 %v1114, 6
        %v1208 = vpop.permute.xlu0 %1207
        %1209 = vrot.lane.b32.xlu0 %v1115, 6
        %v1210 = vpop.permute.xlu0 %1209
        %1211 = vrot.lane.b32.xlu0 %v1117, 6
        %v1212 = vpop.permute.xlu0 %1211
        %1213 = vrot.lane.b32.xlu0 %v1119, 6
        %v1214 = vpop.permute.xlu0 %1213
        %1215 = vrot.lane.b32.xlu0 %v1120, 6
        %v1216 = vpop.permute.xlu0 %1215
        %1217 = vrot.lane.b32.xlu0 %v1122, 6
        %v1218 = vpop.permute.xlu0 %1217
        %1219 = vrot.lane.b32.xlu0 %v1124, 6
        %v1220 = vpop.permute.xlu0 %1219
        %1317 = vrot.lane.b32.xlu0 %v610, 9
        %v1318 = vpop.permute.xlu0 %1317
        %1319 = vrot.lane.b32.xlu0 %v611, 9
        %v1320 = vpop.permute.xlu0 %1319
        %1321 = vrot.lane.b32.xlu0 %v612, 9
        %v1322 = vpop.permute.xlu0 %1321
        %1323 = vrot.lane.b32.xlu0 %v614, 9
        %v1324 = vpop.permute.xlu0 %1323
        %1325 = vrot.lane.b32.xlu0 %v615, 9
        %v1326 = vpop.permute.xlu0 %1325
        %1327 = vrot.lane.b32.xlu0 %v616, 9
        %v1328 = vpop.permute.xlu0 %1327
        %1329 = vrot.lane.b32.xlu0 %v618, 9
        %v1330 = vpop.permute.xlu0 %1329
        %1331 = vrot.lane.b32.xlu0 %v619, 9
        %v1332 = vpop.permute.xlu0 %1331
        %1333 = vrot.lane.b32.xlu0 %v620, 9
        %v1334 = vpop.permute.xlu0 %1333
        %1335 = vrot.lane.b32.xlu0 %v622, 9
        %v1336 = vpop.permute.xlu0 %1335
        %1337 = vrot.lane.b32.xlu0 %v623, 9
        %v1338 = vpop.permute.xlu0 %1337
        %1339 = vrot.lane.b32.xlu0 %v624, 9
        %v1340 = vpop.permute.xlu0 %1339
        %1341 = vrot.lane.b32.xlu0 %v626, 9
        %v1342 = vpop.permute.xlu0 %1341
        %1343 = vrot.lane.b32.xlu0 %v627, 9
        %v1344 = vpop.permute.xlu0 %1343
        %1345 = vrot.lane.b32.xlu0 %v628, 9
        %v1346 = vpop.permute.xlu0 %1345
        %1347 = vrot.lane.b32.xlu0 %v630, 9
        %v1348 = vpop.permute.xlu0 %1347
        %1349 = vrot.lane.b32.xlu0 %v631, 9
        %v1350 = vpop.permute.xlu0 %1349
        %1351 = vrot.lane.b32.xlu0 %v632, 9
        %v1352 = vpop.permute.xlu0 %1351
        %1353 = vrot.lane.b32.xlu0 %v634, 9
        %v1354 = vpop.permute.xlu0 %1353
        %1355 = vrot.lane.b32.xlu0 %v635, 9
        %v1356 = vpop.permute.xlu0 %1355
        %1357 = vrot.lane.b32.xlu0 %v636, 9
        %v1358 = vpop.permute.xlu0 %1357
        %1359 = vrot.lane.b32.xlu0 %v638, 9
        %v1360 = vpop.permute.xlu0 %1359
        %1361 = vrot.lane.b32.xlu0 %v639, 9
        %v1362 = vpop.permute.xlu0 %1361
        %1363 = vrot.lane.b32.xlu0 %v640, 9
        %v1364 = vpop.permute.xlu0 %1363
        %1365 = vrot.lane.b32.xlu0 %v642, 9
        %v1366 = vpop.permute.xlu0 %1365
        %1367 = vrot.lane.b32.xlu0 %v643, 9
        %v1368 = vpop.permute.xlu0 %1367
        %1369 = vrot.lane.b32.xlu0 %v644, 9
        %v1370 = vpop.permute.xlu0 %1369
        %1371 = vrot.lane.b32.xlu0 %v646, 9
        %v1372 = vpop.permute.xlu0 %1371
        %1373 = vrot.lane.b32.xlu0 %v647, 9
        %v1374 = vpop.permute.xlu0 %1373
        %1375 = vrot.lane.b32.xlu0 %v648, 9
        %v1376 = vpop.permute.xlu0 %1375
        %1377 = vrot.lane.b32.xlu0 %v650, 9
        %v1378 = vpop.permute.xlu0 %1377
        %1379 = vrot.lane.b32.xlu0 %v651, 9
        %v1380 = vpop.permute.xlu0 %1379
        %1381 = vrot.lane.b32.xlu0 %v652, 9
        %v1382 = vpop.permute.xlu0 %1381
        %1383 = vrot.lane.b32.xlu0 %v654, 9
        %v1384 = vpop.permute.xlu0 %1383
        %1385 = vrot.lane.b32.xlu0 %v655, 9
        %v1386 = vpop.permute.xlu0 %1385
        %1387 = vrot.lane.b32.xlu0 %v656, 9
        %v1388 = vpop.permute.xlu0 %1387
        %1389 = vrot.lane.b32.xlu0 %v658, 9
        %v1390 = vpop.permute.xlu0 %1389
        %1391 = vrot.lane.b32.xlu0 %v659, 9
        %v1392 = vpop.permute.xlu0 %1391
        %1393 = vrot.lane.b32.xlu0 %v660, 9
        %v1394 = vpop.permute.xlu0 %1393
        %1395 = vrot.lane.b32.xlu0 %v662, 9
        %v1396 = vpop.permute.xlu0 %1395
        %1397 = vrot.lane.b32.xlu0 %v663, 9
        %v1398 = vpop.permute.xlu0 %1397
        %1399 = vrot.lane.b32.xlu0 %v664, 9
        %v1400 = vpop.permute.xlu0 %1399
        %1401 = vrot.lane.b32.xlu0 %v666, 9
        %v1402 = vpop.permute.xlu0 %1401
        %1403 = vrot.lane.b32.xlu0 %v667, 9
        %v1404 = vpop.permute.xlu0 %1403
        %1405 = vrot.lane.b32.xlu0 %v668, 9
        %v1406 = vpop.permute.xlu0 %1405
        %1407 = vrot.lane.b32.xlu0 %v670, 9
        %v1408 = vpop.permute.xlu0 %1407
        %1409 = vrot.lane.b32.xlu0 %v671, 9
        %v1410 = vpop.permute.xlu0 %1409
        %1411 = vrot.lane.b32.xlu0 %v672, 9
        %v1412 = vpop.permute.xlu0 %1411
        %v1461 = vrot.slane %v611, 1
        %v1462 = vrot.slane %v612, 1
        %v1463 = vsel %vm835, %v1461, %v1462
        %v1464 = vrot.slane %v615, 1
        %v1465 = vrot.slane %v616, 1
        %v1466 = vsel %vm835, %v1464, %v1465
        %v1467 = vrot.slane %v619, 1
        %v1468 = vrot.slane %v620, 1
        %v1469 = vsel %vm835, %v1467, %v1468
        %v1470 = vrot.slane %v623, 1
        %v1471 = vrot.slane %v624, 1
        %v1472 = vsel %vm835, %v1470, %v1471
        %v1473 = vrot.slane %v627, 1
        %v1474 = vrot.slane %v628, 1
        %v1475 = vsel %vm835, %v1473, %v1474
        %v1476 = vrot.slane %v631, 1
        %v1477 = vrot.slane %v632, 1
        %v1478 = vsel %vm835, %v1476, %v1477
        %v1479 = vrot.slane %v635, 1
        %v1480 = vrot.slane %v636, 1
        %v1481 = vsel %vm835, %v1479, %v1480
        %v1482 = vrot.slane %v639, 1
        %v1483 = vrot.slane %v640, 1
        %v1484 = vsel %vm835, %v1482, %v1483
        %v1485 = vrot.slane %v643, 1
        %v1486 = vrot.slane %v644, 1
        %v1487 = vsel %vm835, %v1485, %v1486
        %v1488 = vrot.slane %v647, 1
        %v1489 = vrot.slane %v648, 1
        %v1490 = vsel %vm835, %v1488, %v1489
        %v1491 = vrot.slane %v651, 1
        %v1492 = vrot.slane %v652, 1
        %v1493 = vsel %vm835, %v1491, %v1492
        %v1494 = vrot.slane %v655, 1
        %v1495 = vrot.slane %v656, 1
        %v1496 = vsel %vm835, %v1494, %v1495
        %v1497 = vrot.slane %v659, 1
        %v1498 = vrot.slane %v660, 1
        %v1499 = vsel %vm835, %v1497, %v1498
        %v1500 = vrot.slane %v663, 1
        %v1501 = vrot.slane %v664, 1
        %v1502 = vsel %vm835, %v1500, %v1501
        %v1503 = vrot.slane %v667, 1
        %v1504 = vrot.slane %v668, 1
        %v1505 = vsel %vm835, %v1503, %v1504
        %v1506 = vrot.slane %v671, 1
        %v1507 = vrot.slane %v672, 1
        %v1508 = vsel %vm835, %v1506, %v1507
        %1509 = vrot.lane.b32.xlu0 %v1461, 12
        %v1510 = vpop.permute.xlu0 %1509
        %1511 = vrot.lane.b32.xlu0 %v1463, 12
        %v1512 = vpop.permute.xlu0 %1511
        %1513 = vrot.lane.b32.xlu0 %v1462, 12
        %v1514 = vpop.permute.xlu0 %1513
        %1515 = vrot.lane.b32.xlu0 %v1464, 12
        %v1516 = vpop.permute.xlu0 %1515
        %1517 = vrot.lane.b32.xlu0 %v1466, 12
        %v1518 = vpop.permute.xlu0 %1517
        %1519 = vrot.lane.b32.xlu0 %v1465, 12
        %v1520 = vpop.permute.xlu0 %1519
        %1521 = vrot.lane.b32.xlu0 %v1467, 12
        %v1522 = vpop.permute.xlu0 %1521
        %1523 = vrot.lane.b32.xlu0 %v1469, 12
        %v1524 = vpop.permute.xlu0 %1523
        %1525 = vrot.lane.b32.xlu0 %v1468, 12
        %v1526 = vpop.permute.xlu0 %1525
        %1527 = vrot.lane.b32.xlu0 %v1470, 12
        %v1528 = vpop.permute.xlu0 %1527
        %1529 = vrot.lane.b32.xlu0 %v1472, 12
        %v1530 = vpop.permute.xlu0 %1529
        %1531 = vrot.lane.b32.xlu0 %v1471, 12
        %v1532 = vpop.permute.xlu0 %1531
        %1533 = vrot.lane.b32.xlu0 %v1473, 12
        %v1534 = vpop.permute.xlu0 %1533
        %1535 = vrot.lane.b32.xlu0 %v1475, 12
        %v1536 = vpop.permute.xlu0 %1535
        %1537 = vrot.lane.b32.xlu0 %v1474, 12
        %v1538 = vpop.permute.xlu0 %1537
        %1539 = vrot.lane.b32.xlu0 %v1476, 12
        %v1540 = vpop.permute.xlu0 %1539
        %1541 = vrot.lane.b32.xlu0 %v1478, 12
        %v1542 = vpop.permute.xlu0 %1541
        %1543 = vrot.lane.b32.xlu0 %v1477, 12
        %v1544 = vpop.permute.xlu0 %1543
        %1545 = vrot.lane.b32.xlu0 %v1479, 12
        %v1546 = vpop.permute.xlu0 %1545
        %1547 = vrot.lane.b32.xlu0 %v1481, 12
        %v1548 = vpop.permute.xlu0 %1547
        %1549 = vrot.lane.b32.xlu0 %v1480, 12
        %v1550 = vpop.permute.xlu0 %1549
        %1551 = vrot.lane.b32.xlu0 %v1482, 12
        %v1552 = vpop.permute.xlu0 %1551
        %1553 = vrot.lane.b32.xlu0 %v1484, 12
        %v1554 = vpop.permute.xlu0 %1553
        %1555 = vrot.lane.b32.xlu0 %v1483, 12
        %v1556 = vpop.permute.xlu0 %1555
        %1557 = vrot.lane.b32.xlu0 %v1485, 12
        %v1558 = vpop.permute.xlu0 %1557
        %1559 = vrot.lane.b32.xlu0 %v1487, 12
        %v1560 = vpop.permute.xlu0 %1559
        %1561 = vrot.lane.b32.xlu0 %v1486, 12
        %v1562 = vpop.permute.xlu0 %1561
        %1563 = vrot.lane.b32.xlu0 %v1488, 12
        %v1564 = vpop.permute.xlu0 %1563
        %1565 = vrot.lane.b32.xlu0 %v1490, 12
        %v1566 = vpop.permute.xlu0 %1565
        %1567 = vrot.lane.b32.xlu0 %v1489, 12
        %v1568 = vpop.permute.xlu0 %1567
        %1569 = vrot.lane.b32.xlu0 %v1491, 12
        %v1570 = vpop.permute.xlu0 %1569
        %1571 = vrot.lane.b32.xlu0 %v1493, 12
        %v1572 = vpop.permute.xlu0 %1571
        %1573 = vrot.lane.b32.xlu0 %v1492, 12
        %v1574 = vpop.permute.xlu0 %1573
        %1575 = vrot.lane.b32.xlu0 %v1494, 12
        %v1576 = vpop.permute.xlu0 %1575
        %1577 = vrot.lane.b32.xlu0 %v1496, 12
        %v1578 = vpop.permute.xlu0 %1577
        %1579 = vrot.lane.b32.xlu0 %v1495, 12
        %v1580 = vpop.permute.xlu0 %1579
        %1581 = vrot.lane.b32.xlu0 %v1497, 12
        %v1582 = vpop.permute.xlu0 %1581
        %1583 = vrot.lane.b32.xlu0 %v1499, 12
        %v1584 = vpop.permute.xlu0 %1583
        %1585 = vrot.lane.b32.xlu0 %v1498, 12
        %v1586 = vpop.permute.xlu0 %1585
        %1587 = vrot.lane.b32.xlu0 %v1500, 12
        %v1588 = vpop.permute.xlu0 %1587
        %1589 = vrot.lane.b32.xlu0 %v1502, 12
        %v1590 = vpop.permute.xlu0 %1589
        %1591 = vrot.lane.b32.xlu0 %v1501, 12
        %v1592 = vpop.permute.xlu0 %1591
        %1593 = vrot.lane.b32.xlu0 %v1503, 12
        %v1594 = vpop.permute.xlu0 %1593
        %1595 = vrot.lane.b32.xlu0 %v1505, 12
        %v1596 = vpop.permute.xlu0 %1595
        %1597 = vrot.lane.b32.xlu0 %v1504, 12
        %v1598 = vpop.permute.xlu0 %1597
        %1599 = vrot.lane.b32.xlu0 %v1506, 12
        %v1600 = vpop.permute.xlu0 %1599
        %1601 = vrot.lane.b32.xlu0 %v1508, 12
        %v1602 = vpop.permute.xlu0 %1601
        %1603 = vrot.lane.b32.xlu0 %v1507, 12
        %v1604 = vpop.permute.xlu0 %1603
        %v1669 = vrot.slane %v611, 2
        %v1670 = vrot.slane %v612, 2
        %v1671 = vsel %vm1044, %v1669, %v1670
        %v1672 = vrot.slane %v613, 2
        %v1673 = vsel %vm1044, %v1670, %v1672
        %v1674 = vrot.slane %v615, 2
        %v1675 = vrot.slane %v616, 2
        %v1676 = vsel %vm1044, %v1674, %v1675
        %v1677 = vrot.slane %v617, 2
        %v1678 = vsel %vm1044, %v1675, %v1677
        %v1679 = vrot.slane %v619, 2
        %v1680 = vrot.slane %v620, 2
        %v1681 = vsel %vm1044, %v1679, %v1680
        %v1682 = vrot.slane %v621, 2
        %v1683 = vsel %vm1044, %v1680, %v1682
        %v1684 = vrot.slane %v623, 2
        %v1685 = vrot.slane %v624, 2
        %v1686 = vsel %vm1044, %v1684, %v1685
        %v1687 = vrot.slane %v625, 2
        %v1688 = vsel %vm1044, %v1685, %v1687
        %v1689 = vrot.slane %v627, 2
        %v1690 = vrot.slane %v628, 2
        %v1691 = vsel %vm1044, %v1689, %v1690
        %v1692 = vrot.slane %v629, 2
        %v1693 = vsel %vm1044, %v1690, %v1692
        %v1694 = vrot.slane %v631, 2
        %v1695 = vrot.slane %v632, 2
        %v1696 = vsel %vm1044, %v1694, %v1695
        %v1697 = vrot.slane %v633, 2
        %v1698 = vsel %vm1044, %v1695, %v1697
        %v1699 = vrot.slane %v635, 2
        %v1700 = vrot.slane %v636, 2
        %v1701 = vsel %vm1044, %v1699, %v1700
        %v1702 = vrot.slane %v637, 2
        %v1703 = vsel %vm1044, %v1700, %v1702
        %v1704 = vrot.slane %v639, 2
        %v1705 = vrot.slane %v640, 2
        %v1706 = vsel %vm1044, %v1704, %v1705
        %v1707 = vrot.slane %v641, 2
        %v1708 = vsel %vm1044, %v1705, %v1707
        %v1709 = vrot.slane %v643, 2
        %v1710 = vrot.slane %v644, 2
        %v1711 = vsel %vm1044, %v1709, %v1710
        %v1712 = vrot.slane %v645, 2
        %v1713 = vsel %vm1044, %v1710, %v1712
        %v1714 = vrot.slane %v647, 2
        %v1715 = vrot.slane %v648, 2
        %v1716 = vsel %vm1044, %v1714, %v1715
        %v1717 = vrot.slane %v649, 2
        %v1718 = vsel %vm1044, %v1715, %v1717
        %v1719 = vrot.slane %v651, 2
        %v1720 = vrot.slane %v652, 2
        %v1721 = vsel %vm1044, %v1719, %v1720
        %v1722 = vrot.slane %v653, 2
        %v1723 = vsel %vm1044, %v1720, %v1722
        %v1724 = vrot.slane %v655, 2
        %v1725 = vrot.slane %v656, 2
        %v1726 = vsel %vm1044, %v1724, %v1725
        %v1727 = vrot.slane %v657, 2
        %v1728 = vsel %vm1044, %v1725, %v1727
        %v1729 = vrot.slane %v659, 2
        %v1730 = vrot.slane %v660, 2
        %v1731 = vsel %vm1044, %v1729, %v1730
        %v1732 = vrot.slane %v661, 2
        %v1733 = vsel %vm1044, %v1730, %v1732
        %v1734 = vrot.slane %v663, 2
        %v1735 = vrot.slane %v664, 2
        %v1736 = vsel %vm1044, %v1734, %v1735
        %v1737 = vrot.slane %v665, 2
        %v1738 = vsel %vm1044, %v1735, %v1737
        %v1739 = vrot.slane %v667, 2
        %v1740 = vrot.slane %v668, 2
        %v1741 = vsel %vm1044, %v1739, %v1740
        %v1742 = vrot.slane %v669, 2
        %v1743 = vsel %vm1044, %v1740, %v1742
        %v1744 = vrot.slane %v671, 2
        %v1745 = vrot.slane %v672, 2
        %v1746 = vsel %vm1044, %v1744, %v1745
        %v1747 = vrot.slane %v673, 2
        %v1748 = vsel %vm1044, %v1745, %v1747
        %1749 = vrot.lane.b32.xlu0 %v1669, 15
        %v1750 = vpop.permute.xlu0 %1749
        %1751 = vrot.lane.b32.xlu0 %v1671, 15
        %v1752 = vpop.permute.xlu0 %1751
        %1753 = vrot.lane.b32.xlu0 %v1673, 15
        %v1754 = vpop.permute.xlu0 %1753
        %1755 = vrot.lane.b32.xlu0 %v1674, 15
        %v1756 = vpop.permute.xlu0 %1755
        %1757 = vrot.lane.b32.xlu0 %v1676, 15
        %v1758 = vpop.permute.xlu0 %1757
        %1759 = vrot.lane.b32.xlu0 %v1678, 15
        %v1760 = vpop.permute.xlu0 %1759
        %1761 = vrot.lane.b32.xlu0 %v1679, 15
        %v1762 = vpop.permute.xlu0 %1761
        %1763 = vrot.lane.b32.xlu0 %v1681, 15
        %v1764 = vpop.permute.xlu0 %1763
        %1765 = vrot.lane.b32.xlu0 %v1683, 15
        %v1766 = vpop.permute.xlu0 %1765
        %1767 = vrot.lane.b32.xlu0 %v1684, 15
        %v1768 = vpop.permute.xlu0 %1767
        %1769 = vrot.lane.b32.xlu0 %v1686, 15
        %v1770 = vpop.permute.xlu0 %1769
        %1771 = vrot.lane.b32.xlu0 %v1688, 15
        %v1772 = vpop.permute.xlu0 %1771
        %1773 = vrot.lane.b32.xlu0 %v1689, 15
        %v1774 = vpop.permute.xlu0 %1773
        %1775 = vrot.lane.b32.xlu0 %v1691, 15
        %v1776 = vpop.permute.xlu0 %1775
        %1777 = vrot.lane.b32.xlu0 %v1693, 15
        %v1778 = vpop.permute.xlu0 %1777
        %1779 = vrot.lane.b32.xlu0 %v1694, 15
        %v1780 = vpop.permute.xlu0 %1779
        %1781 = vrot.lane.b32.xlu0 %v1696, 15
        %v1782 = vpop.permute.xlu0 %1781
        %1783 = vrot.lane.b32.xlu0 %v1698, 15
        %v1784 = vpop.permute.xlu0 %1783
        %1785 = vrot.lane.b32.xlu0 %v1699, 15
        %v1786 = vpop.permute.xlu0 %1785
        %1787 = vrot.lane.b32.xlu0 %v1701, 15
        %v1788 = vpop.permute.xlu0 %1787
        %1789 = vrot.lane.b32.xlu0 %v1703, 15
        %v1790 = vpop.permute.xlu0 %1789
        %1791 = vrot.lane.b32.xlu0 %v1704, 15
        %v1792 = vpop.permute.xlu0 %1791
        %1793 = vrot.lane.b32.xlu0 %v1706, 15
        %v1794 = vpop.permute.xlu0 %1793
        %1795 = vrot.lane.b32.xlu0 %v1708, 15
        %v1796 = vpop.permute.xlu0 %1795
        %1797 = vrot.lane.b32.xlu0 %v1709, 15
        %v1798 = vpop.permute.xlu0 %1797
        %1799 = vrot.lane.b32.xlu0 %v1711, 15
        %v1800 = vpop.permute.xlu0 %1799
        %1801 = vrot.lane.b32.xlu0 %v1713, 15
        %v1802 = vpop.permute.xlu0 %1801
        %1803 = vrot.lane.b32.xlu0 %v1714, 15
        %v1804 = vpop.permute.xlu0 %1803
        %1805 = vrot.lane.b32.xlu0 %v1716, 15
        %v1806 = vpop.permute.xlu0 %1805
        %1807 = vrot.lane.b32.xlu0 %v1718, 15
        %v1808 = vpop.permute.xlu0 %1807
        %1809 = vrot.lane.b32.xlu0 %v1719, 15
        %v1810 = vpop.permute.xlu0 %1809
        %1811 = vrot.lane.b32.xlu0 %v1721, 15
        %v1812 = vpop.permute.xlu0 %1811
        %1813 = vrot.lane.b32.xlu0 %v1723, 15
        %v1814 = vpop.permute.xlu0 %1813
        %1815 = vrot.lane.b32.xlu0 %v1724, 15
        %v1816 = vpop.permute.xlu0 %1815
        %1817 = vrot.lane.b32.xlu0 %v1726, 15
        %v1818 = vpop.permute.xlu0 %1817
        %1819 = vrot.lane.b32.xlu0 %v1728, 15
        %v1820 = vpop.permute.xlu0 %1819
        %1821 = vrot.lane.b32.xlu0 %v1729, 15
        %v1822 = vpop.permute.xlu0 %1821
        %1823 = vrot.lane.b32.xlu0 %v1731, 15
        %v1824 = vpop.permute.xlu0 %1823
        %1825 = vrot.lane.b32.xlu0 %v1733, 15
        %v1826 = vpop.permute.xlu0 %1825
        %1827 = vrot.lane.b32.xlu0 %v1734, 15
        %v1828 = vpop.permute.xlu0 %1827
        %1829 = vrot.lane.b32.xlu0 %v1736, 15
        %v1830 = vpop.permute.xlu0 %1829
        %1831 = vrot.lane.b32.xlu0 %v1738, 15
        %v1832 = vpop.permute.xlu0 %1831
        %1833 = vrot.lane.b32.xlu0 %v1739, 15
        %v1834 = vpop.permute.xlu0 %1833
        %1835 = vrot.lane.b32.xlu0 %v1741, 15
        %v1836 = vpop.permute.xlu0 %1835
        %1837 = vrot.lane.b32.xlu0 %v1743, 15
        %v1838 = vpop.permute.xlu0 %1837
        %1839 = vrot.lane.b32.xlu0 %v1744, 15
        %v1840 = vpop.permute.xlu0 %1839
        %1841 = vrot.lane.b32.xlu0 %v1746, 15
        %v1842 = vpop.permute.xlu0 %1841
        %1843 = vrot.lane.b32.xlu0 %v1748, 15
        %v1844 = vpop.permute.xlu0 %1843
        %1941 = vrot.lane.b32.xlu0 %v739, 18
        %v1942 = vpop.permute.xlu0 %1941
        %1943 = vrot.lane.b32.xlu0 %v740, 18
        %v1944 = vpop.permute.xlu0 %1943
        %1945 = vrot.lane.b32.xlu0 %v741, 18
        %v1946 = vpop.permute.xlu0 %1945
        %1947 = vrot.lane.b32.xlu0 %v743, 18
        %v1948 = vpop.permute.xlu0 %1947
        %1949 = vrot.lane.b32.xlu0 %v744, 18
        %v1950 = vpop.permute.xlu0 %1949
        %1951 = vrot.lane.b32.xlu0 %v745, 18
        %v1952 = vpop.permute.xlu0 %1951
        %1953 = vrot.lane.b32.xlu0 %v747, 18
        %v1954 = vpop.permute.xlu0 %1953
        %1955 = vrot.lane.b32.xlu0 %v748, 18
        %v1956 = vpop.permute.xlu0 %1955
        %1957 = vrot.lane.b32.xlu0 %v749, 18
        %v1958 = vpop.permute.xlu0 %1957
        %1959 = vrot.lane.b32.xlu0 %v751, 18
        %v1960 = vpop.permute.xlu0 %1959
        %1961 = vrot.lane.b32.xlu0 %v752, 18
        %v1962 = vpop.permute.xlu0 %1961
        %1963 = vrot.lane.b32.xlu0 %v753, 18
        %v1964 = vpop.permute.xlu0 %1963
        %1965 = vrot.lane.b32.xlu0 %v755, 18
        %v1966 = vpop.permute.xlu0 %1965
        %1967 = vrot.lane.b32.xlu0 %v756, 18
        %v1968 = vpop.permute.xlu0 %1967
        %1969 = vrot.lane.b32.xlu0 %v757, 18
        %v1970 = vpop.permute.xlu0 %1969
        %1971 = vrot.lane.b32.xlu0 %v759, 18
        %v1972 = vpop.permute.xlu0 %1971
        %1973 = vrot.lane.b32.xlu0 %v760, 18
        %v1974 = vpop.permute.xlu0 %1973
        %1975 = vrot.lane.b32.xlu0 %v761, 18
        %v1976 = vpop.permute.xlu0 %1975
        %1977 = vrot.lane.b32.xlu0 %v763, 18
        %v1978 = vpop.permute.xlu0 %1977
        %1979 = vrot.lane.b32.xlu0 %v764, 18
        %v1980 = vpop.permute.xlu0 %1979
        %1981 = vrot.lane.b32.xlu0 %v765, 18
        %v1982 = vpop.permute.xlu0 %1981
        %1983 = vrot.lane.b32.xlu0 %v767, 18
        %v1984 = vpop.permute.xlu0 %1983
        %1985 = vrot.lane.b32.xlu0 %v768, 18
        %v1986 = vpop.permute.xlu0 %1985
        %1987 = vrot.lane.b32.xlu0 %v769, 18
        %v1988 = vpop.permute.xlu0 %1987
        %1989 = vrot.lane.b32.xlu0 %v771, 18
        %v1990 = vpop.permute.xlu0 %1989
        %1991 = vrot.lane.b32.xlu0 %v772, 18
        %v1992 = vpop.permute.xlu0 %1991
        %1993 = vrot.lane.b32.xlu0 %v773, 18
        %v1994 = vpop.permute.xlu0 %1993
        %1995 = vrot.lane.b32.xlu0 %v775, 18
        %v1996 = vpop.permute.xlu0 %1995
        %1997 = vrot.lane.b32.xlu0 %v776, 18
        %v1998 = vpop.permute.xlu0 %1997
        %1999 = vrot.lane.b32.xlu0 %v777, 18
        %v2000 = vpop.permute.xlu0 %1999
        %2001 = vrot.lane.b32.xlu0 %v779, 18
        %v2002 = vpop.permute.xlu0 %2001
        %2003 = vrot.lane.b32.xlu0 %v780, 18
        %v2004 = vpop.permute.xlu0 %2003
        %2005 = vrot.lane.b32.xlu0 %v781, 18
        %v2006 = vpop.permute.xlu0 %2005
        %2007 = vrot.lane.b32.xlu0 %v783, 18
        %v2008 = vpop.permute.xlu0 %2007
        %2009 = vrot.lane.b32.xlu0 %v784, 18
        %v2010 = vpop.permute.xlu0 %2009
        %2011 = vrot.lane.b32.xlu0 %v785, 18
        %v2012 = vpop.permute.xlu0 %2011
        %2013 = vrot.lane.b32.xlu0 %v787, 18
        %v2014 = vpop.permute.xlu0 %2013
        %2015 = vrot.lane.b32.xlu0 %v788, 18
        %v2016 = vpop.permute.xlu0 %2015
        %2017 = vrot.lane.b32.xlu0 %v789, 18
        %v2018 = vpop.permute.xlu0 %2017
        %2019 = vrot.lane.b32.xlu0 %v791, 18
        %v2020 = vpop.permute.xlu0 %2019
        %2021 = vrot.lane.b32.xlu0 %v792, 18
        %v2022 = vpop.permute.xlu0 %2021
        %2023 = vrot.lane.b32.xlu0 %v793, 18
        %v2024 = vpop.permute.xlu0 %2023
        %2025 = vrot.lane.b32.xlu0 %v795, 18
        %v2026 = vpop.permute.xlu0 %2025
        %2027 = vrot.lane.b32.xlu0 %v796, 18
        %v2028 = vpop.permute.xlu0 %2027
        %2029 = vrot.lane.b32.xlu0 %v797, 18
        %v2030 = vpop.permute.xlu0 %2029
        %2031 = vrot.lane.b32.xlu0 %v799, 18
        %v2032 = vpop.permute.xlu0 %2031
        %2033 = vrot.lane.b32.xlu0 %v800, 18
        %v2034 = vpop.permute.xlu0 %2033
        %2035 = vrot.lane.b32.xlu0 %v801, 18
        %v2036 = vpop.permute.xlu0 %2035
        %v2085 = vrot.slane %v740, 1
        %v2086 = vrot.slane %v741, 1
        %v2087 = vsel %vm835, %v2085, %v2086
        %v2088 = vrot.slane %v744, 1
        %v2089 = vrot.slane %v745, 1
        %v2090 = vsel %vm835, %v2088, %v2089
        %v2091 = vrot.slane %v748, 1
        %v2092 = vrot.slane %v749, 1
        %v2093 = vsel %vm835, %v2091, %v2092
        %v2094 = vrot.slane %v752, 1
        %v2095 = vrot.slane %v753, 1
        %v2096 = vsel %vm835, %v2094, %v2095
        %v2097 = vrot.slane %v756, 1
        %v2098 = vrot.slane %v757, 1
        %v2099 = vsel %vm835, %v2097, %v2098
        %v2100 = vrot.slane %v760, 1
        %v2101 = vrot.slane %v761, 1
        %v2102 = vsel %vm835, %v2100, %v2101
        %v2103 = vrot.slane %v764, 1
        %v2104 = vrot.slane %v765, 1
        %v2105 = vsel %vm835, %v2103, %v2104
        %v2106 = vrot.slane %v768, 1
        %v2107 = vrot.slane %v769, 1
        %v2108 = vsel %vm835, %v2106, %v2107
        %v2109 = vrot.slane %v772, 1
        %v2110 = vrot.slane %v773, 1
        %v2111 = vsel %vm835, %v2109, %v2110
        %v2112 = vrot.slane %v776, 1
        %v2113 = vrot.slane %v777, 1
        %v2114 = vsel %vm835, %v2112, %v2113
        %v2115 = vrot.slane %v780, 1
        %v2116 = vrot.slane %v781, 1
        %v2117 = vsel %vm835, %v2115, %v2116
        %v2118 = vrot.slane %v784, 1
        %v2119 = vrot.slane %v785, 1
        %v2120 = vsel %vm835, %v2118, %v2119
        %v2121 = vrot.slane %v788, 1
        %v2122 = vrot.slane %v789, 1
        %v2123 = vsel %vm835, %v2121, %v2122
        %v2124 = vrot.slane %v792, 1
        %v2125 = vrot.slane %v793, 1
        %v2126 = vsel %vm835, %v2124, %v2125
        %v2127 = vrot.slane %v796, 1
        %v2128 = vrot.slane %v797, 1
        %v2129 = vsel %vm835, %v2127, %v2128
        %v2130 = vrot.slane %v800, 1
        %v2131 = vrot.slane %v801, 1
        %v2132 = vsel %vm835, %v2130, %v2131
        %2133 = vrot.lane.b32.xlu0 %v2085, 21
        %v2134 = vpop.permute.xlu0 %2133
        %2135 = vrot.lane.b32.xlu0 %v2087, 21
        %v2136 = vpop.permute.xlu0 %2135
        %2137 = vrot.lane.b32.xlu0 %v2086, 21
        %v2138 = vpop.permute.xlu0 %2137
        %2139 = vrot.lane.b32.xlu0 %v2088, 21
        %v2140 = vpop.permute.xlu0 %2139
        %2141 = vrot.lane.b32.xlu0 %v2090, 21
        %v2142 = vpop.permute.xlu0 %2141
        %2143 = vrot.lane.b32.xlu0 %v2089, 21
        %v2144 = vpop.permute.xlu0 %2143
        %2145 = vrot.lane.b32.xlu0 %v2091, 21
        %v2146 = vpop.permute.xlu0 %2145
        %2147 = vrot.lane.b32.xlu0 %v2093, 21
        %v2148 = vpop.permute.xlu0 %2147
        %2149 = vrot.lane.b32.xlu0 %v2092, 21
        %v2150 = vpop.permute.xlu0 %2149
        %2151 = vrot.lane.b32.xlu0 %v2094, 21
        %v2152 = vpop.permute.xlu0 %2151
        %2153 = vrot.lane.b32.xlu0 %v2096, 21
        %v2154 = vpop.permute.xlu0 %2153
        %2155 = vrot.lane.b32.xlu0 %v2095, 21
        %v2156 = vpop.permute.xlu0 %2155
        %2157 = vrot.lane.b32.xlu0 %v2097, 21
        %v2158 = vpop.permute.xlu0 %2157
        %2159 = vrot.lane.b32.xlu0 %v2099, 21
        %v2160 = vpop.permute.xlu0 %2159
        %2161 = vrot.lane.b32.xlu0 %v2098, 21
        %v2162 = vpop.permute.xlu0 %2161
        %2163 = vrot.lane.b32.xlu0 %v2100, 21
        %v2164 = vpop.permute.xlu0 %2163
        %2165 = vrot.lane.b32.xlu0 %v2102, 21
        %v2166 = vpop.permute.xlu0 %2165
        %2167 = vrot.lane.b32.xlu0 %v2101, 21
        %v2168 = vpop.permute.xlu0 %2167
        %2169 = vrot.lane.b32.xlu0 %v2103, 21
        %v2170 = vpop.permute.xlu0 %2169
        %2171 = vrot.lane.b32.xlu0 %v2105, 21
        %v2172 = vpop.permute.xlu0 %2171
        %2173 = vrot.lane.b32.xlu0 %v2104, 21
        %v2174 = vpop.permute.xlu0 %2173
        %2175 = vrot.lane.b32.xlu0 %v2106, 21
        %v2176 = vpop.permute.xlu0 %2175
        %2177 = vrot.lane.b32.xlu0 %v2108, 21
        %v2178 = vpop.permute.xlu0 %2177
        %2179 = vrot.lane.b32.xlu0 %v2107, 21
        %v2180 = vpop.permute.xlu0 %2179
        %2181 = vrot.lane.b32.xlu0 %v2109, 21
        %v2182 = vpop.permute.xlu0 %2181
        %2183 = vrot.lane.b32.xlu0 %v2111, 21
        %v2184 = vpop.permute.xlu0 %2183
        %2185 = vrot.lane.b32.xlu0 %v2110, 21
        %v2186 = vpop.permute.xlu0 %2185
        %2187 = vrot.lane.b32.xlu0 %v2112, 21
        %v2188 = vpop.permute.xlu0 %2187
        %2189 = vrot.lane.b32.xlu0 %v2114, 21
        %v2190 = vpop.permute.xlu0 %2189
        %2191 = vrot.lane.b32.xlu0 %v2113, 21
        %v2192 = vpop.permute.xlu0 %2191
        %2193 = vrot.lane.b32.xlu0 %v2115, 21
        %v2194 = vpop.permute.xlu0 %2193
        %2195 = vrot.lane.b32.xlu0 %v2117, 21
        %v2196 = vpop.permute.xlu0 %2195
        %2197 = vrot.lane.b32.xlu0 %v2116, 21
        %v2198 = vpop.permute.xlu0 %2197
        %2199 = vrot.lane.b32.xlu0 %v2118, 21
        %v2200 = vpop.permute.xlu0 %2199
        %2201 = vrot.lane.b32.xlu0 %v2120, 21
        %v2202 = vpop.permute.xlu0 %2201
        %2203 = vrot.lane.b32.xlu0 %v2119, 21
        %v2204 = vpop.permute.xlu0 %2203
        %2205 = vrot.lane.b32.xlu0 %v2121, 21
        %v2206 = vpop.permute.xlu0 %2205
        %2207 = vrot.lane.b32.xlu0 %v2123, 21
        %v2208 = vpop.permute.xlu0 %2207
        %2209 = vrot.lane.b32.xlu0 %v2122, 21
        %v2210 = vpop.permute.xlu0 %2209
        %2211 = vrot.lane.b32.xlu0 %v2124, 21
        %v2212 = vpop.permute.xlu0 %2211
        %2213 = vrot.lane.b32.xlu0 %v2126, 21
        %v2214 = vpop.permute.xlu0 %2213
        %2215 = vrot.lane.b32.xlu0 %v2125, 21
        %v2216 = vpop.permute.xlu0 %2215
        %2217 = vrot.lane.b32.xlu0 %v2127, 21
        %v2218 = vpop.permute.xlu0 %2217
        %2219 = vrot.lane.b32.xlu0 %v2129, 21
        %v2220 = vpop.permute.xlu0 %2219
        %2221 = vrot.lane.b32.xlu0 %v2128, 21
        %v2222 = vpop.permute.xlu0 %2221
        %2223 = vrot.lane.b32.xlu0 %v2130, 21
        %v2224 = vpop.permute.xlu0 %2223
        %2225 = vrot.lane.b32.xlu0 %v2132, 21
        %v2226 = vpop.permute.xlu0 %2225
        %2227 = vrot.lane.b32.xlu0 %v2131, 21
        %v2228 = vpop.permute.xlu0 %2227
        %v2293 = vrot.slane %v740, 2
        %v2294 = vrot.slane %v741, 2
        %v2295 = vsel %vm1044, %v2293, %v2294
        %v2296 = vrot.slane %v742, 2
        %v2297 = vsel %vm1044, %v2294, %v2296
        %v2298 = vrot.slane %v744, 2
        %v2299 = vrot.slane %v745, 2
        %v2300 = vsel %vm1044, %v2298, %v2299
        %v2301 = vrot.slane %v746, 2
        %v2302 = vsel %vm1044, %v2299, %v2301
        %v2303 = vrot.slane %v748, 2
        %v2304 = vrot.slane %v749, 2
        %v2305 = vsel %vm1044, %v2303, %v2304
        %v2306 = vrot.slane %v750, 2
        %v2307 = vsel %vm1044, %v2304, %v2306
        %v2308 = vrot.slane %v752, 2
        %v2309 = vrot.slane %v753, 2
        %v2310 = vsel %vm1044, %v2308, %v2309
        %v2311 = vrot.slane %v754, 2
        %v2312 = vsel %vm1044, %v2309, %v2311
        %v2313 = vrot.slane %v756, 2
        %v2314 = vrot.slane %v757, 2
        %v2315 = vsel %vm1044, %v2313, %v2314
        %v2316 = vrot.slane %v758, 2
        %v2317 = vsel %vm1044, %v2314, %v2316
        %v2318 = vrot.slane %v760, 2
        %v2319 = vrot.slane %v761, 2
        %v2320 = vsel %vm1044, %v2318, %v2319
        %v2321 = vrot.slane %v762, 2
        %v2322 = vsel %vm1044, %v2319, %v2321
        %v2323 = vrot.slane %v764, 2
        %v2324 = vrot.slane %v765, 2
        %v2325 = vsel %vm1044, %v2323, %v2324
        %v2326 = vrot.slane %v766, 2
        %v2327 = vsel %vm1044, %v2324, %v2326
        %v2328 = vrot.slane %v768, 2
        %v2329 = vrot.slane %v769, 2
        %v2330 = vsel %vm1044, %v2328, %v2329
        %v2331 = vrot.slane %v770, 2
        %v2332 = vsel %vm1044, %v2329, %v2331
        %v2333 = vrot.slane %v772, 2
        %v2334 = vrot.slane %v773, 2
        %v2335 = vsel %vm1044, %v2333, %v2334
        %v2336 = vrot.slane %v774, 2
        %v2337 = vsel %vm1044, %v2334, %v2336
        %v2338 = vrot.slane %v776, 2
        %v2339 = vrot.slane %v777, 2
        %v2340 = vsel %vm1044, %v2338, %v2339
        %v2341 = vrot.slane %v778, 2
        %v2342 = vsel %vm1044, %v2339, %v2341
        %v2343 = vrot.slane %v780, 2
        %v2344 = vrot.slane %v781, 2
        %v2345 = vsel %vm1044, %v2343, %v2344
        %v2346 = vrot.slane %v782, 2
        %v2347 = vsel %vm1044, %v2344, %v2346
        %v2348 = vrot.slane %v784, 2
        %v2349 = vrot.slane %v785, 2
        %v2350 = vsel %vm1044, %v2348, %v2349
        %v2351 = vrot.slane %v786, 2
        %v2352 = vsel %vm1044, %v2349, %v2351
        %v2353 = vrot.slane %v788, 2
        %v2354 = vrot.slane %v789, 2
        %v2355 = vsel %vm1044, %v2353, %v2354
        %v2356 = vrot.slane %v790, 2
        %v2357 = vsel %vm1044, %v2354, %v2356
        %v2358 = vrot.slane %v792, 2
        %v2359 = vrot.slane %v793, 2
        %v2360 = vsel %vm1044, %v2358, %v2359
        %v2361 = vrot.slane %v794, 2
        %v2362 = vsel %vm1044, %v2359, %v2361
        %v2363 = vrot.slane %v796, 2
        %v2364 = vrot.slane %v797, 2
        %v2365 = vsel %vm1044, %v2363, %v2364
        %v2366 = vrot.slane %v798, 2
        %v2367 = vsel %vm1044, %v2364, %v2366
        %v2368 = vrot.slane %v800, 2
        %v2369 = vrot.slane %v801, 2
        %v2370 = vsel %vm1044, %v2368, %v2369
        %v2371 = vrot.slane %v802, 2
        %v2372 = vsel %vm1044, %v2369, %v2371
        %2373 = vrot.lane.b32.xlu0 %v2293, 24
        %v2374 = vpop.permute.xlu0 %2373
        %2375 = vrot.lane.b32.xlu0 %v2295, 24
        %v2376 = vpop.permute.xlu0 %2375
        %2377 = vrot.lane.b32.xlu0 %v2297, 24
        %v2378 = vpop.permute.xlu0 %2377
        %2379 = vrot.lane.b32.xlu0 %v2298, 24
        %v2380 = vpop.permute.xlu0 %2379
        %2381 = vrot.lane.b32.xlu0 %v2300, 24
        %v2382 = vpop.permute.xlu0 %2381
        %2383 = vrot.lane.b32.xlu0 %v2302, 24
        %v2384 = vpop.permute.xlu0 %2383
        %2385 = vrot.lane.b32.xlu0 %v2303, 24
        %v2386 = vpop.permute.xlu0 %2385
        %2387 = vrot.lane.b32.xlu0 %v2305, 24
        %v2388 = vpop.permute.xlu0 %2387
        %2389 = vrot.lane.b32.xlu0 %v2307, 24
        %v2390 = vpop.permute.xlu0 %2389
        %2391 = vrot.lane.b32.xlu0 %v2308, 24
        %v2392 = vpop.permute.xlu0 %2391
        %2393 = vrot.lane.b32.xlu0 %v2310, 24
        %v2394 = vpop.permute.xlu0 %2393
        %2395 = vrot.lane.b32.xlu0 %v2312, 24
        %v2396 = vpop.permute.xlu0 %2395
        %2397 = vrot.lane.b32.xlu0 %v2313, 24
        %v2398 = vpop.permute.xlu0 %2397
        %2399 = vrot.lane.b32.xlu0 %v2315, 24
        %v2400 = vpop.permute.xlu0 %2399
        %2401 = vrot.lane.b32.xlu0 %v2317, 24
        %v2402 = vpop.permute.xlu0 %2401
        %2403 = vrot.lane.b32.xlu0 %v2318, 24
        %v2404 = vpop.permute.xlu0 %2403
        %2405 = vrot.lane.b32.xlu0 %v2320, 24
        %v2406 = vpop.permute.xlu0 %2405
        %2407 = vrot.lane.b32.xlu0 %v2322, 24
        %v2408 = vpop.permute.xlu0 %2407
        %2409 = vrot.lane.b32.xlu0 %v2323, 24
        %v2410 = vpop.permute.xlu0 %2409
        %2411 = vrot.lane.b32.xlu0 %v2325, 24
        %v2412 = vpop.permute.xlu0 %2411
        %2413 = vrot.lane.b32.xlu0 %v2327, 24
        %v2414 = vpop.permute.xlu0 %2413
        %2415 = vrot.lane.b32.xlu0 %v2328, 24
        %v2416 = vpop.permute.xlu0 %2415
        %2417 = vrot.lane.b32.xlu0 %v2330, 24
        %v2418 = vpop.permute.xlu0 %2417
        %2419 = vrot.lane.b32.xlu0 %v2332, 24
        %v2420 = vpop.permute.xlu0 %2419
        %2421 = vrot.lane.b32.xlu0 %v2333, 24
        %v2422 = vpop.permute.xlu0 %2421
        %2423 = vrot.lane.b32.xlu0 %v2335, 24
        %v2424 = vpop.permute.xlu0 %2423
        %2425 = vrot.lane.b32.xlu0 %v2337, 24
        %v2426 = vpop.permute.xlu0 %2425
        %2427 = vrot.lane.b32.xlu0 %v2338, 24
        %v2428 = vpop.permute.xlu0 %2427
        %2429 = vrot.lane.b32.xlu0 %v2340, 24
        %v2430 = vpop.permute.xlu0 %2429
        %2431 = vrot.lane.b32.xlu0 %v2342, 24
        %v2432 = vpop.permute.xlu0 %2431
        %2433 = vrot.lane.b32.xlu0 %v2343, 24
        %v2434 = vpop.permute.xlu0 %2433
        %2435 = vrot.lane.b32.xlu0 %v2345, 24
        %v2436 = vpop.permute.xlu0 %2435
        %2437 = vrot.lane.b32.xlu0 %v2347, 24
        %v2438 = vpop.permute.xlu0 %2437
        %2439 = vrot.lane.b32.xlu0 %v2348, 24
        %v2440 = vpop.permute.xlu0 %2439
        %2441 = vrot.lane.b32.xlu0 %v2350, 24
        %v2442 = vpop.permute.xlu0 %2441
        %2443 = vrot.lane.b32.xlu0 %v2352, 24
        %v2444 = vpop.permute.xlu0 %2443
        %2445 = vrot.lane.b32.xlu0 %v2353, 24
        %v2446 = vpop.permute.xlu0 %2445
        %2447 = vrot.lane.b32.xlu0 %v2355, 24
        %v2448 = vpop.permute.xlu0 %2447
        %2449 = vrot.lane.b32.xlu0 %v2357, 24
        %v2450 = vpop.permute.xlu0 %2449
        %2451 = vrot.lane.b32.xlu0 %v2358, 24
        %v2452 = vpop.permute.xlu0 %2451
        %2453 = vrot.lane.b32.xlu0 %v2360, 24
        %v2454 = vpop.permute.xlu0 %2453
        %2455 = vrot.lane.b32.xlu0 %v2362, 24
        %v2456 = vpop.permute.xlu0 %2455
        %2457 = vrot.lane.b32.xlu0 %v2363, 24
        %v2458 = vpop.permute.xlu0 %2457
        %2459 = vrot.lane.b32.xlu0 %v2365, 24
        %v2460 = vpop.permute.xlu0 %2459
        %2461 = vrot.lane.b32.xlu0 %v2367, 24
        %v2462 = vpop.permute.xlu0 %2461
        %2463 = vrot.lane.b32.xlu0 %v2368, 24
        %v2464 = vpop.permute.xlu0 %2463
        %2465 = vrot.lane.b32.xlu0 %v2370, 24
        %v2466 = vpop.permute.xlu0 %2465
        %2467 = vrot.lane.b32.xlu0 %v2372, 24
        %v2468 = vpop.permute.xlu0 %2467
        %vm2517 = vcmask 23552
        %v2518 = vsel %vm2517, %v482, %v885
        %v2519 = vsel %vm2517, %v483, %v887
        %v2520 = vsel %vm2517, %v484, %v889
        %v2521 = vsel %vm2517, %v486, %v891
        %v2522 = vsel %vm2517, %v487, %v893
        %v2523 = vsel %vm2517, %v488, %v895
        %v2524 = vsel %vm2517, %v490, %v897
        %v2525 = vsel %vm2517, %v491, %v899
        %v2526 = vsel %vm2517, %v492, %v901
        %v2527 = vsel %vm2517, %v494, %v903
        %v2528 = vsel %vm2517, %v495, %v905
        %v2529 = vsel %vm2517, %v496, %v907
        %v2530 = vsel %vm2517, %v498, %v909
        %v2531 = vsel %vm2517, %v499, %v911
        %v2532 = vsel %vm2517, %v500, %v913
        %v2533 = vsel %vm2517, %v502, %v915
        %v2534 = vsel %vm2517, %v503, %v917
        %v2535 = vsel %vm2517, %v504, %v919
        %v2536 = vsel %vm2517, %v506, %v921
        %v2537 = vsel %vm2517, %v507, %v923
        %v2538 = vsel %vm2517, %v508, %v925
        %v2539 = vsel %vm2517, %v510, %v927
        %v2540 = vsel %vm2517, %v511, %v929
        %v2541 = vsel %vm2517, %v512, %v931
        %v2542 = vsel %vm2517, %v514, %v933
        %v2543 = vsel %vm2517, %v515, %v935
        %v2544 = vsel %vm2517, %v516, %v937
        %v2545 = vsel %vm2517, %v518, %v939
        %v2546 = vsel %vm2517, %v519, %v941
        %v2547 = vsel %vm2517, %v520, %v943
        %v2548 = vsel %vm2517, %v522, %v945
        %v2549 = vsel %vm2517, %v523, %v947
        %v2550 = vsel %vm2517, %v524, %v949
        %v2551 = vsel %vm2517, %v526, %v951
        %v2552 = vsel %vm2517, %v527, %v953
        %v2553 = vsel %vm2517, %v528, %v955
        %v2554 = vsel %vm2517, %v530, %v957
        %v2555 = vsel %vm2517, %v531, %v959
        %v2556 = vsel %vm2517, %v532, %v961
        %v2557 = vsel %vm2517, %v534, %v963
        %v2558 = vsel %vm2517, %v535, %v965
        %v2559 = vsel %vm2517, %v536, %v967
        %v2560 = vsel %vm2517, %v538, %v969
        %v2561 = vsel %vm2517, %v539, %v971
        %v2562 = vsel %vm2517, %v540, %v973
        %v2563 = vsel %vm2517, %v542, %v975
        %v2564 = vsel %vm2517, %v543, %v977
        %v2565 = vsel %vm2517, %v544, %v979
        %vm2566 = vcmask 48128
        %v2567 = vsel %vm2566, %v2518, %v1126
        %v2568 = vsel %vm2566, %v2519, %v1128
        %v2569 = vsel %vm2566, %v2520, %v1130
        %v2570 = vsel %vm2566, %v2521, %v1132
        %v2571 = vsel %vm2566, %v2522, %v1134
        %v2572 = vsel %vm2566, %v2523, %v1136
        %v2573 = vsel %vm2566, %v2524, %v1138
        %v2574 = vsel %vm2566, %v2525, %v1140
        %v2575 = vsel %vm2566, %v2526, %v1142
        %v2576 = vsel %vm2566, %v2527, %v1144
        %v2577 = vsel %vm2566, %v2528, %v1146
        %v2578 = vsel %vm2566, %v2529, %v1148
        %v2579 = vsel %vm2566, %v2530, %v1150
        %v2580 = vsel %vm2566, %v2531, %v1152
        %v2581 = vsel %vm2566, %v2532, %v1154
        %v2582 = vsel %vm2566, %v2533, %v1156
        %v2583 = vsel %vm2566, %v2534, %v1158
        %v2584 = vsel %vm2566, %v2535, %v1160
        %v2585 = vsel %vm2566, %v2536, %v1162
        %v2586 = vsel %vm2566, %v2537, %v1164
        %v2587 = vsel %vm2566, %v2538, %v1166
        %v2588 = vsel %vm2566, %v2539, %v1168
        %v2589 = vsel %vm2566, %v2540, %v1170
        %v2590 = vsel %vm2566, %v2541, %v1172
        %v2591 = vsel %vm2566, %v2542, %v1174
        %v2592 = vsel %vm2566, %v2543, %v1176
        %v2593 = vsel %vm2566, %v2544, %v1178
        %v2594 = vsel %vm2566, %v2545, %v1180
        %v2595 = vsel %vm2566, %v2546, %v1182
        %v2596 = vsel %vm2566, %v2547, %v1184
        %v2597 = vsel %vm2566, %v2548, %v1186
        %v2598 = vsel %vm2566, %v2549, %v1188
        %v2599 = vsel %vm2566, %v2550, %v1190
        %v2600 = vsel %vm2566, %v2551, %v1192
        %v2601 = vsel %vm2566, %v2552, %v1194
        %v2602 = vsel %vm2566, %v2553, %v1196
        %v2603 = vsel %vm2566, %v2554, %v1198
        %v2604 = vsel %vm2566, %v2555, %v1200
        %v2605 = vsel %vm2566, %v2556, %v1202
        %v2606 = vsel %vm2566, %v2557, %v1204
        %v2607 = vsel %vm2566, %v2558, %v1206
        %v2608 = vsel %vm2566, %v2559, %v1208
        %v2609 = vsel %vm2566, %v2560, %v1210
        %v2610 = vsel %vm2566, %v2561, %v1212
        %v2611 = vsel %vm2566, %v2562, %v1214
        %v2612 = vsel %vm2566, %v2563, %v1216
        %v2613 = vsel %vm2566, %v2564, %v1218
        %v2614 = vsel %vm2566, %v2565, %v1220
        %vm2615 = vcmask 72704
        %v2616 = vsel %vm2615, %v2567, %v1318
        %v2617 = vsel %vm2615, %v2568, %v1320
        %v2618 = vsel %vm2615, %v2569, %v1322
        %v2619 = vsel %vm2615, %v2570, %v1324
        %v2620 = vsel %vm2615, %v2571, %v1326
        %v2621 = vsel %vm2615, %v2572, %v1328
        %v2622 = vsel %vm2615, %v2573, %v1330
        %v2623 = vsel %vm2615, %v2574, %v1332
        %v2624 = vsel %vm2615, %v2575, %v1334
        %v2625 = vsel %vm2615, %v2576, %v1336
        %v2626 = vsel %vm2615, %v2577, %v1338
        %v2627 = vsel %vm2615, %v2578, %v1340
        %v2628 = vsel %vm2615, %v2579, %v1342
        %v2629 = vsel %vm2615, %v2580, %v1344
        %v2630 = vsel %vm2615, %v2581, %v1346
        %v2631 = vsel %vm2615, %v2582, %v1348
        %v2632 = vsel %vm2615, %v2583, %v1350
        %v2633 = vsel %vm2615, %v2584, %v1352
        %v2634 = vsel %vm2615, %v2585, %v1354
        %v2635 = vsel %vm2615, %v2586, %v1356
        %v2636 = vsel %vm2615, %v2587, %v1358
        %v2637 = vsel %vm2615, %v2588, %v1360
        %v2638 = vsel %vm2615, %v2589, %v1362
        %v2639 = vsel %vm2615, %v2590, %v1364
        %v2640 = vsel %vm2615, %v2591, %v1366
        %v2641 = vsel %vm2615, %v2592, %v1368
        %v2642 = vsel %vm2615, %v2593, %v1370
        %v2643 = vsel %vm2615, %v2594, %v1372
        %v2644 = vsel %vm2615, %v2595, %v1374
        %v2645 = vsel %vm2615, %v2596, %v1376
        %v2646 = vsel %vm2615, %v2597, %v1378
        %v2647 = vsel %vm2615, %v2598, %v1380
        %v2648 = vsel %vm2615, %v2599, %v1382
        %v2649 = vsel %vm2615, %v2600, %v1384
        %v2650 = vsel %vm2615, %v2601, %v1386
        %v2651 = vsel %vm2615, %v2602, %v1388
        %v2652 = vsel %vm2615, %v2603, %v1390
        %v2653 = vsel %vm2615, %v2604, %v1392
        %v2654 = vsel %vm2615, %v2605, %v1394
        %v2655 = vsel %vm2615, %v2606, %v1396
        %v2656 = vsel %vm2615, %v2607, %v1398
        %v2657 = vsel %vm2615, %v2608, %v1400
        %v2658 = vsel %vm2615, %v2609, %v1402
        %v2659 = vsel %vm2615, %v2610, %v1404
        %v2660 = vsel %vm2615, %v2611, %v1406
        %v2661 = vsel %vm2615, %v2612, %v1408
        %v2662 = vsel %vm2615, %v2613, %v1410
        %v2663 = vsel %vm2615, %v2614, %v1412
        %vm2664 = vcmask 97280
        %v2665 = vsel %vm2664, %v2616, %v1510
        %v2666 = vsel %vm2664, %v2617, %v1512
        %v2667 = vsel %vm2664, %v2618, %v1514
        %v2668 = vsel %vm2664, %v2619, %v1516
        %v2669 = vsel %vm2664, %v2620, %v1518
        %v2670 = vsel %vm2664, %v2621, %v1520
        %v2671 = vsel %vm2664, %v2622, %v1522
        %v2672 = vsel %vm2664, %v2623, %v1524
        %v2673 = vsel %vm2664, %v2624, %v1526
        %v2674 = vsel %vm2664, %v2625, %v1528
        %v2675 = vsel %vm2664, %v2626, %v1530
        %v2676 = vsel %vm2664, %v2627, %v1532
        %v2677 = vsel %vm2664, %v2628, %v1534
        %v2678 = vsel %vm2664, %v2629, %v1536
        %v2679 = vsel %vm2664, %v2630, %v1538
        %v2680 = vsel %vm2664, %v2631, %v1540
        %v2681 = vsel %vm2664, %v2632, %v1542
        %v2682 = vsel %vm2664, %v2633, %v1544
        %v2683 = vsel %vm2664, %v2634, %v1546
        %v2684 = vsel %vm2664, %v2635, %v1548
        %v2685 = vsel %vm2664, %v2636, %v1550
        %v2686 = vsel %vm2664, %v2637, %v1552
        %v2687 = vsel %vm2664, %v2638, %v1554
        %v2688 = vsel %vm2664, %v2639, %v1556
        %v2689 = vsel %vm2664, %v2640, %v1558
        %v2690 = vsel %vm2664, %v2641, %v1560
        %v2691 = vsel %vm2664, %v2642, %v1562
        %v2692 = vsel %vm2664, %v2643, %v1564
        %v2693 = vsel %vm2664, %v2644, %v1566
        %v2694 = vsel %vm2664, %v2645, %v1568
        %v2695 = vsel %vm2664, %v2646, %v1570
        %v2696 = vsel %vm2664, %v2647, %v1572
        %v2697 = vsel %vm2664, %v2648, %v1574
        %v2698 = vsel %vm2664, %v2649, %v1576
        %v2699 = vsel %vm2664, %v2650, %v1578
        %v2700 = vsel %vm2664, %v2651, %v1580
        %v2701 = vsel %vm2664, %v2652, %v1582
        %v2702 = vsel %vm2664, %v2653, %v1584
        %v2703 = vsel %vm2664, %v2654, %v1586
        %v2704 = vsel %vm2664, %v2655, %v1588
        %v2705 = vsel %vm2664, %v2656, %v1590
        %v2706 = vsel %vm2664, %v2657, %v1592
        %v2707 = vsel %vm2664, %v2658, %v1594
        %v2708 = vsel %vm2664, %v2659, %v1596
        %v2709 = vsel %vm2664, %v2660, %v1598
        %v2710 = vsel %vm2664, %v2661, %v1600
        %v2711 = vsel %vm2664, %v2662, %v1602
        %v2712 = vsel %vm2664, %v2663, %v1604
        %vm2713 = vcmask 121856
        %v2714 = vsel %vm2713, %v2665, %v1750
        %v2715 = vsel %vm2713, %v2666, %v1752
        %v2716 = vsel %vm2713, %v2667, %v1754
        %v2717 = vsel %vm2713, %v2668, %v1756
        %v2718 = vsel %vm2713, %v2669, %v1758
        %v2719 = vsel %vm2713, %v2670, %v1760
        %v2720 = vsel %vm2713, %v2671, %v1762
        %v2721 = vsel %vm2713, %v2672, %v1764
        %v2722 = vsel %vm2713, %v2673, %v1766
        %v2723 = vsel %vm2713, %v2674, %v1768
        %v2724 = vsel %vm2713, %v2675, %v1770
        %v2725 = vsel %vm2713, %v2676, %v1772
        %v2726 = vsel %vm2713, %v2677, %v1774
        %v2727 = vsel %vm2713, %v2678, %v1776
        %v2728 = vsel %vm2713, %v2679, %v1778
        %v2729 = vsel %vm2713, %v2680, %v1780
        %v2730 = vsel %vm2713, %v2681, %v1782
        %v2731 = vsel %vm2713, %v2682, %v1784
        %v2732 = vsel %vm2713, %v2683, %v1786
        %v2733 = vsel %vm2713, %v2684, %v1788
        %v2734 = vsel %vm2713, %v2685, %v1790
        %v2735 = vsel %vm2713, %v2686, %v1792
        %v2736 = vsel %vm2713, %v2687, %v1794
        %v2737 = vsel %vm2713, %v2688, %v1796
        %v2738 = vsel %vm2713, %v2689, %v1798
        %v2739 = vsel %vm2713, %v2690, %v1800
        %v2740 = vsel %vm2713, %v2691, %v1802
        %v2741 = vsel %vm2713, %v2692, %v1804
        %v2742 = vsel %vm2713, %v2693, %v1806
        %v2743 = vsel %vm2713, %v2694, %v1808
        %v2744 = vsel %vm2713, %v2695, %v1810
        %v2745 = vsel %vm2713, %v2696, %v1812
        %v2746 = vsel %vm2713, %v2697, %v1814
        %v2747 = vsel %vm2713, %v2698, %v1816
        %v2748 = vsel %vm2713, %v2699, %v1818
        %v2749 = vsel %vm2713, %v2700, %v1820
        %v2750 = vsel %vm2713, %v2701, %v1822
        %v2751 = vsel %vm2713, %v2702, %v1824
        %v2752 = vsel %vm2713, %v2703, %v1826
        %v2753 = vsel %vm2713, %v2704, %v1828
        %v2754 = vsel %vm2713, %v2705, %v1830
        %v2755 = vsel %vm2713, %v2706, %v1832
        %v2756 = vsel %vm2713, %v2707, %v1834
        %v2757 = vsel %vm2713, %v2708, %v1836
        %v2758 = vsel %vm2713, %v2709, %v1838
        %v2759 = vsel %vm2713, %v2710, %v1840
        %v2760 = vsel %vm2713, %v2711, %v1842
        %v2761 = vsel %vm2713, %v2712, %v1844
        %vm2762 = vcmask 146432
        %v2763 = vsel %vm2762, %v2714, %v1942
        %v2764 = vsel %vm2762, %v2715, %v1944
        %v2765 = vsel %vm2762, %v2716, %v1946
        %v2766 = vsel %vm2762, %v2717, %v1948
        %v2767 = vsel %vm2762, %v2718, %v1950
        %v2768 = vsel %vm2762, %v2719, %v1952
        %v2769 = vsel %vm2762, %v2720, %v1954
        %v2770 = vsel %vm2762, %v2721, %v1956
        %v2771 = vsel %vm2762, %v2722, %v1958
        %v2772 = vsel %vm2762, %v2723, %v1960
        %v2773 = vsel %vm2762, %v2724, %v1962
        %v2774 = vsel %vm2762, %v2725, %v1964
        %v2775 = vsel %vm2762, %v2726, %v1966
        %v2776 = vsel %vm2762, %v2727, %v1968
        %v2777 = vsel %vm2762, %v2728, %v1970
        %v2778 = vsel %vm2762, %v2729, %v1972
        %v2779 = vsel %vm2762, %v2730, %v1974
        %v2780 = vsel %vm2762, %v2731, %v1976
        %v2781 = vsel %vm2762, %v2732, %v1978
        %v2782 = vsel %vm2762, %v2733, %v1980
        %v2783 = vsel %vm2762, %v2734, %v1982
        %v2784 = vsel %vm2762, %v2735, %v1984
        %v2785 = vsel %vm2762, %v2736, %v1986
        %v2786 = vsel %vm2762, %v2737, %v1988
        %v2787 = vsel %vm2762, %v2738, %v1990
        %v2788 = vsel %vm2762, %v2739, %v1992
        %v2789 = vsel %vm2762, %v2740, %v1994
        %v2790 = vsel %vm2762, %v2741, %v1996
        %v2791 = vsel %vm2762, %v2742, %v1998
        %v2792 = vsel %vm2762, %v2743, %v2000
        %v2793 = vsel %vm2762, %v2744, %v2002
        %v2794 = vsel %vm2762, %v2745, %v2004
        %v2795 = vsel %vm2762, %v2746, %v2006
        %v2796 = vsel %vm2762, %v2747, %v2008
        %v2797 = vsel %vm2762, %v2748, %v2010
        %v2798 = vsel %vm2762, %v2749, %v2012
        %v2799 = vsel %vm2762, %v2750, %v2014
        %v2800 = vsel %vm2762, %v2751, %v2016
        %v2801 = vsel %vm2762, %v2752, %v2018
        %v2802 = vsel %vm2762, %v2753, %v2020
        %v2803 = vsel %vm2762, %v2754, %v2022
        %v2804 = vsel %vm2762, %v2755, %v2024
        %v2805 = vsel %vm2762, %v2756, %v2026
        %v2806 = vsel %vm2762, %v2757, %v2028
        %v2807 = vsel %vm2762, %v2758, %v2030
        %v2808 = vsel %vm2762, %v2759, %v2032
        %v2809 = vsel %vm2762, %v2760, %v2034
        %v2810 = vsel %vm2762, %v2761, %v2036
        %vm2811 = vcmask 171008
        %v2812 = vsel %vm2811, %v2763, %v2134
        %v2813 = vsel %vm2811, %v2764, %v2136
        %v2814 = vsel %vm2811, %v2765, %v2138
        %v2815 = vsel %vm2811, %v2766, %v2140
        %v2816 = vsel %vm2811, %v2767, %v2142
        %v2817 = vsel %vm2811, %v2768, %v2144
        %v2818 = vsel %vm2811, %v2769, %v2146
        %v2819 = vsel %vm2811, %v2770, %v2148
        %v2820 = vsel %vm2811, %v2771, %v2150
        %v2821 = vsel %vm2811, %v2772, %v2152
        %v2822 = vsel %vm2811, %v2773, %v2154
        %v2823 = vsel %vm2811, %v2774, %v2156
        %v2824 = vsel %vm2811, %v2775, %v2158
        %v2825 = vsel %vm2811, %v2776, %v2160
        %v2826 = vsel %vm2811, %v2777, %v2162
        %v2827 = vsel %vm2811, %v2778, %v2164
        %v2828 = vsel %vm2811, %v2779, %v2166
        %v2829 = vsel %vm2811, %v2780, %v2168
        %v2830 = vsel %vm2811, %v2781, %v2170
        %v2831 = vsel %vm2811, %v2782, %v2172
        %v2832 = vsel %vm2811, %v2783, %v2174
        %v2833 = vsel %vm2811, %v2784, %v2176
        %v2834 = vsel %vm2811, %v2785, %v2178
        %v2835 = vsel %vm2811, %v2786, %v2180
        %v2836 = vsel %vm2811, %v2787, %v2182
        %v2837 = vsel %vm2811, %v2788, %v2184
        %v2838 = vsel %vm2811, %v2789, %v2186
        %v2839 = vsel %vm2811, %v2790, %v2188
        %v2840 = vsel %vm2811, %v2791, %v2190
        %v2841 = vsel %vm2811, %v2792, %v2192
        %v2842 = vsel %vm2811, %v2793, %v2194
        %v2843 = vsel %vm2811, %v2794, %v2196
        %v2844 = vsel %vm2811, %v2795, %v2198
        %v2845 = vsel %vm2811, %v2796, %v2200
        %v2846 = vsel %vm2811, %v2797, %v2202
        %v2847 = vsel %vm2811, %v2798, %v2204
        %v2848 = vsel %vm2811, %v2799, %v2206
        %v2849 = vsel %vm2811, %v2800, %v2208
        %v2850 = vsel %vm2811, %v2801, %v2210
        %v2851 = vsel %vm2811, %v2802, %v2212
        %v2852 = vsel %vm2811, %v2803, %v2214
        %v2853 = vsel %vm2811, %v2804, %v2216
        %v2854 = vsel %vm2811, %v2805, %v2218
        %v2855 = vsel %vm2811, %v2806, %v2220
        %v2856 = vsel %vm2811, %v2807, %v2222
        %v2857 = vsel %vm2811, %v2808, %v2224
        %v2858 = vsel %vm2811, %v2809, %v2226
        %v2859 = vsel %vm2811, %v2810, %v2228
        %vm2860 = vcmask 195584
        %v2861 = vsel %vm2860, %v2812, %v2374
        %v2862 = vsel %vm2860, %v2813, %v2376
        %v2863 = vsel %vm2860, %v2814, %v2378
        %v2864 = vsel %vm2860, %v2815, %v2380
        %v2865 = vsel %vm2860, %v2816, %v2382
        %v2866 = vsel %vm2860, %v2817, %v2384
        %v2867 = vsel %vm2860, %v2818, %v2386
        %v2868 = vsel %vm2860, %v2819, %v2388
        %v2869 = vsel %vm2860, %v2820, %v2390
        %v2870 = vsel %vm2860, %v2821, %v2392
        %v2871 = vsel %vm2860, %v2822, %v2394
        %v2872 = vsel %vm2860, %v2823, %v2396
        %v2873 = vsel %vm2860, %v2824, %v2398
        %v2874 = vsel %vm2860, %v2825, %v2400
        %v2875 = vsel %vm2860, %v2826, %v2402
        %v2876 = vsel %vm2860, %v2827, %v2404
        %v2877 = vsel %vm2860, %v2828, %v2406
        %v2878 = vsel %vm2860, %v2829, %v2408
        %v2879 = vsel %vm2860, %v2830, %v2410
        %v2880 = vsel %vm2860, %v2831, %v2412
        %v2881 = vsel %vm2860, %v2832, %v2414
        %v2882 = vsel %vm2860, %v2833, %v2416
        %v2883 = vsel %vm2860, %v2834, %v2418
        %v2884 = vsel %vm2860, %v2835, %v2420
        %v2885 = vsel %vm2860, %v2836, %v2422
        %v2886 = vsel %vm2860, %v2837, %v2424
        %v2887 = vsel %vm2860, %v2838, %v2426
        %v2888 = vsel %vm2860, %v2839, %v2428
        %v2889 = vsel %vm2860, %v2840, %v2430
        %v2890 = vsel %vm2860, %v2841, %v2432
        %v2891 = vsel %vm2860, %v2842, %v2434
        %v2892 = vsel %vm2860, %v2843, %v2436
        %v2893 = vsel %vm2860, %v2844, %v2438
        %v2894 = vsel %vm2860, %v2845, %v2440
        %v2895 = vsel %vm2860, %v2846, %v2442
        %v2896 = vsel %vm2860, %v2847, %v2444
        %v2897 = vsel %vm2860, %v2848, %v2446
        %v2898 = vsel %vm2860, %v2849, %v2448
        %v2899 = vsel %vm2860, %v2850, %v2450
        %v2900 = vsel %vm2860, %v2851, %v2452
        %v2901 = vsel %vm2860, %v2852, %v2454
        %v2902 = vsel %vm2860, %v2853, %v2456
        %v2903 = vsel %vm2860, %v2854, %v2458
        %v2904 = vsel %vm2860, %v2855, %v2460
        %v2905 = vsel %vm2860, %v2856, %v2462
        %v2906 = vsel %vm2860, %v2857, %v2464
        %v2907 = vsel %vm2860, %v2858, %v2466
        %v2908 = vsel %vm2860, %v2859, %v2468
        %vm2957 = vcmask 1040384
        %v2958 = vrot.slane %v2861, 7
        %v2959 = vrot.slane %v2862, 7
        %v2960 = vsel %vm2957, %v2958, %v2959
        %v2961 = vrot.slane %v2863, 7
        %v2962 = vsel %vm2957, %v2959, %v2961
        %v2963 = vrot.slane %v2864, 7
        %v2964 = vrot.slane %v2865, 7
        %v2965 = vsel %vm2957, %v2963, %v2964
        %v2966 = vrot.slane %v2866, 7
        %v2967 = vsel %vm2957, %v2964, %v2966
        %v2968 = vrot.slane %v2867, 7
        %v2969 = vrot.slane %v2868, 7
        %v2970 = vsel %vm2957, %v2968, %v2969
        %v2971 = vrot.slane %v2869, 7
        %v2972 = vsel %vm2957, %v2969, %v2971
        %v2973 = vrot.slane %v2870, 7
        %v2974 = vrot.slane %v2871, 7
        %v2975 = vsel %vm2957, %v2973, %v2974
        %v2976 = vrot.slane %v2872, 7
        %v2977 = vsel %vm2957, %v2974, %v2976
        %v2978 = vrot.slane %v2873, 7
        %v2979 = vrot.slane %v2874, 7
        %v2980 = vsel %vm2957, %v2978, %v2979
        %v2981 = vrot.slane %v2875, 7
        %v2982 = vsel %vm2957, %v2979, %v2981
        %v2983 = vrot.slane %v2876, 7
        %v2984 = vrot.slane %v2877, 7
        %v2985 = vsel %vm2957, %v2983, %v2984
        %v2986 = vrot.slane %v2878, 7
        %v2987 = vsel %vm2957, %v2984, %v2986
        %v2988 = vrot.slane %v2879, 7
        %v2989 = vrot.slane %v2880, 7
        %v2990 = vsel %vm2957, %v2988, %v2989
        %v2991 = vrot.slane %v2881, 7
        %v2992 = vsel %vm2957, %v2989, %v2991
        %v2993 = vrot.slane %v2882, 7
        %v2994 = vrot.slane %v2883, 7
        %v2995 = vsel %vm2957, %v2993, %v2994
        %v2996 = vrot.slane %v2884, 7
        %v2997 = vsel %vm2957, %v2994, %v2996
        %v2998 = vrot.slane %v2885, 7
        %v2999 = vrot.slane %v2886, 7
        %v3000 = vsel %vm2957, %v2998, %v2999
        %v3001 = vrot.slane %v2887, 7
        %v3002 = vsel %vm2957, %v2999, %v3001
        %v3003 = vrot.slane %v2888, 7
        %v3004 = vrot.slane %v2889, 7
        %v3005 = vsel %vm2957, %v3003, %v3004
        %v3006 = vrot.slane %v2890, 7
        %v3007 = vsel %vm2957, %v3004, %v3006
        %v3008 = vrot.slane %v2891, 7
        %v3009 = vrot.slane %v2892, 7
        %v3010 = vsel %vm2957, %v3008, %v3009
        %v3011 = vrot.slane %v2893, 7
        %v3012 = vsel %vm2957, %v3009, %v3011
        %v3013 = vrot.slane %v2894, 7
        %v3014 = vrot.slane %v2895, 7
        %v3015 = vsel %vm2957, %v3013, %v3014
        %v3016 = vrot.slane %v2896, 7
        %v3017 = vsel %vm2957, %v3014, %v3016
        %v3018 = vrot.slane %v2897, 7
        %v3019 = vrot.slane %v2898, 7
        %v3020 = vsel %vm2957, %v3018, %v3019
        %v3021 = vrot.slane %v2899, 7
        %v3022 = vsel %vm2957, %v3019, %v3021
        %v3023 = vrot.slane %v2900, 7
        %v3024 = vrot.slane %v2901, 7
        %v3025 = vsel %vm2957, %v3023, %v3024
        %v3026 = vrot.slane %v2902, 7
        %v3027 = vsel %vm2957, %v3024, %v3026
        %v3028 = vrot.slane %v2903, 7
        %v3029 = vrot.slane %v2904, 7
        %v3030 = vsel %vm2957, %v3028, %v3029
        %v3031 = vrot.slane %v2905, 7
        %v3032 = vsel %vm2957, %v3029, %v3031
        %v3033 = vrot.slane %v2906, 7
        %v3034 = vrot.slane %v2907, 7
        %v3035 = vsel %vm2957, %v3033, %v3034
        %v3036 = vrot.slane %v2908, 7
        %v3037 = vsel %vm2957, %v3034, %v3036
        %v3070 = vpack.c.bf16 %v2962, %v2960
        %v3071 = vpack.c.bf16 %v2967, %v2965
        %v3072 = vpack.c.bf16 %v2972, %v2970
        %v3073 = vpack.c.bf16 %v2977, %v2975
        %v3074 = vpack.c.bf16 %v2982, %v2980
        %v3075 = vpack.c.bf16 %v2987, %v2985
        %v3076 = vpack.c.bf16 %v2992, %v2990
        %v3077 = vpack.c.bf16 %v2997, %v2995
        %v3078 = vpack.c.bf16 %v3002, %v3000
        %v3079 = vpack.c.bf16 %v3007, %v3005
        %v3080 = vpack.c.bf16 %v3012, %v3010
        %v3081 = vpack.c.bf16 %v3017, %v3015
        %v3082 = vpack.c.bf16 %v3022, %v3020
        %v3083 = vpack.c.bf16 %v3027, %v3025
        %v3084 = vpack.c.bf16 %v3032, %v3030
        %v3085 = vpack.c.bf16 %v3037, %v3035
        %v3086 = vld [vmem:[%s1] sm:$0xf]
        %v3087 = vld [vmem:[%s1 + $0x4] sm:$0xf]
        %v3088 = vld [vmem:[%s1 + $0x8] sm:$0xf]
        %v3089 = vld [vmem:[%s1 + $0xc] sm:$0x3]
        %v3090 = vld [vmem:[%s2] sm:$0x1]
        %v3092 = vlaneseq
        %v3093 = vshrl.u32 %v3092, 7
        %v3094 = vsub.s32 0, %v3093
        %v3095 = vrot.slane %v3090, %v3094
        %v3101 = vunpack.c.l.b16 %v3086
        %v3102 = vunpack.c.l.b16 %v3087
        %v3103 = vunpack.c.l.b16 %v3088
        %v3104 = vunpack.c.l.b16 %v3089
        %v3105 = vpack.c.b16 %v3102, %v3101
        %v3106 = vpack.c.b16 %v3104, %v3103
        %vm3108 = vcmask 220160
        %v3110 = vsel %vm3108, %v3070, 0
        %v3113 = vsel %vm3108, %v3071, 0
        %v3116 = vsel %vm3108, %v3072, 0
        %v3119 = vsel %vm3108, %v3073, 0
        %v3122 = vsel %vm3108, %v3074, 0
        %v3125 = vsel %vm3108, %v3075, 0
        %v3128 = vsel %vm3108, %v3076, 0
        %v3131 = vsel %vm3108, %v3077, 0
        %v3134 = vsel %vm3108, %v3078, 0
        %v3137 = vsel %vm3108, %v3079, 0
        %v3140 = vsel %vm3108, %v3080, 0
        %v3143 = vsel %vm3108, %v3081, 0
        %v3146 = vsel %vm3108, %v3082, 0
        %v3149 = vsel %vm3108, %v3083, 0
        %v3152 = vsel %vm3108, %v3084, 0
        %v3155 = vsel %vm3108, %v3085, 0
        %vm3157 = vcmask 1044480
        %v3158 = vsel %vm3157, 4294967295, 65535
        %v3159 = vsel %vm1044, %v3158, 0
        %v3161 = vand.u32 %v3106, %v3159
        %3163 = vmatprep.subr.bf16.mxu0 0
        %3164 = vmatpush1.bf16.msra.mxu0 0
        %3165 = vmatprep.subr.bf16.mxu0 0
        %3166 = vmatpush1.bf16.msra.mxu0 0
        %3167 = vmatprep.subr.bf16.mxu0 0
        %3168 = vmatpush1.bf16.msra.mxu0 0
        %3169 = vmatprep.subr.bf16.mxu0 0
        %3170 = vmatpush1.bf16.msra.mxu0 0
        %3171 = vmatprep.subr.bf16.mxu0 0
        %3172 = vmatpush1.bf16.msra.mxu0 0
        %3173 = vmatprep.subr.bf16.mxu0 0
        %3174 = vmatpush1.bf16.msra.mxu0 0
        %3175 = vmatprep.subr.bf16.mxu0 0
        %3176 = vmatpush1.bf16.msra.mxu0 %v3161
        %3177 = vmatprep.subr.bf16.mxu0 0
        %3178 = vmatpush1.bf16.msra.mxu0 %v3105
        %3179 = vmatprep.subr.bf16.mxu0 0
        %3180 = vmatpush2.bf16.msra.mxu0 0
        %3181 = vmatprep.subr.bf16.mxu0 0
        %3182 = vmatpush2.bf16.msra.mxu0 0
        %3183 = vmatprep.subr.bf16.mxu0 0
        %3184 = vmatpush2.bf16.msra.mxu0 0
        %3185 = vmatprep.subr.bf16.mxu0 0
        %3186 = vmatpush2.bf16.msra.mxu0 0
        %3187 = vmatprep.subr.bf16.mxu0 0
        %3188 = vmatpush2.bf16.msra.mxu0 0
        %3189 = vmatprep.subr.bf16.mxu0 0
        %3190 = vmatpush2.bf16.msra.mxu0 0
        %3191 = vmatprep.subr.bf16.mxu0 0
        %3192 = vmatpush2.bf16.msra.mxu0 0
        %3193 = vmatprep.subr.bf16.mxu0 0
        %3194 = vmatpush2.bf16.msra.mxu0 0
        %3195 = vmatprep.mubr.bf16.mxu0 0
        %3196 = vmatmul.mubr.bf16.gmra.mxu0 %v3110
        %v3197 = vpop.f32.mrf.mxu0
        %v3198 = vadd.f32 %v3095, %v3197
        %v3199 = vpop.f32.mrf.mxu0
        %v3200 = vpop.f32.mrf.mxu0
        %v3201 = vadd.f32 %v3095, %v3200
        %v3202 = vpop.f32.mrf.mxu0
        %3203 = vmatprep.mubr.bf16.mxu0 0
        %3204 = vmatmul.mubr.bf16.gmra.mxu0 %v3113
        %v3205 = vpop.f32.mrf.mxu0
        %v3206 = vadd.f32 %v3095, %v3205
        %v3207 = vpop.f32.mrf.mxu0
        %v3208 = vpop.f32.mrf.mxu0
        %v3209 = vadd.f32 %v3095, %v3208
        %v3210 = vpop.f32.mrf.mxu0
        %3211 = vmatprep.mubr.bf16.mxu0 0
        %3212 = vmatmul.mubr.bf16.gmra.mxu0 %v3116
        %v3213 = vpop.f32.mrf.mxu0
        %v3214 = vadd.f32 %v3095, %v3213
        %v3215 = vpop.f32.mrf.mxu0
        %v3216 = vpop.f32.mrf.mxu0
        %v3217 = vadd.f32 %v3095, %v3216
        %v3218 = vpop.f32.mrf.mxu0
        %3219 = vmatprep.mubr.bf16.mxu0 0
        %3220 = vmatmul.mubr.bf16.gmra.mxu0 %v3119
        %v3221 = vpop.f32.mrf.mxu0
        %v3222 = vadd.f32 %v3095, %v3221
        %v3223 = vpop.f32.mrf.mxu0
        %v3224 = vpop.f32.mrf.mxu0
        %v3225 = vadd.f32 %v3095, %v3224
        %v3226 = vpop.f32.mrf.mxu0
        %3227 = vmatprep.mubr.bf16.mxu0 0
        %3228 = vmatmul.mubr.bf16.gmra.mxu0 %v3122
        %v3229 = vpop.f32.mrf.mxu0
        %v3230 = vadd.f32 %v3095, %v3229
        %v3231 = vpop.f32.mrf.mxu0
        %v3232 = vpop.f32.mrf.mxu0
        %v3233 = vadd.f32 %v3095, %v3232
        %v3234 = vpop.f32.mrf.mxu0
        %3235 = vmatprep.mubr.bf16.mxu0 0
        %3236 = vmatmul.mubr.bf16.gmra.mxu0 %v3125
        %v3237 = vpop.f32.mrf.mxu0
        %v3238 = vadd.f32 %v3095, %v3237
        %v3239 = vpop.f32.mrf.mxu0
        %v3240 = vpop.f32.mrf.mxu0
        %v3241 = vadd.f32 %v3095, %v3240
        %v3242 = vpop.f32.mrf.mxu0
        %3243 = vmatprep.mubr.bf16.mxu0 0
        %3244 = vmatmul.mubr.bf16.gmra.mxu0 %v3128
        %v3245 = vpop.f32.mrf.mxu0
        %v3246 = vadd.f32 %v3095, %v3245
        %v3247 = vpop.f32.mrf.mxu0
        %v3248 = vpop.f32.mrf.mxu0
        %v3249 = vadd.f32 %v3095, %v3248
        %v3250 = vpop.f32.mrf.mxu0
        %3251 = vmatprep.mubr.bf16.mxu0 0
        %3252 = vmatmul.mubr.bf16.gmra.mxu0 %v3131
        %v3253 = vpop.f32.mrf.mxu0
        %v3254 = vadd.f32 %v3095, %v3253
        %v3255 = vpop.f32.mrf.mxu0
        %v3256 = vpop.f32.mrf.mxu0
        %v3257 = vadd.f32 %v3095, %v3256
        %v3258 = vpop.f32.mrf.mxu0
        %3259 = vmatprep.mubr.bf16.mxu0 0
        %3260 = vmatmul.mubr.bf16.gmra.mxu0 %v3134
        %v3261 = vpop.f32.mrf.mxu0
        %v3262 = vadd.f32 %v3095, %v3261
        %v3263 = vpop.f32.mrf.mxu0
        %v3264 = vpop.f32.mrf.mxu0
        %v3265 = vadd.f32 %v3095, %v3264
        %v3266 = vpop.f32.mrf.mxu0
        %3267 = vmatprep.mubr.bf16.mxu0 0
        %3268 = vmatmul.mubr.bf16.gmra.mxu0 %v3137
        %v3269 = vpop.f32.mrf.mxu0
        %v3270 = vadd.f32 %v3095, %v3269
        %v3271 = vpop.f32.mrf.mxu0
        %v3272 = vpop.f32.mrf.mxu0
        %v3273 = vadd.f32 %v3095, %v3272
        %v3274 = vpop.f32.mrf.mxu0
        %3275 = vmatprep.mubr.bf16.mxu0 0
        %3276 = vmatmul.mubr.bf16.gmra.mxu0 %v3140
        %v3277 = vpop.f32.mrf.mxu0
        %v3278 = vadd.f32 %v3095, %v3277
        %v3279 = vpop.f32.mrf.mxu0
        %v3280 = vpop.f32.mrf.mxu0
        %v3281 = vadd.f32 %v3095, %v3280
        %v3282 = vpop.f32.mrf.mxu0
        %3283 = vmatprep.mubr.bf16.mxu0 0
        %3284 = vmatmul.mubr.bf16.gmra.mxu0 %v3143
        %v3285 = vpop.f32.mrf.mxu0
        %v3286 = vadd.f32 %v3095, %v3285
        %v3287 = vpop.f32.mrf.mxu0
        %v3288 = vpop.f32.mrf.mxu0
        %v3289 = vadd.f32 %v3095, %v3288
        %v3290 = vpop.f32.mrf.mxu0
        %3291 = vmatprep.mubr.bf16.mxu0 0
        %3292 = vmatmul.mubr.bf16.gmra.mxu0 %v3146
        %v3293 = vpop.f32.mrf.mxu0
        %v3294 = vadd.f32 %v3095, %v3293
        %v3295 = vpop.f32.mrf.mxu0
        %v3296 = vpop.f32.mrf.mxu0
        %v3297 = vadd.f32 %v3095, %v3296
        %v3298 = vpop.f32.mrf.mxu0
        %3299 = vmatprep.mubr.bf16.mxu0 0
        %3300 = vmatmul.mubr.bf16.gmra.mxu0 %v3149
        %v3301 = vpop.f32.mrf.mxu0
        %v3302 = vadd.f32 %v3095, %v3301
        %v3303 = vpop.f32.mrf.mxu0
        %v3304 = vpop.f32.mrf.mxu0
        %v3305 = vadd.f32 %v3095, %v3304
        %v3306 = vpop.f32.mrf.mxu0
        %3307 = vmatprep.mubr.bf16.mxu0 0
        %3308 = vmatmul.mubr.bf16.gmra.mxu0 %v3152
        %v3309 = vpop.f32.mrf.mxu0
        %v3310 = vadd.f32 %v3095, %v3309
        %v3311 = vpop.f32.mrf.mxu0
        %v3312 = vpop.f32.mrf.mxu0
        %v3313 = vadd.f32 %v3095, %v3312
        %v3314 = vpop.f32.mrf.mxu0
        %3315 = vmatprep.mubr.bf16.mxu0 0
        %3316 = vmatmul.mubr.bf16.gmra.mxu0 %v3155
        %v3317 = vpop.f32.mrf.mxu0
        %v3318 = vadd.f32 %v3095, %v3317
        %v3319 = vpop.f32.mrf.mxu0
        %v3320 = vpop.f32.mrf.mxu0
        %v3321 = vadd.f32 %v3095, %v3320
        %v3322 = vpop.f32.mrf.mxu0
        %3323 = vdwg.mxu0
        %v3324 = vmax.f32 %v3198, 0.0
        %v3325 = vmax.f32 %v3201, 0.0
        %v3326 = vmax.f32 %v3206, 0.0
        %v3327 = vmax.f32 %v3209, 0.0
        %v3328 = vmax.f32 %v3214, 0.0
        %v3329 = vmax.f32 %v3217, 0.0
        %v3330 = vmax.f32 %v3222, 0.0
        %v3331 = vmax.f32 %v3225, 0.0
        %v3332 = vmax.f32 %v3230, 0.0
        %v3333 = vmax.f32 %v3233, 0.0
        %v3334 = vmax.f32 %v3238, 0.0
        %v3335 = vmax.f32 %v3241, 0.0
        %v3336 = vmax.f32 %v3246, 0.0
        %v3337 = vmax.f32 %v3249, 0.0
        %v3338 = vmax.f32 %v3254, 0.0
        %v3339 = vmax.f32 %v3257, 0.0
        %v3340 = vmax.f32 %v3262, 0.0
        %v3341 = vmax.f32 %v3265, 0.0
        %v3342 = vmax.f32 %v3270, 0.0
        %v3343 = vmax.f32 %v3273, 0.0
        %v3344 = vmax.f32 %v3278, 0.0
        %v3345 = vmax.f32 %v3281, 0.0
        %v3346 = vmax.f32 %v3286, 0.0
        %v3347 = vmax.f32 %v3289, 0.0
        %v3348 = vmax.f32 %v3294, 0.0
        %v3349 = vmax.f32 %v3297, 0.0
        %v3350 = vmax.f32 %v3302, 0.0
        %v3351 = vmax.f32 %v3305, 0.0
        %v3352 = vmax.f32 %v3310, 0.0
        %v3353 = vmax.f32 %v3313, 0.0
        %v3354 = vmax.f32 %v3318, 0.0
        %v3355 = vmax.f32 %v3321, 0.0
        %v3356 = vpack.c.bf16 %v3325, %v3324
        %v3357 = vpack.c.bf16 %v3327, %v3326
        %v3358 = vpack.c.bf16 %v3329, %v3328
        %v3359 = vpack.c.bf16 %v3331, %v3330
        %v3360 = vpack.c.bf16 %v3333, %v3332
        %v3361 = vpack.c.bf16 %v3335, %v3334
        %v3362 = vpack.c.bf16 %v3337, %v3336
        %v3363 = vpack.c.bf16 %v3339, %v3338
        %v3364 = vpack.c.bf16 %v3341, %v3340
        %v3365 = vpack.c.bf16 %v3343, %v3342
        %v3366 = vpack.c.bf16 %v3345, %v3344
        %v3367 = vpack.c.bf16 %v3347, %v3346
        %v3368 = vpack.c.bf16 %v3349, %v3348
        %v3369 = vpack.c.bf16 %v3351, %v3350
        %v3370 = vpack.c.bf16 %v3353, %v3352
        %v3371 = vpack.c.bf16 %v3355, %v3354
        %v3388 = vunpack.c.l.b16 %v3356
        %v3389 = vunpack.c.h.b16 %v3356
        %v3390 = vunpack.c.l.b16 %v3357
        %v3391 = vunpack.c.h.b16 %v3357
        %v3392 = vunpack.c.l.b16 %v3358
        %v3393 = vunpack.c.h.b16 %v3358
        %v3394 = vunpack.c.l.b16 %v3359
        %v3395 = vunpack.c.h.b16 %v3359
        %v3396 = vunpack.c.l.b16 %v3360
        %v3397 = vunpack.c.h.b16 %v3360
        %v3398 = vunpack.c.l.b16 %v3361
        %v3399 = vunpack.c.h.b16 %v3361
        %v3400 = vunpack.c.l.b16 %v3362
        %v3401 = vunpack.c.h.b16 %v3362
        %v3402 = vunpack.c.l.b16 %v3363
        %v3403 = vunpack.c.h.b16 %v3363
        %v3404 = vunpack.c.l.b16 %v3364
        %v3405 = vunpack.c.h.b16 %v3364
        %v3406 = vunpack.c.l.b16 %v3365
        %v3407 = vunpack.c.h.b16 %v3365
        %v3408 = vunpack.c.l.b16 %v3366
        %v3409 = vunpack.c.h.b16 %v3366
        %v3410 = vunpack.c.l.b16 %v3367
        %v3411 = vunpack.c.h.b16 %v3367
        %v3412 = vunpack.c.l.b16 %v3368
        %v3413 = vunpack.c.h.b16 %v3368
        %v3414 = vunpack.c.l.b16 %v3369
        %v3415 = vunpack.c.h.b16 %v3369
        %v3416 = vunpack.c.l.b16 %v3370
        %v3417 = vunpack.c.h.b16 %v3370
        %v3418 = vunpack.c.l.b16 %v3371
        %v3419 = vunpack.c.h.b16 %v3371
        %v3420 = vpack.c.b16 %v3388, %v3388
        %v3421 = vpack.c.b16 %v3389, %v3389
        %v3422 = vpack.c.b16 %v3390, %v3390
        %v3423 = vpack.c.b16 %v3391, %v3391
        %v3424 = vpack.c.b16 %v3392, %v3392
        %v3425 = vpack.c.b16 %v3393, %v3393
        %v3426 = vpack.c.b16 %v3394, %v3394
        %v3427 = vpack.c.b16 %v3395, %v3395
        %v3428 = vpack.c.b16 %v3396, %v3396
        %v3429 = vpack.c.b16 %v3397, %v3397
        %v3430 = vpack.c.b16 %v3398, %v3398
        %v3431 = vpack.c.b16 %v3399, %v3399
        %v3432 = vpack.c.b16 %v3400, %v3400
        %v3433 = vpack.c.b16 %v3401, %v3401
        %v3434 = vpack.c.b16 %v3402, %v3402
        %v3435 = vpack.c.b16 %v3403, %v3403
        %v3436 = vpack.c.b16 %v3404, %v3404
        %v3437 = vpack.c.b16 %v3405, %v3405
        %v3438 = vpack.c.b16 %v3406, %v3406
        %v3439 = vpack.c.b16 %v3407, %v3407
        %v3440 = vpack.c.b16 %v3408, %v3408
        %v3441 = vpack.c.b16 %v3409, %v3409
        %v3442 = vpack.c.b16 %v3410, %v3410
        %v3443 = vpack.c.b16 %v3411, %v3411
        %v3444 = vpack.c.b16 %v3412, %v3412
        %v3445 = vpack.c.b16 %v3413, %v3413
        %v3446 = vpack.c.b16 %v3414, %v3414
        %v3447 = vpack.c.b16 %v3415, %v3415
        %v3448 = vpack.c.b16 %v3416, %v3416
        %v3449 = vpack.c.b16 %v3417, %v3417
        %v3450 = vpack.c.b16 %v3418, %v3418
        %v3451 = vpack.c.b16 %v3419, %v3419
        %3484 = vst.msk [vmem:[%s321 + $0x8] sm:$0xf] %vm311, %v3420
        %3485 = vst.msk [vmem:[%s321 + $0xc] sm:$0xf] %vm311, %v3421
        %3486 = vst.msk [vmem:[%s321 + $0x1c] sm:$0xf] %vm311, %v3422
        %3487 = vst.msk [vmem:[%s321 + $0x20] sm:$0xf] %vm311, %v3423
        %3488 = vst.msk [vmem:[%s321 + $0x30] sm:$0xf] %vm311, %v3424
        %3489 = vst.msk [vmem:[%s321 + $0x34] sm:$0xf] %vm311, %v3425
        %3490 = vst.msk [vmem:[%s321 + $0x44] sm:$0xf] %vm311, %v3426
        %3491 = vst.msk [vmem:[%s321 + $0x48] sm:$0xf] %vm311, %v3427
        %3492 = vst.msk [vmem:[%s321 + $0x58] sm:$0xf] %vm311, %v3428
        %3493 = vst.msk [vmem:[%s321 + $0x5c] sm:$0xf] %vm311, %v3429
        %3494 = vst.msk [vmem:[%s321 + $0x6c] sm:$0xf] %vm311, %v3430
        %3495 = vst.msk [vmem:[%s321 + $0x70] sm:$0xf] %vm311, %v3431
        %3496 = vst.msk [vmem:[%s321 + $0x80] sm:$0xf] %vm311, %v3432
        %3497 = vst.msk [vmem:[%s321 + $0x84] sm:$0xf] %vm311, %v3433
        %3498 = vst.msk [vmem:[%s321 + $0x94] sm:$0xf] %vm311, %v3434
        %3499 = vst.msk [vmem:[%s321 + $0x98] sm:$0xf] %vm311, %v3435
        %3500 = vst.msk [vmem:[%s321 + $0xa8] sm:$0xf] %vm311, %v3436
        %3501 = vst.msk [vmem:[%s321 + $0xac] sm:$0xf] %vm311, %v3437
        %3502 = vst.msk [vmem:[%s321 + $0xbc] sm:$0xf] %vm311, %v3438
        %3503 = vst.msk [vmem:[%s321 + $0xc0] sm:$0xf] %vm311, %v3439
        %3504 = vst.msk [vmem:[%s321 + $0xd0] sm:$0xf] %vm311, %v3440
        %3505 = vst.msk [vmem:[%s321 + $0xd4] sm:$0xf] %vm311, %v3441
        %3506 = vst.msk [vmem:[%s321 + $0xe4] sm:$0xf] %vm311, %v3442
        %3507 = vst.msk [vmem:[%s321 + $0xe8] sm:$0xf] %vm311, %v3443
        %3508 = vst.msk [vmem:[%s321 + $0xf8] sm:$0xf] %vm311, %v3444
        %3509 = vst.msk [vmem:[%s321 + $0xfc] sm:$0xf] %vm311, %v3445
        %3510 = vst.msk [vmem:[%s321 + $0x10c] sm:$0xf] %vm311, %v3446
        %3511 = vst.msk [vmem:[%s321 + $0x110] sm:$0xf] %vm311, %v3447
        %3512 = vst.msk [vmem:[%s321 + $0x120] sm:$0xf] %vm311, %v3448
        %3513 = vst.msk [vmem:[%s321 + $0x124] sm:$0xf] %vm311, %v3449
        %3514 = vst.msk [vmem:[%s321 + $0x134] sm:$0xf] %vm311, %v3450
        %3515 = vst.msk [vmem:[%s321 + $0x138] sm:$0xf] %vm311, %v3451
        %v3516 = vld [vmem:[#allocation3 + $0x4] sm:$0xf]
        %v3517 = vld [vmem:[#allocation3 + $0x8] sm:$0xf]
        %v3518 = vld [vmem:[#allocation3 + $0xc] sm:$0xf]
        %v3519 = vld [vmem:[#allocation3 + $0x10] sm:$0xf]
        %v3520 = vld [vmem:[#allocation3 + $0x18] sm:$0xf]
        %v3521 = vld [vmem:[#allocation3 + $0x1c] sm:$0xf]
        %v3522 = vld [vmem:[#allocation3 + $0x20] sm:$0xf]
        %v3523 = vld [vmem:[#allocation3 + $0x24] sm:$0xf]
        %v3524 = vld [vmem:[#allocation3 + $0x2c] sm:$0xf]
        %v3525 = vld [vmem:[#allocation3 + $0x30] sm:$0xf]
        %v3526 = vld [vmem:[#allocation3 + $0x34] sm:$0xf]
        %v3527 = vld [vmem:[#allocation3 + $0x38] sm:$0xf]
        %v3528 = vld [vmem:[#allocation3 + $0x40] sm:$0xf]
        %v3529 = vld [vmem:[#allocation3 + $0x44] sm:$0xf]
        %v3530 = vld [vmem:[#allocation3 + $0x48] sm:$0xf]
        %v3531 = vld [vmem:[#allocation3 + $0x4c] sm:$0xf]
        %v3532 = vld [vmem:[#allocation3 + $0x54] sm:$0xf]
        %v3533 = vld [vmem:[#allocation3 + $0x58] sm:$0xf]
        %v3534 = vld [vmem:[#allocation3 + $0x5c] sm:$0xf]
        %v3535 = vld [vmem:[#allocation3 + $0x60] sm:$0xf]
        %v3536 = vld [vmem:[#allocation3 + $0x68] sm:$0xf]
        %v3537 = vld [vmem:[#allocation3 + $0x6c] sm:$0xf]
        %v3538 = vld [vmem:[#allocation3 + $0x70] sm:$0xf]
        %v3539 = vld [vmem:[#allocation3 + $0x74] sm:$0xf]
        %v3540 = vld [vmem:[#allocation3 + $0x7c] sm:$0xf]
        %v3541 = vld [vmem:[#allocation3 + $0x80] sm:$0xf]
        %v3542 = vld [vmem:[#allocation3 + $0x84] sm:$0xf]
        %v3543 = vld [vmem:[#allocation3 + $0x88] sm:$0xf]
        %v3544 = vld [vmem:[#allocation3 + $0x90] sm:$0xf]
        %v3545 = vld [vmem:[#allocation3 + $0x94] sm:$0xf]
        %v3546 = vld [vmem:[#allocation3 + $0x98] sm:$0xf]
        %v3547 = vld [vmem:[#allocation3 + $0x9c] sm:$0xf]
        %v3548 = vld [vmem:[#allocation3 + $0xa4] sm:$0xf]
        %v3549 = vld [vmem:[#allocation3 + $0xa8] sm:$0xf]
        %v3550 = vld [vmem:[#allocation3 + $0xac] sm:$0xf]
        %v3551 = vld [vmem:[#allocation3 + $0xb0] sm:$0xf]
        %v3552 = vld [vmem:[#allocation3 + $0xb8] sm:$0xf]
        %v3553 = vld [vmem:[#allocation3 + $0xbc] sm:$0xf]
        %v3554 = vld [vmem:[#allocation3 + $0xc0] sm:$0xf]
        %v3555 = vld [vmem:[#allocation3 + $0xc4] sm:$0xf]
        %v3556 = vld [vmem:[#allocation3 + $0xcc] sm:$0xf]
        %v3557 = vld [vmem:[#allocation3 + $0xd0] sm:$0xf]
        %v3558 = vld [vmem:[#allocation3 + $0xd4] sm:$0xf]
        %v3559 = vld [vmem:[#allocation3 + $0xd8] sm:$0xf]
        %v3560 = vld [vmem:[#allocation3 + $0xe0] sm:$0xf]
        %v3561 = vld [vmem:[#allocation3 + $0xe4] sm:$0xf]
        %v3562 = vld [vmem:[#allocation3 + $0xe8] sm:$0xf]
        %v3563 = vld [vmem:[#allocation3 + $0xec] sm:$0xf]
        %v3564 = vld [vmem:[#allocation3 + $0xf4] sm:$0xf]
        %v3565 = vld [vmem:[#allocation3 + $0xf8] sm:$0xf]
        %v3566 = vld [vmem:[#allocation3 + $0xfc] sm:$0xf]
        %v3567 = vld [vmem:[#allocation3 + $0x100] sm:$0xf]
        %v3568 = vld [vmem:[#allocation3 + $0x108] sm:$0xf]
        %v3569 = vld [vmem:[#allocation3 + $0x10c] sm:$0xf]
        %v3570 = vld [vmem:[#allocation3 + $0x110] sm:$0xf]
        %v3571 = vld [vmem:[#allocation3 + $0x114] sm:$0xf]
        %v3572 = vld [vmem:[#allocation3 + $0x11c] sm:$0xf]
        %v3573 = vld [vmem:[#allocation3 + $0x120] sm:$0xf]
        %v3574 = vld [vmem:[#allocation3 + $0x124] sm:$0xf]
        %v3575 = vld [vmem:[#allocation3 + $0x128] sm:$0xf]
        %v3576 = vld [vmem:[#allocation3 + $0x130] sm:$0xf]
        %v3577 = vld [vmem:[#allocation3 + $0x134] sm:$0xf]
        %v3578 = vld [vmem:[#allocation3 + $0x138] sm:$0xf]
        %v3579 = vld [vmem:[#allocation3 + $0x13c] sm:$0xf]
        %v3580 = vunpack.c.l.bf16 %v3516
        %v3581 = vunpack.c.l.bf16 %v3517
        %v3582 = vunpack.c.l.bf16 %v3518
        %v3583 = vunpack.c.l.bf16 %v3519
        %v3584 = vunpack.c.l.bf16 %v3520
        %v3585 = vunpack.c.l.bf16 %v3521
        %v3586 = vunpack.c.l.bf16 %v3522
        %v3587 = vunpack.c.l.bf16 %v3523
        %v3588 = vunpack.c.l.bf16 %v3524
        %v3589 = vunpack.c.l.bf16 %v3525
        %v3590 = vunpack.c.l.bf16 %v3526
        %v3591 = vunpack.c.l.bf16 %v3527
        %v3592 = vunpack.c.l.bf16 %v3528
        %v3593 = vunpack.c.l.bf16 %v3529
        %v3594 = vunpack.c.l.bf16 %v3530
        %v3595 = vunpack.c.l.bf16 %v3531
        %v3596 = vunpack.c.l.bf16 %v3532
        %v3597 = vunpack.c.l.bf16 %v3533
        %v3598 = vunpack.c.l.bf16 %v3534
        %v3599 = vunpack.c.l.bf16 %v3535
        %v3600 = vunpack.c.l.bf16 %v3536
        %v3601 = vunpack.c.l.bf16 %v3537
        %v3602 = vunpack.c.l.bf16 %v3538
        %v3603 = vunpack.c.l.bf16 %v3539
        %v3604 = vunpack.c.l.bf16 %v3540
        %v3605 = vunpack.c.l.bf16 %v3541
        %v3606 = vunpack.c.l.bf16 %v3542
        %v3607 = vunpack.c.l.bf16 %v3543
        %v3608 = vunpack.c.l.bf16 %v3544
        %v3609 = vunpack.c.l.bf16 %v3545
        %v3610 = vunpack.c.l.bf16 %v3546
        %v3611 = vunpack.c.l.bf16 %v3547
        %v3612 = vunpack.c.l.bf16 %v3548
        %v3613 = vunpack.c.l.bf16 %v3549
        %v3614 = vunpack.c.l.bf16 %v3550
        %v3615 = vunpack.c.l.bf16 %v3551
        %v3616 = vunpack.c.l.bf16 %v3552
        %v3617 = vunpack.c.l.bf16 %v3553
        %v3618 = vunpack.c.l.bf16 %v3554
        %v3619 = vunpack.c.l.bf16 %v3555
        %v3620 = vunpack.c.l.bf16 %v3556
        %v3621 = vunpack.c.l.bf16 %v3557
        %v3622 = vunpack.c.l.bf16 %v3558
        %v3623 = vunpack.c.l.bf16 %v3559
        %v3624 = vunpack.c.l.bf16 %v3560
        %v3625 = vunpack.c.l.bf16 %v3561
        %v3626 = vunpack.c.l.bf16 %v3562
        %v3627 = vunpack.c.l.bf16 %v3563
        %v3628 = vunpack.c.l.bf16 %v3564
        %v3629 = vunpack.c.l.bf16 %v3565
        %v3630 = vunpack.c.l.bf16 %v3566
        %v3631 = vunpack.c.l.bf16 %v3567
        %v3632 = vunpack.c.l.bf16 %v3568
        %v3633 = vunpack.c.l.bf16 %v3569
        %v3634 = vunpack.c.l.bf16 %v3570
        %v3635 = vunpack.c.l.bf16 %v3571
        %v3636 = vunpack.c.l.bf16 %v3572
        %v3637 = vunpack.c.l.bf16 %v3573
        %v3638 = vunpack.c.l.bf16 %v3574
        %v3639 = vunpack.c.l.bf16 %v3575
        %v3640 = vunpack.c.l.bf16 %v3576
        %v3641 = vunpack.c.l.bf16 %v3577
        %v3642 = vunpack.c.l.bf16 %v3578
        %v3643 = vunpack.c.l.bf16 %v3579
        %v3644 = vld [vmem:[%s321 + $0x4] sm:$0xf]
        %v3645 = vld [vmem:[%s321 + $0x8] sm:$0xf]
        %v3646 = vld [vmem:[%s321 + $0xc] sm:$0xf]
        %v3647 = vld [vmem:[%s321 + $0x10] sm:$0xf]
        %v3648 = vld [vmem:[%s321 + $0x18] sm:$0xf]
        %v3649 = vld [vmem:[%s321 + $0x1c] sm:$0xf]
        %v3650 = vld [vmem:[%s321 + $0x20] sm:$0xf]
        %v3651 = vld [vmem:[%s321 + $0x24] sm:$0xf]
        %v3652 = vld [vmem:[%s321 + $0x2c] sm:$0xf]
        %v3653 = vld [vmem:[%s321 + $0x30] sm:$0xf]
        %v3654 = vld [vmem:[%s321 + $0x34] sm:$0xf]
        %v3655 = vld [vmem:[%s321 + $0x38] sm:$0xf]
        %v3656 = vld [vmem:[%s321 + $0x40] sm:$0xf]
        %v3657 = vld [vmem:[%s321 + $0x44] sm:$0xf]
        %v3658 = vld [vmem:[%s321 + $0x48] sm:$0xf]
        %v3659 = vld [vmem:[%s321 + $0x4c] sm:$0xf]
        %v3660 = vld [vmem:[%s321 + $0x54] sm:$0xf]
        %v3661 = vld [vmem:[%s321 + $0x58] sm:$0xf]
        %v3662 = vld [vmem:[%s321 + $0x5c] sm:$0xf]
        %v3663 = vld [vmem:[%s321 + $0x60] sm:$0xf]
        %v3664 = vld [vmem:[%s321 + $0x68] sm:$0xf]
        %v3665 = vld [vmem:[%s321 + $0x6c] sm:$0xf]
        %v3666 = vld [vmem:[%s321 + $0x70] sm:$0xf]
        %v3667 = vld [vmem:[%s321 + $0x74] sm:$0xf]
        %v3668 = vld [vmem:[%s321 + $0x7c] sm:$0xf]
        %v3669 = vld [vmem:[%s321 + $0x80] sm:$0xf]
        %v3670 = vld [vmem:[%s321 + $0x84] sm:$0xf]
        %v3671 = vld [vmem:[%s321 + $0x88] sm:$0xf]
        %v3672 = vld [vmem:[%s321 + $0x90] sm:$0xf]
        %v3673 = vld [vmem:[%s321 + $0x94] sm:$0xf]
        %v3674 = vld [vmem:[%s321 + $0x98] sm:$0xf]
        %v3675 = vld [vmem:[%s321 + $0x9c] sm:$0xf]
        %v3676 = vld [vmem:[%s321 + $0xa4] sm:$0xf]
        %v3677 = vld [vmem:[%s321 + $0xa8] sm:$0xf]
        %v3678 = vld [vmem:[%s321 + $0xac] sm:$0xf]
        %v3679 = vld [vmem:[%s321 + $0xb0] sm:$0xf]
        %v3680 = vld [vmem:[%s321 + $0xb8] sm:$0xf]
        %v3681 = vld [vmem:[%s321 + $0xbc] sm:$0xf]
        %v3682 = vld [vmem:[%s321 + $0xc0] sm:$0xf]
        %v3683 = vld [vmem:[%s321 + $0xc4] sm:$0xf]
        %v3684 = vld [vmem:[%s321 + $0xcc] sm:$0xf]
        %v3685 = vld [vmem:[%s321 + $0xd0] sm:$0xf]
        %v3686 = vld [vmem:[%s321 + $0xd4] sm:$0xf]
        %v3687 = vld [vmem:[%s321 + $0xd8] sm:$0xf]
        %v3688 = vld [vmem:[%s321 + $0xe0] sm:$0xf]
        %v3689 = vld [vmem:[%s321 + $0xe4] sm:$0xf]
        %v3690 = vld [vmem:[%s321 + $0xe8] sm:$0xf]
        %v3691 = vld [vmem:[%s321 + $0xec] sm:$0xf]
        %v3692 = vld [vmem:[%s321 + $0xf4] sm:$0xf]
        %v3693 = vld [vmem:[%s321 + $0xf8] sm:$0xf]
        %v3694 = vld [vmem:[%s321 + $0xfc] sm:$0xf]
        %v3695 = vld [vmem:[%s321 + $0x100] sm:$0xf]
        %v3696 = vld [vmem:[%s321 + $0x108] sm:$0xf]
        %v3697 = vld [vmem:[%s321 + $0x10c] sm:$0xf]
        %v3698 = vld [vmem:[%s321 + $0x110] sm:$0xf]
        %v3699 = vld [vmem:[%s321 + $0x114] sm:$0xf]
        %v3700 = vld [vmem:[%s321 + $0x11c] sm:$0xf]
        %v3701 = vld [vmem:[%s321 + $0x120] sm:$0xf]
        %v3702 = vld [vmem:[%s321 + $0x124] sm:$0xf]
        %v3703 = vld [vmem:[%s321 + $0x128] sm:$0xf]
        %v3704 = vld [vmem:[%s321 + $0x130] sm:$0xf]
        %v3705 = vld [vmem:[%s321 + $0x134] sm:$0xf]
        %v3706 = vld [vmem:[%s321 + $0x138] sm:$0xf]
        %v3707 = vld [vmem:[%s321 + $0x13c] sm:$0xf]
        %v3708 = vunpack.c.l.bf16 %v3644
        %v3709 = vunpack.c.l.bf16 %v3645
        %v3710 = vunpack.c.l.bf16 %v3646
        %v3711 = vunpack.c.l.bf16 %v3647
        %v3712 = vunpack.c.l.bf16 %v3648
        %v3713 = vunpack.c.l.bf16 %v3649
        %v3714 = vunpack.c.l.bf16 %v3650
        %v3715 = vunpack.c.l.bf16 %v3651
        %v3716 = vunpack.c.l.bf16 %v3652
        %v3717 = vunpack.c.l.bf16 %v3653
        %v3718 = vunpack.c.l.bf16 %v3654
        %v3719 = vunpack.c.l.bf16 %v3655
        %v3720 = vunpack.c.l.bf16 %v3656
        %v3721 = vunpack.c.l.bf16 %v3657
        %v3722 = vunpack.c.l.bf16 %v3658
        %v3723 = vunpack.c.l.bf16 %v3659
        %v3724 = vunpack.c.l.bf16 %v3660
        %v3725 = vunpack.c.l.bf16 %v3661
        %v3726 = vunpack.c.l.bf16 %v3662
        %v3727 = vunpack.c.l.bf16 %v3663
        %v3728 = vunpack.c.l.bf16 %v3664
        %v3729 = vunpack.c.l.bf16 %v3665
        %v3730 = vunpack.c.l.bf16 %v3666
        %v3731 = vunpack.c.l.bf16 %v3667
        %v3732 = vunpack.c.l.bf16 %v3668
        %v3733 = vunpack.c.l.bf16 %v3669
        %v3734 = vunpack.c.l.bf16 %v3670
        %v3735 = vunpack.c.l.bf16 %v3671
        %v3736 = vunpack.c.l.bf16 %v3672
        %v3737 = vunpack.c.l.bf16 %v3673
        %v3738 = vunpack.c.l.bf16 %v3674
        %v3739 = vunpack.c.l.bf16 %v3675
        %v3740 = vunpack.c.l.bf16 %v3676
        %v3741 = vunpack.c.l.bf16 %v3677
        %v3742 = vunpack.c.l.bf16 %v3678
        %v3743 = vunpack.c.l.bf16 %v3679
        %v3744 = vunpack.c.l.bf16 %v3680
        %v3745 = vunpack.c.l.bf16 %v3681
        %v3746 = vunpack.c.l.bf16 %v3682
        %v3747 = vunpack.c.l.bf16 %v3683
        %v3748 = vunpack.c.l.bf16 %v3684
        %v3749 = vunpack.c.l.bf16 %v3685
        %v3750 = vunpack.c.l.bf16 %v3686
        %v3751 = vunpack.c.l.bf16 %v3687
        %v3752 = vunpack.c.l.bf16 %v3688
        %v3753 = vunpack.c.l.bf16 %v3689
        %v3754 = vunpack.c.l.bf16 %v3690
        %v3755 = vunpack.c.l.bf16 %v3691
        %v3756 = vunpack.c.l.bf16 %v3692
        %v3757 = vunpack.c.l.bf16 %v3693
        %v3758 = vunpack.c.l.bf16 %v3694
        %v3759 = vunpack.c.l.bf16 %v3695
        %v3760 = vunpack.c.l.bf16 %v3696
        %v3761 = vunpack.c.l.bf16 %v3697
        %v3762 = vunpack.c.l.bf16 %v3698
        %v3763 = vunpack.c.l.bf16 %v3699
        %v3764 = vunpack.c.l.bf16 %v3700
        %v3765 = vunpack.c.l.bf16 %v3701
        %v3766 = vunpack.c.l.bf16 %v3702
        %v3767 = vunpack.c.l.bf16 %v3703
        %v3768 = vunpack.c.l.bf16 %v3704
        %v3769 = vunpack.c.l.bf16 %v3705
        %v3770 = vunpack.c.l.bf16 %v3706
        %v3771 = vunpack.c.l.bf16 %v3707
        %s3772 = scalar_lea.vmem [#allocation3], 40
        %v3773 = vld [vmem:[%s3772 + $0x4] sm:$0xf]
        %v3774 = vld [vmem:[%s3772 + $0x8] sm:$0xf]
        %v3775 = vld [vmem:[%s3772 + $0xc] sm:$0xf]
        %v3776 = vld [vmem:[%s3772 + $0x10] sm:$0xf]
        %v3777 = vld [vmem:[%s3772 + $0x18] sm:$0xf]
        %v3778 = vld [vmem:[%s3772 + $0x1c] sm:$0xf]
        %v3779 = vld [vmem:[%s3772 + $0x20] sm:$0xf]
        %v3780 = vld [vmem:[%s3772 + $0x24] sm:$0xf]
        %v3781 = vld [vmem:[%s3772 + $0x2c] sm:$0xf]
        %v3782 = vld [vmem:[%s3772 + $0x30] sm:$0xf]
        %v3783 = vld [vmem:[%s3772 + $0x34] sm:$0xf]
        %v3784 = vld [vmem:[%s3772 + $0x38] sm:$0xf]
        %v3785 = vld [vmem:[%s3772 + $0x40] sm:$0xf]
        %v3786 = vld [vmem:[%s3772 + $0x44] sm:$0xf]
        %v3787 = vld [vmem:[%s3772 + $0x48] sm:$0xf]
        %v3788 = vld [vmem:[%s3772 + $0x4c] sm:$0xf]
        %v3789 = vld [vmem:[%s3772 + $0x54] sm:$0xf]
        %v3790 = vld [vmem:[%s3772 + $0x58] sm:$0xf]
        %v3791 = vld [vmem:[%s3772 + $0x5c] sm:$0xf]
        %v3792 = vld [vmem:[%s3772 + $0x60] sm:$0xf]
        %v3793 = vld [vmem:[%s3772 + $0x68] sm:$0xf]
        %v3794 = vld [vmem:[%s3772 + $0x6c] sm:$0xf]
        %v3795 = vld [vmem:[%s3772 + $0x70] sm:$0xf]
        %v3796 = vld [vmem:[%s3772 + $0x74] sm:$0xf]
        %v3797 = vld [vmem:[%s3772 + $0x7c] sm:$0xf]
        %v3798 = vld [vmem:[%s3772 + $0x80] sm:$0xf]
        %v3799 = vld [vmem:[%s3772 + $0x84] sm:$0xf]
        %v3800 = vld [vmem:[%s3772 + $0x88] sm:$0xf]
        %v3801 = vld [vmem:[%s3772 + $0x90] sm:$0xf]
        %v3802 = vld [vmem:[%s3772 + $0x94] sm:$0xf]
        %v3803 = vld [vmem:[%s3772 + $0x98] sm:$0xf]
        %v3804 = vld [vmem:[%s3772 + $0x9c] sm:$0xf]
        %v3805 = vld [vmem:[%s3772 + $0xa4] sm:$0xf]
        %v3806 = vld [vmem:[%s3772 + $0xa8] sm:$0xf]
        %v3807 = vld [vmem:[%s3772 + $0xac] sm:$0xf]
        %v3808 = vld [vmem:[%s3772 + $0xb0] sm:$0xf]
        %v3809 = vld [vmem:[%s3772 + $0xb8] sm:$0xf]
        %v3810 = vld [vmem:[%s3772 + $0xbc] sm:$0xf]
        %v3811 = vld [vmem:[%s3772 + $0xc0] sm:$0xf]
        %v3812 = vld [vmem:[%s3772 + $0xc4] sm:$0xf]
        %v3813 = vld [vmem:[%s3772 + $0xcc] sm:$0xf]
        %v3814 = vld [vmem:[%s3772 + $0xd0] sm:$0xf]
        %v3815 = vld [vmem:[%s3772 + $0xd4] sm:$0xf]
        %v3816 = vld [vmem:[%s3772 + $0xd8] sm:$0xf]
        %v3817 = vld [vmem:[%s3772 + $0xe0] sm:$0xf]
        %v3818 = vld [vmem:[%s3772 + $0xe4] sm:$0xf]
        %v3819 = vld [vmem:[%s3772 + $0xe8] sm:$0xf]
        %v3820 = vld [vmem:[%s3772 + $0xec] sm:$0xf]
        %v3821 = vld [vmem:[%s3772 + $0xf4] sm:$0xf]
        %v3822 = vld [vmem:[%s3772 + $0xf8] sm:$0xf]
        %v3823 = vld [vmem:[%s3772 + $0xfc] sm:$0xf]
        %v3824 = vld [vmem:[%s3772 + $0x100] sm:$0xf]
        %v3825 = vld [vmem:[%s3772 + $0x108] sm:$0xf]
        %v3826 = vld [vmem:[%s3772 + $0x10c] sm:$0xf]
        %v3827 = vld [vmem:[%s3772 + $0x110] sm:$0xf]
        %v3828 = vld [vmem:[%s3772 + $0x114] sm:$0xf]
        %v3829 = vld [vmem:[%s3772 + $0x11c] sm:$0xf]
        %v3830 = vld [vmem:[%s3772 + $0x120] sm:$0xf]
        %v3831 = vld [vmem:[%s3772 + $0x124] sm:$0xf]
        %v3832 = vld [vmem:[%s3772 + $0x128] sm:$0xf]
        %v3833 = vld [vmem:[%s3772 + $0x130] sm:$0xf]
        %v3834 = vld [vmem:[%s3772 + $0x134] sm:$0xf]
        %v3835 = vld [vmem:[%s3772 + $0x138] sm:$0xf]
        %v3836 = vld [vmem:[%s3772 + $0x13c] sm:$0xf]
        %v3837 = vunpack.c.l.bf16 %v3773
        %v3838 = vunpack.c.l.bf16 %v3774
        %v3839 = vunpack.c.l.bf16 %v3775
        %v3840 = vunpack.c.l.bf16 %v3776
        %v3841 = vunpack.c.l.bf16 %v3777
        %v3842 = vunpack.c.l.bf16 %v3778
        %v3843 = vunpack.c.l.bf16 %v3779
        %v3844 = vunpack.c.l.bf16 %v3780
        %v3845 = vunpack.c.l.bf16 %v3781
        %v3846 = vunpack.c.l.bf16 %v3782
        %v3847 = vunpack.c.l.bf16 %v3783
        %v3848 = vunpack.c.l.bf16 %v3784
        %v3849 = vunpack.c.l.bf16 %v3785
        %v3850 = vunpack.c.l.bf16 %v3786
        %v3851 = vunpack.c.l.bf16 %v3787
        %v3852 = vunpack.c.l.bf16 %v3788
        %v3853 = vunpack.c.l.bf16 %v3789
        %v3854 = vunpack.c.l.bf16 %v3790
        %v3855 = vunpack.c.l.bf16 %v3791
        %v3856 = vunpack.c.l.bf16 %v3792
        %v3857 = vunpack.c.l.bf16 %v3793
        %v3858 = vunpack.c.l.bf16 %v3794
        %v3859 = vunpack.c.l.bf16 %v3795
        %v3860 = vunpack.c.l.bf16 %v3796
        %v3861 = vunpack.c.l.bf16 %v3797
        %v3862 = vunpack.c.l.bf16 %v3798
        %v3863 = vunpack.c.l.bf16 %v3799
        %v3864 = vunpack.c.l.bf16 %v3800
        %v3865 = vunpack.c.l.bf16 %v3801
        %v3866 = vunpack.c.l.bf16 %v3802
        %v3867 = vunpack.c.l.bf16 %v3803
        %v3868 = vunpack.c.l.bf16 %v3804
        %v3869 = vunpack.c.l.bf16 %v3805
        %v3870 = vunpack.c.l.bf16 %v3806
        %v3871 = vunpack.c.l.bf16 %v3807
        %v3872 = vunpack.c.l.bf16 %v3808
        %v3873 = vunpack.c.l.bf16 %v3809
        %v3874 = vunpack.c.l.bf16 %v3810
        %v3875 = vunpack.c.l.bf16 %v3811
        %v3876 = vunpack.c.l.bf16 %v3812
        %v3877 = vunpack.c.l.bf16 %v3813
        %v3878 = vunpack.c.l.bf16 %v3814
        %v3879 = vunpack.c.l.bf16 %v3815
        %v3880 = vunpack.c.l.bf16 %v3816
        %v3881 = vunpack.c.l.bf16 %v3817
        %v3882 = vunpack.c.l.bf16 %v3818
        %v3883 = vunpack.c.l.bf16 %v3819
        %v3884 = vunpack.c.l.bf16 %v3820
        %v3885 = vunpack.c.l.bf16 %v3821
        %v3886 = vunpack.c.l.bf16 %v3822
        %v3887 = vunpack.c.l.bf16 %v3823
        %v3888 = vunpack.c.l.bf16 %v3824
        %v3889 = vunpack.c.l.bf16 %v3825
        %v3890 = vunpack.c.l.bf16 %v3826
        %v3891 = vunpack.c.l.bf16 %v3827
        %v3892 = vunpack.c.l.bf16 %v3828
        %v3893 = vunpack.c.l.bf16 %v3829
        %v3894 = vunpack.c.l.bf16 %v3830
        %v3895 = vunpack.c.l.bf16 %v3831
        %v3896 = vunpack.c.l.bf16 %v3832
        %v3897 = vunpack.c.l.bf16 %v3833
        %v3898 = vunpack.c.l.bf16 %v3834
        %v3899 = vunpack.c.l.bf16 %v3835
        %v3900 = vunpack.c.l.bf16 %v3836
        %v3933 = vrot.slane %v3581, 1
        %v3934 = vrot.slane %v3582, 1
        %v3935 = vsel %vm835, %v3933, %v3934
        %v3936 = vrot.slane %v3585, 1
        %v3937 = vrot.slane %v3586, 1
        %v3938 = vsel %vm835, %v3936, %v3937
        %v3939 = vrot.slane %v3589, 1
        %v3940 = vrot.slane %v3590, 1
        %v3941 = vsel %vm835, %v3939, %v3940
        %v3942 = vrot.slane %v3593, 1
        %v3943 = vrot.slane %v3594, 1
        %v3944 = vsel %vm835, %v3942, %v3943
        %v3945 = vrot.slane %v3597, 1
        %v3946 = vrot.slane %v3598, 1
        %v3947 = vsel %vm835, %v3945, %v3946
        %v3948 = vrot.slane %v3601, 1
        %v3949 = vrot.slane %v3602, 1
        %v3950 = vsel %vm835, %v3948, %v3949
        %v3951 = vrot.slane %v3605, 1
        %v3952 = vrot.slane %v3606, 1
        %v3953 = vsel %vm835, %v3951, %v3952
        %v3954 = vrot.slane %v3609, 1
        %v3955 = vrot.slane %v3610, 1
        %v3956 = vsel %vm835, %v3954, %v3955
        %v3957 = vrot.slane %v3613, 1
        %v3958 = vrot.slane %v3614, 1
        %v3959 = vsel %vm835, %v3957, %v3958
        %v3960 = vrot.slane %v3617, 1
        %v3961 = vrot.slane %v3618, 1
        %v3962 = vsel %vm835, %v3960, %v3961
        %v3963 = vrot.slane %v3621, 1
        %v3964 = vrot.slane %v3622, 1
        %v3965 = vsel %vm835, %v3963, %v3964
        %v3966 = vrot.slane %v3625, 1
        %v3967 = vrot.slane %v3626, 1
        %v3968 = vsel %vm835, %v3966, %v3967
        %v3969 = vrot.slane %v3629, 1
        %v3970 = vrot.slane %v3630, 1
        %v3971 = vsel %vm835, %v3969, %v3970
        %v3972 = vrot.slane %v3633, 1
        %v3973 = vrot.slane %v3634, 1
        %v3974 = vsel %vm835, %v3972, %v3973
        %v3975 = vrot.slane %v3637, 1
        %v3976 = vrot.slane %v3638, 1
        %v3977 = vsel %vm835, %v3975, %v3976
        %v3978 = vrot.slane %v3641, 1
        %v3979 = vrot.slane %v3642, 1
        %v3980 = vsel %vm835, %v3978, %v3979
        %3981 = vrot.lane.b32.xlu0 %v3933, 8
        %v3982 = vpop.permute.xlu0 %3981
        %3983 = vrot.lane.b32.xlu0 %v3935, 8
        %v3984 = vpop.permute.xlu0 %3983
        %3985 = vrot.lane.b32.xlu0 %v3934, 8
        %v3986 = vpop.permute.xlu0 %3985
        %3987 = vrot.lane.b32.xlu0 %v3936, 8
        %v3988 = vpop.permute.xlu0 %3987
        %3989 = vrot.lane.b32.xlu0 %v3938, 8
        %v3990 = vpop.permute.xlu0 %3989
        %3991 = vrot.lane.b32.xlu0 %v3937, 8
        %v3992 = vpop.permute.xlu0 %3991
        %3993 = vrot.lane.b32.xlu0 %v3939, 8
        %v3994 = vpop.permute.xlu0 %3993
        %3995 = vrot.lane.b32.xlu0 %v3941, 8
        %v3996 = vpop.permute.xlu0 %3995
        %3997 = vrot.lane.b32.xlu0 %v3940, 8
        %v3998 = vpop.permute.xlu0 %3997
        %3999 = vrot.lane.b32.xlu0 %v3942, 8
        %v4000 = vpop.permute.xlu0 %3999
        %4001 = vrot.lane.b32.xlu0 %v3944, 8
        %v4002 = vpop.permute.xlu0 %4001
        %4003 = vrot.lane.b32.xlu0 %v3943, 8
        %v4004 = vpop.permute.xlu0 %4003
        %4005 = vrot.lane.b32.xlu0 %v3945, 8
        %v4006 = vpop.permute.xlu0 %4005
        %4007 = vrot.lane.b32.xlu0 %v3947, 8
        %v4008 = vpop.permute.xlu0 %4007
        %4009 = vrot.lane.b32.xlu0 %v3946, 8
        %v4010 = vpop.permute.xlu0 %4009
        %4011 = vrot.lane.b32.xlu0 %v3948, 8
        %v4012 = vpop.permute.xlu0 %4011
        %4013 = vrot.lane.b32.xlu0 %v3950, 8
        %v4014 = vpop.permute.xlu0 %4013
        %4015 = vrot.lane.b32.xlu0 %v3949, 8
        %v4016 = vpop.permute.xlu0 %4015
        %4017 = vrot.lane.b32.xlu0 %v3951, 8
        %v4018 = vpop.permute.xlu0 %4017
        %4019 = vrot.lane.b32.xlu0 %v3953, 8
        %v4020 = vpop.permute.xlu0 %4019
        %4021 = vrot.lane.b32.xlu0 %v3952, 8
        %v4022 = vpop.permute.xlu0 %4021
        %4023 = vrot.lane.b32.xlu0 %v3954, 8
        %v4024 = vpop.permute.xlu0 %4023
        %4025 = vrot.lane.b32.xlu0 %v3956, 8
        %v4026 = vpop.permute.xlu0 %4025
        %4027 = vrot.lane.b32.xlu0 %v3955, 8
        %v4028 = vpop.permute.xlu0 %4027
        %4029 = vrot.lane.b32.xlu0 %v3957, 8
        %v4030 = vpop.permute.xlu0 %4029
        %4031 = vrot.lane.b32.xlu0 %v3959, 8
        %v4032 = vpop.permute.xlu0 %4031
        %4033 = vrot.lane.b32.xlu0 %v3958, 8
        %v4034 = vpop.permute.xlu0 %4033
        %4035 = vrot.lane.b32.xlu0 %v3960, 8
        %v4036 = vpop.permute.xlu0 %4035
        %4037 = vrot.lane.b32.xlu0 %v3962, 8
        %v4038 = vpop.permute.xlu0 %4037
        %4039 = vrot.lane.b32.xlu0 %v3961, 8
        %v4040 = vpop.permute.xlu0 %4039
        %4041 = vrot.lane.b32.xlu0 %v3963, 8
        %v4042 = vpop.permute.xlu0 %4041
        %4043 = vrot.lane.b32.xlu0 %v3965, 8
        %v4044 = vpop.permute.xlu0 %4043
        %4045 = vrot.lane.b32.xlu0 %v3964, 8
        %v4046 = vpop.permute.xlu0 %4045
        %4047 = vrot.lane.b32.xlu0 %v3966, 8
        %v4048 = vpop.permute.xlu0 %4047
        %4049 = vrot.lane.b32.xlu0 %v3968, 8
        %v4050 = vpop.permute.xlu0 %4049
        %4051 = vrot.lane.b32.xlu0 %v3967, 8
        %v4052 = vpop.permute.xlu0 %4051
        %4053 = vrot.lane.b32.xlu0 %v3969, 8
        %v4054 = vpop.permute.xlu0 %4053
        %4055 = vrot.lane.b32.xlu0 %v3971, 8
        %v4056 = vpop.permute.xlu0 %4055
        %4057 = vrot.lane.b32.xlu0 %v3970, 8
        %v4058 = vpop.permute.xlu0 %4057
        %4059 = vrot.lane.b32.xlu0 %v3972, 8
        %v4060 = vpop.permute.xlu0 %4059
        %4061 = vrot.lane.b32.xlu0 %v3974, 8
        %v4062 = vpop.permute.xlu0 %4061
        %4063 = vrot.lane.b32.xlu0 %v3973, 8
        %v4064 = vpop.permute.xlu0 %4063
        %4065 = vrot.lane.b32.xlu0 %v3975, 8
        %v4066 = vpop.permute.xlu0 %4065
        %4067 = vrot.lane.b32.xlu0 %v3977, 8
        %v4068 = vpop.permute.xlu0 %4067
        %4069 = vrot.lane.b32.xlu0 %v3976, 8
        %v4070 = vpop.permute.xlu0 %4069
        %4071 = vrot.lane.b32.xlu0 %v3978, 8
        %v4072 = vpop.permute.xlu0 %4071
        %4073 = vrot.lane.b32.xlu0 %v3980, 8
        %v4074 = vpop.permute.xlu0 %4073
        %4075 = vrot.lane.b32.xlu0 %v3979, 8
        %v4076 = vpop.permute.xlu0 %4075
        %v4141 = vrot.slane %v3581, 2
        %v4142 = vrot.slane %v3582, 2
        %v4143 = vsel %vm1044, %v4141, %v4142
        %v4144 = vrot.slane %v3583, 2
        %v4145 = vsel %vm1044, %v4142, %v4144
        %v4146 = vrot.slane %v3585, 2
        %v4147 = vrot.slane %v3586, 2
        %v4148 = vsel %vm1044, %v4146, %v4147
        %v4149 = vrot.slane %v3587, 2
        %v4150 = vsel %vm1044, %v4147, %v4149
        %v4151 = vrot.slane %v3589, 2
        %v4152 = vrot.slane %v3590, 2
        %v4153 = vsel %vm1044, %v4151, %v4152
        %v4154 = vrot.slane %v3591, 2
        %v4155 = vsel %vm1044, %v4152, %v4154
        %v4156 = vrot.slane %v3593, 2
        %v4157 = vrot.slane %v3594, 2
        %v4158 = vsel %vm1044, %v4156, %v4157
        %v4159 = vrot.slane %v3595, 2
        %v4160 = vsel %vm1044, %v4157, %v4159
        %v4161 = vrot.slane %v3597, 2
        %v4162 = vrot.slane %v3598, 2
        %v4163 = vsel %vm1044, %v4161, %v4162
        %v4164 = vrot.slane %v3599, 2
        %v4165 = vsel %vm1044, %v4162, %v4164
        %v4166 = vrot.slane %v3601, 2
        %v4167 = vrot.slane %v3602, 2
        %v4168 = vsel %vm1044, %v4166, %v4167
        %v4169 = vrot.slane %v3603, 2
        %v4170 = vsel %vm1044, %v4167, %v4169
        %v4171 = vrot.slane %v3605, 2
        %v4172 = vrot.slane %v3606, 2
        %v4173 = vsel %vm1044, %v4171, %v4172
        %v4174 = vrot.slane %v3607, 2
        %v4175 = vsel %vm1044, %v4172, %v4174
        %v4176 = vrot.slane %v3609, 2
        %v4177 = vrot.slane %v3610, 2
        %v4178 = vsel %vm1044, %v4176, %v4177
        %v4179 = vrot.slane %v3611, 2
        %v4180 = vsel %vm1044, %v4177, %v4179
        %v4181 = vrot.slane %v3613, 2
        %v4182 = vrot.slane %v3614, 2
        %v4183 = vsel %vm1044, %v4181, %v4182
        %v4184 = vrot.slane %v3615, 2
        %v4185 = vsel %vm1044, %v4182, %v4184
        %v4186 = vrot.slane %v3617, 2
        %v4187 = vrot.slane %v3618, 2
        %v4188 = vsel %vm1044, %v4186, %v4187
        %v4189 = vrot.slane %v3619, 2
        %v4190 = vsel %vm1044, %v4187, %v4189
        %v4191 = vrot.slane %v3621, 2
        %v4192 = vrot.slane %v3622, 2
        %v4193 = vsel %vm1044, %v4191, %v4192
        %v4194 = vrot.slane %v3623, 2
        %v4195 = vsel %vm1044, %v4192, %v4194
        %v4196 = vrot.slane %v3625, 2
        %v4197 = vrot.slane %v3626, 2
        %v4198 = vsel %vm1044, %v4196, %v4197
        %v4199 = vrot.slane %v3627, 2
        %v4200 = vsel %vm1044, %v4197, %v4199
        %v4201 = vrot.slane %v3629, 2
        %v4202 = vrot.slane %v3630, 2
        %v4203 = vsel %vm1044, %v4201, %v4202
        %v4204 = vrot.slane %v3631, 2
        %v4205 = vsel %vm1044, %v4202, %v4204
        %v4206 = vrot.slane %v3633, 2
        %v4207 = vrot.slane %v3634, 2
        %v4208 = vsel %vm1044, %v4206, %v4207
        %v4209 = vrot.slane %v3635, 2
        %v4210 = vsel %vm1044, %v4207, %v4209
        %v4211 = vrot.slane %v3637, 2
        %v4212 = vrot.slane %v3638, 2
        %v4213 = vsel %vm1044, %v4211, %v4212
        %v4214 = vrot.slane %v3639, 2
        %v4215 = vsel %vm1044, %v4212, %v4214
        %v4216 = vrot.slane %v3641, 2
        %v4217 = vrot.slane %v3642, 2
        %v4218 = vsel %vm1044, %v4216, %v4217
        %v4219 = vrot.slane %v3643, 2
        %v4220 = vsel %vm1044, %v4217, %v4219
        %4221 = vrot.lane.b32.xlu0 %v4141, 16
        %v4222 = vpop.permute.xlu0 %4221
        %4223 = vrot.lane.b32.xlu0 %v4143, 16
        %v4224 = vpop.permute.xlu0 %4223
        %4225 = vrot.lane.b32.xlu0 %v4145, 16
        %v4226 = vpop.permute.xlu0 %4225
        %4227 = vrot.lane.b32.xlu0 %v4146, 16
        %v4228 = vpop.permute.xlu0 %4227
        %4229 = vrot.lane.b32.xlu0 %v4148, 16
        %v4230 = vpop.permute.xlu0 %4229
        %4231 = vrot.lane.b32.xlu0 %v4150, 16
        %v4232 = vpop.permute.xlu0 %4231
        %4233 = vrot.lane.b32.xlu0 %v4151, 16
        %v4234 = vpop.permute.xlu0 %4233
        %4235 = vrot.lane.b32.xlu0 %v4153, 16
        %v4236 = vpop.permute.xlu0 %4235
        %4237 = vrot.lane.b32.xlu0 %v4155, 16
        %v4238 = vpop.permute.xlu0 %4237
        %4239 = vrot.lane.b32.xlu0 %v4156, 16
        %v4240 = vpop.permute.xlu0 %4239
        %4241 = vrot.lane.b32.xlu0 %v4158, 16
        %v4242 = vpop.permute.xlu0 %4241
        %4243 = vrot.lane.b32.xlu0 %v4160, 16
        %v4244 = vpop.permute.xlu0 %4243
        %4245 = vrot.lane.b32.xlu0 %v4161, 16
        %v4246 = vpop.permute.xlu0 %4245
        %4247 = vrot.lane.b32.xlu0 %v4163, 16
        %v4248 = vpop.permute.xlu0 %4247
        %4249 = vrot.lane.b32.xlu0 %v4165, 16
        %v4250 = vpop.permute.xlu0 %4249
        %4251 = vrot.lane.b32.xlu0 %v4166, 16
        %v4252 = vpop.permute.xlu0 %4251
        %4253 = vrot.lane.b32.xlu0 %v4168, 16
        %v4254 = vpop.permute.xlu0 %4253
        %4255 = vrot.lane.b32.xlu0 %v4170, 16
        %v4256 = vpop.permute.xlu0 %4255
        %4257 = vrot.lane.b32.xlu0 %v4171, 16
        %v4258 = vpop.permute.xlu0 %4257
        %4259 = vrot.lane.b32.xlu0 %v4173, 16
        %v4260 = vpop.permute.xlu0 %4259
        %4261 = vrot.lane.b32.xlu0 %v4175, 16
        %v4262 = vpop.permute.xlu0 %4261
        %4263 = vrot.lane.b32.xlu0 %v4176, 16
        %v4264 = vpop.permute.xlu0 %4263
        %4265 = vrot.lane.b32.xlu0 %v4178, 16
        %v4266 = vpop.permute.xlu0 %4265
        %4267 = vrot.lane.b32.xlu0 %v4180, 16
        %v4268 = vpop.permute.xlu0 %4267
        %4269 = vrot.lane.b32.xlu0 %v4181, 16
        %v4270 = vpop.permute.xlu0 %4269
        %4271 = vrot.lane.b32.xlu0 %v4183, 16
        %v4272 = vpop.permute.xlu0 %4271
        %4273 = vrot.lane.b32.xlu0 %v4185, 16
        %v4274 = vpop.permute.xlu0 %4273
        %4275 = vrot.lane.b32.xlu0 %v4186, 16
        %v4276 = vpop.permute.xlu0 %4275
        %4277 = vrot.lane.b32.xlu0 %v4188, 16
        %v4278 = vpop.permute.xlu0 %4277
        %4279 = vrot.lane.b32.xlu0 %v4190, 16
        %v4280 = vpop.permute.xlu0 %4279
        %4281 = vrot.lane.b32.xlu0 %v4191, 16
        %v4282 = vpop.permute.xlu0 %4281
        %4283 = vrot.lane.b32.xlu0 %v4193, 16
        %v4284 = vpop.permute.xlu0 %4283
        %4285 = vrot.lane.b32.xlu0 %v4195, 16
        %v4286 = vpop.permute.xlu0 %4285
        %4287 = vrot.lane.b32.xlu0 %v4196, 16
        %v4288 = vpop.permute.xlu0 %4287
        %4289 = vrot.lane.b32.xlu0 %v4198, 16
        %v4290 = vpop.permute.xlu0 %4289
        %4291 = vrot.lane.b32.xlu0 %v4200, 16
        %v4292 = vpop.permute.xlu0 %4291
        %4293 = vrot.lane.b32.xlu0 %v4201, 16
        %v4294 = vpop.permute.xlu0 %4293
        %4295 = vrot.lane.b32.xlu0 %v4203, 16
        %v4296 = vpop.permute.xlu0 %4295
        %4297 = vrot.lane.b32.xlu0 %v4205, 16
        %v4298 = vpop.permute.xlu0 %4297
        %4299 = vrot.lane.b32.xlu0 %v4206, 16
        %v4300 = vpop.permute.xlu0 %4299
        %4301 = vrot.lane.b32.xlu0 %v4208, 16
        %v4302 = vpop.permute.xlu0 %4301
        %4303 = vrot.lane.b32.xlu0 %v4210, 16
        %v4304 = vpop.permute.xlu0 %4303
        %4305 = vrot.lane.b32.xlu0 %v4211, 16
        %v4306 = vpop.permute.xlu0 %4305
        %4307 = vrot.lane.b32.xlu0 %v4213, 16
        %v4308 = vpop.permute.xlu0 %4307
        %4309 = vrot.lane.b32.xlu0 %v4215, 16
        %v4310 = vpop.permute.xlu0 %4309
        %4311 = vrot.lane.b32.xlu0 %v4216, 16
        %v4312 = vpop.permute.xlu0 %4311
        %4313 = vrot.lane.b32.xlu0 %v4218, 16
        %v4314 = vpop.permute.xlu0 %4313
        %4315 = vrot.lane.b32.xlu0 %v4220, 16
        %v4316 = vpop.permute.xlu0 %4315
        %4413 = vrot.lane.b32.xlu0 %v3708, 24
        %v4414 = vpop.permute.xlu0 %4413
        %4415 = vrot.lane.b32.xlu0 %v3709, 24
        %v4416 = vpop.permute.xlu0 %4415
        %4417 = vrot.lane.b32.xlu0 %v3710, 24
        %v4418 = vpop.permute.xlu0 %4417
        %4419 = vrot.lane.b32.xlu0 %v3712, 24
        %v4420 = vpop.permute.xlu0 %4419
        %4421 = vrot.lane.b32.xlu0 %v3713, 24
        %v4422 = vpop.permute.xlu0 %4421
        %4423 = vrot.lane.b32.xlu0 %v3714, 24
        %v4424 = vpop.permute.xlu0 %4423
        %4425 = vrot.lane.b32.xlu0 %v3716, 24
        %v4426 = vpop.permute.xlu0 %4425
        %4427 = vrot.lane.b32.xlu0 %v3717, 24
        %v4428 = vpop.permute.xlu0 %4427
        %4429 = vrot.lane.b32.xlu0 %v3718, 24
        %v4430 = vpop.permute.xlu0 %4429
        %4431 = vrot.lane.b32.xlu0 %v3720, 24
        %v4432 = vpop.permute.xlu0 %4431
        %4433 = vrot.lane.b32.xlu0 %v3721, 24
        %v4434 = vpop.permute.xlu0 %4433
        %4435 = vrot.lane.b32.xlu0 %v3722, 24
        %v4436 = vpop.permute.xlu0 %4435
        %4437 = vrot.lane.b32.xlu0 %v3724, 24
        %v4438 = vpop.permute.xlu0 %4437
        %4439 = vrot.lane.b32.xlu0 %v3725, 24
        %v4440 = vpop.permute.xlu0 %4439
        %4441 = vrot.lane.b32.xlu0 %v3726, 24
        %v4442 = vpop.permute.xlu0 %4441
        %4443 = vrot.lane.b32.xlu0 %v3728, 24
        %v4444 = vpop.permute.xlu0 %4443
        %4445 = vrot.lane.b32.xlu0 %v3729, 24
        %v4446 = vpop.permute.xlu0 %4445
        %4447 = vrot.lane.b32.xlu0 %v3730, 24
        %v4448 = vpop.permute.xlu0 %4447
        %4449 = vrot.lane.b32.xlu0 %v3732, 24
        %v4450 = vpop.permute.xlu0 %4449
        %4451 = vrot.lane.b32.xlu0 %v3733, 24
        %v4452 = vpop.permute.xlu0 %4451
        %4453 = vrot.lane.b32.xlu0 %v3734, 24
        %v4454 = vpop.permute.xlu0 %4453
        %4455 = vrot.lane.b32.xlu0 %v3736, 24
        %v4456 = vpop.permute.xlu0 %4455
        %4457 = vrot.lane.b32.xlu0 %v3737, 24
        %v4458 = vpop.permute.xlu0 %4457
        %4459 = vrot.lane.b32.xlu0 %v3738, 24
        %v4460 = vpop.permute.xlu0 %4459
        %4461 = vrot.lane.b32.xlu0 %v3740, 24
        %v4462 = vpop.permute.xlu0 %4461
        %4463 = vrot.lane.b32.xlu0 %v3741, 24
        %v4464 = vpop.permute.xlu0 %4463
        %4465 = vrot.lane.b32.xlu0 %v3742, 24
        %v4466 = vpop.permute.xlu0 %4465
        %4467 = vrot.lane.b32.xlu0 %v3744, 24
        %v4468 = vpop.permute.xlu0 %4467
        %4469 = vrot.lane.b32.xlu0 %v3745, 24
        %v4470 = vpop.permute.xlu0 %4469
        %4471 = vrot.lane.b32.xlu0 %v3746, 24
        %v4472 = vpop.permute.xlu0 %4471
        %4473 = vrot.lane.b32.xlu0 %v3748, 24
        %v4474 = vpop.permute.xlu0 %4473
        %4475 = vrot.lane.b32.xlu0 %v3749, 24
        %v4476 = vpop.permute.xlu0 %4475
        %4477 = vrot.lane.b32.xlu0 %v3750, 24
        %v4478 = vpop.permute.xlu0 %4477
        %4479 = vrot.lane.b32.xlu0 %v3752, 24
        %v4480 = vpop.permute.xlu0 %4479
        %4481 = vrot.lane.b32.xlu0 %v3753, 24
        %v4482 = vpop.permute.xlu0 %4481
        %4483 = vrot.lane.b32.xlu0 %v3754, 24
        %v4484 = vpop.permute.xlu0 %4483
        %4485 = vrot.lane.b32.xlu0 %v3756, 24
        %v4486 = vpop.permute.xlu0 %4485
        %4487 = vrot.lane.b32.xlu0 %v3757, 24
        %v4488 = vpop.permute.xlu0 %4487
        %4489 = vrot.lane.b32.xlu0 %v3758, 24
        %v4490 = vpop.permute.xlu0 %4489
        %4491 = vrot.lane.b32.xlu0 %v3760, 24
        %v4492 = vpop.permute.xlu0 %4491
        %4493 = vrot.lane.b32.xlu0 %v3761, 24
        %v4494 = vpop.permute.xlu0 %4493
        %4495 = vrot.lane.b32.xlu0 %v3762, 24
        %v4496 = vpop.permute.xlu0 %4495
        %4497 = vrot.lane.b32.xlu0 %v3764, 24
        %v4498 = vpop.permute.xlu0 %4497
        %4499 = vrot.lane.b32.xlu0 %v3765, 24
        %v4500 = vpop.permute.xlu0 %4499
        %4501 = vrot.lane.b32.xlu0 %v3766, 24
        %v4502 = vpop.permute.xlu0 %4501
        %4503 = vrot.lane.b32.xlu0 %v3768, 24
        %v4504 = vpop.permute.xlu0 %4503
        %4505 = vrot.lane.b32.xlu0 %v3769, 24
        %v4506 = vpop.permute.xlu0 %4505
        %4507 = vrot.lane.b32.xlu0 %v3770, 24
        %v4508 = vpop.permute.xlu0 %4507
        %v4557 = vrot.slane %v3709, 1
        %v4558 = vrot.slane %v3710, 1
        %v4559 = vsel %vm835, %v4557, %v4558
        %v4560 = vrot.slane %v3713, 1
        %v4561 = vrot.slane %v3714, 1
        %v4562 = vsel %vm835, %v4560, %v4561
        %v4563 = vrot.slane %v3717, 1
        %v4564 = vrot.slane %v3718, 1
        %v4565 = vsel %vm835, %v4563, %v4564
        %v4566 = vrot.slane %v3721, 1
        %v4567 = vrot.slane %v3722, 1
        %v4568 = vsel %vm835, %v4566, %v4567
        %v4569 = vrot.slane %v3725, 1
        %v4570 = vrot.slane %v3726, 1
        %v4571 = vsel %vm835, %v4569, %v4570
        %v4572 = vrot.slane %v3729, 1
        %v4573 = vrot.slane %v3730, 1
        %v4574 = vsel %vm835, %v4572, %v4573
        %v4575 = vrot.slane %v3733, 1
        %v4576 = vrot.slane %v3734, 1
        %v4577 = vsel %vm835, %v4575, %v4576
        %v4578 = vrot.slane %v3737, 1
        %v4579 = vrot.slane %v3738, 1
        %v4580 = vsel %vm835, %v4578, %v4579
        %v4581 = vrot.slane %v3741, 1
        %v4582 = vrot.slane %v3742, 1
        %v4583 = vsel %vm835, %v4581, %v4582
        %v4584 = vrot.slane %v3745, 1
        %v4585 = vrot.slane %v3746, 1
        %v4586 = vsel %vm835, %v4584, %v4585
        %v4587 = vrot.slane %v3749, 1
        %v4588 = vrot.slane %v3750, 1
        %v4589 = vsel %vm835, %v4587, %v4588
        %v4590 = vrot.slane %v3753, 1
        %v4591 = vrot.slane %v3754, 1
        %v4592 = vsel %vm835, %v4590, %v4591
        %v4593 = vrot.slane %v3757, 1
        %v4594 = vrot.slane %v3758, 1
        %v4595 = vsel %vm835, %v4593, %v4594
        %v4596 = vrot.slane %v3761, 1
        %v4597 = vrot.slane %v3762, 1
        %v4598 = vsel %vm835, %v4596, %v4597
        %v4599 = vrot.slane %v3765, 1
        %v4600 = vrot.slane %v3766, 1
        %v4601 = vsel %vm835, %v4599, %v4600
        %v4602 = vrot.slane %v3769, 1
        %v4603 = vrot.slane %v3770, 1
        %v4604 = vsel %vm835, %v4602, %v4603
        %4605 = vrot.lane.b32.xlu0 %v4557, 32
        %v4606 = vpop.permute.xlu0 %4605
        %4607 = vrot.lane.b32.xlu0 %v4559, 32
        %v4608 = vpop.permute.xlu0 %4607
        %4609 = vrot.lane.b32.xlu0 %v4558, 32
        %v4610 = vpop.permute.xlu0 %4609
        %4611 = vrot.lane.b32.xlu0 %v4560, 32
        %v4612 = vpop.permute.xlu0 %4611
        %4613 = vrot.lane.b32.xlu0 %v4562, 32
        %v4614 = vpop.permute.xlu0 %4613
        %4615 = vrot.lane.b32.xlu0 %v4561, 32
        %v4616 = vpop.permute.xlu0 %4615
        %4617 = vrot.lane.b32.xlu0 %v4563, 32
        %v4618 = vpop.permute.xlu0 %4617
        %4619 = vrot.lane.b32.xlu0 %v4565, 32
        %v4620 = vpop.permute.xlu0 %4619
        %4621 = vrot.lane.b32.xlu0 %v4564, 32
        %v4622 = vpop.permute.xlu0 %4621
        %4623 = vrot.lane.b32.xlu0 %v4566, 32
        %v4624 = vpop.permute.xlu0 %4623
        %4625 = vrot.lane.b32.xlu0 %v4568, 32
        %v4626 = vpop.permute.xlu0 %4625
        %4627 = vrot.lane.b32.xlu0 %v4567, 32
        %v4628 = vpop.permute.xlu0 %4627
        %4629 = vrot.lane.b32.xlu0 %v4569, 32
        %v4630 = vpop.permute.xlu0 %4629
        %4631 = vrot.lane.b32.xlu0 %v4571, 32
        %v4632 = vpop.permute.xlu0 %4631
        %4633 = vrot.lane.b32.xlu0 %v4570, 32
        %v4634 = vpop.permute.xlu0 %4633
        %4635 = vrot.lane.b32.xlu0 %v4572, 32
        %v4636 = vpop.permute.xlu0 %4635
        %4637 = vrot.lane.b32.xlu0 %v4574, 32
        %v4638 = vpop.permute.xlu0 %4637
        %4639 = vrot.lane.b32.xlu0 %v4573, 32
        %v4640 = vpop.permute.xlu0 %4639
        %4641 = vrot.lane.b32.xlu0 %v4575, 32
        %v4642 = vpop.permute.xlu0 %4641
        %4643 = vrot.lane.b32.xlu0 %v4577, 32
        %v4644 = vpop.permute.xlu0 %4643
        %4645 = vrot.lane.b32.xlu0 %v4576, 32
        %v4646 = vpop.permute.xlu0 %4645
        %4647 = vrot.lane.b32.xlu0 %v4578, 32
        %v4648 = vpop.permute.xlu0 %4647
        %4649 = vrot.lane.b32.xlu0 %v4580, 32
        %v4650 = vpop.permute.xlu0 %4649
        %4651 = vrot.lane.b32.xlu0 %v4579, 32
        %v4652 = vpop.permute.xlu0 %4651
        %4653 = vrot.lane.b32.xlu0 %v4581, 32
        %v4654 = vpop.permute.xlu0 %4653
        %4655 = vrot.lane.b32.xlu0 %v4583, 32
        %v4656 = vpop.permute.xlu0 %4655
        %4657 = vrot.lane.b32.xlu0 %v4582, 32
        %v4658 = vpop.permute.xlu0 %4657
        %4659 = vrot.lane.b32.xlu0 %v4584, 32
        %v4660 = vpop.permute.xlu0 %4659
        %4661 = vrot.lane.b32.xlu0 %v4586, 32
        %v4662 = vpop.permute.xlu0 %4661
        %4663 = vrot.lane.b32.xlu0 %v4585, 32
        %v4664 = vpop.permute.xlu0 %4663
        %4665 = vrot.lane.b32.xlu0 %v4587, 32
        %v4666 = vpop.permute.xlu0 %4665
        %4667 = vrot.lane.b32.xlu0 %v4589, 32
        %v4668 = vpop.permute.xlu0 %4667
        %4669 = vrot.lane.b32.xlu0 %v4588, 32
        %v4670 = vpop.permute.xlu0 %4669
        %4671 = vrot.lane.b32.xlu0 %v4590, 32
        %v4672 = vpop.permute.xlu0 %4671
        %4673 = vrot.lane.b32.xlu0 %v4592, 32
        %v4674 = vpop.permute.xlu0 %4673
        %4675 = vrot.lane.b32.xlu0 %v4591, 32
        %v4676 = vpop.permute.xlu0 %4675
        %4677 = vrot.lane.b32.xlu0 %v4593, 32
        %v4678 = vpop.permute.xlu0 %4677
        %4679 = vrot.lane.b32.xlu0 %v4595, 32
        %v4680 = vpop.permute.xlu0 %4679
        %4681 = vrot.lane.b32.xlu0 %v4594, 32
        %v4682 = vpop.permute.xlu0 %4681
        %4683 = vrot.lane.b32.xlu0 %v4596, 32
        %v4684 = vpop.permute.xlu0 %4683
        %4685 = vrot.lane.b32.xlu0 %v4598, 32
        %v4686 = vpop.permute.xlu0 %4685
        %4687 = vrot.lane.b32.xlu0 %v4597, 32
        %v4688 = vpop.permute.xlu0 %4687
        %4689 = vrot.lane.b32.xlu0 %v4599, 32
        %v4690 = vpop.permute.xlu0 %4689
        %4691 = vrot.lane.b32.xlu0 %v4601, 32
        %v4692 = vpop.permute.xlu0 %4691
        %4693 = vrot.lane.b32.xlu0 %v4600, 32
        %v4694 = vpop.permute.xlu0 %4693
        %4695 = vrot.lane.b32.xlu0 %v4602, 32
        %v4696 = vpop.permute.xlu0 %4695
        %4697 = vrot.lane.b32.xlu0 %v4604, 32
        %v4698 = vpop.permute.xlu0 %4697
        %4699 = vrot.lane.b32.xlu0 %v4603, 32
        %v4700 = vpop.permute.xlu0 %4699
        %v4765 = vrot.slane %v3709, 2
        %v4766 = vrot.slane %v3710, 2
        %v4767 = vsel %vm1044, %v4765, %v4766
        %v4768 = vrot.slane %v3711, 2
        %v4769 = vsel %vm1044, %v4766, %v4768
        %v4770 = vrot.slane %v3713, 2
        %v4771 = vrot.slane %v3714, 2
        %v4772 = vsel %vm1044, %v4770, %v4771
        %v4773 = vrot.slane %v3715, 2
        %v4774 = vsel %vm1044, %v4771, %v4773
        %v4775 = vrot.slane %v3717, 2
        %v4776 = vrot.slane %v3718, 2
        %v4777 = vsel %vm1044, %v4775, %v4776
        %v4778 = vrot.slane %v3719, 2
        %v4779 = vsel %vm1044, %v4776, %v4778
        %v4780 = vrot.slane %v3721, 2
        %v4781 = vrot.slane %v3722, 2
        %v4782 = vsel %vm1044, %v4780, %v4781
        %v4783 = vrot.slane %v3723, 2
        %v4784 = vsel %vm1044, %v4781, %v4783
        %v4785 = vrot.slane %v3725, 2
        %v4786 = vrot.slane %v3726, 2
        %v4787 = vsel %vm1044, %v4785, %v4786
        %v4788 = vrot.slane %v3727, 2
        %v4789 = vsel %vm1044, %v4786, %v4788
        %v4790 = vrot.slane %v3729, 2
        %v4791 = vrot.slane %v3730, 2
        %v4792 = vsel %vm1044, %v4790, %v4791
        %v4793 = vrot.slane %v3731, 2
        %v4794 = vsel %vm1044, %v4791, %v4793
        %v4795 = vrot.slane %v3733, 2
        %v4796 = vrot.slane %v3734, 2
        %v4797 = vsel %vm1044, %v4795, %v4796
        %v4798 = vrot.slane %v3735, 2
        %v4799 = vsel %vm1044, %v4796, %v4798
        %v4800 = vrot.slane %v3737, 2
        %v4801 = vrot.slane %v3738, 2
        %v4802 = vsel %vm1044, %v4800, %v4801
        %v4803 = vrot.slane %v3739, 2
        %v4804 = vsel %vm1044, %v4801, %v4803
        %v4805 = vrot.slane %v3741, 2
        %v4806 = vrot.slane %v3742, 2
        %v4807 = vsel %vm1044, %v4805, %v4806
        %v4808 = vrot.slane %v3743, 2
        %v4809 = vsel %vm1044, %v4806, %v4808
        %v4810 = vrot.slane %v3745, 2
        %v4811 = vrot.slane %v3746, 2
        %v4812 = vsel %vm1044, %v4810, %v4811
        %v4813 = vrot.slane %v3747, 2
        %v4814 = vsel %vm1044, %v4811, %v4813
        %v4815 = vrot.slane %v3749, 2
        %v4816 = vrot.slane %v3750, 2
        %v4817 = vsel %vm1044, %v4815, %v4816
        %v4818 = vrot.slane %v3751, 2
        %v4819 = vsel %vm1044, %v4816, %v4818
        %v4820 = vrot.slane %v3753, 2
        %v4821 = vrot.slane %v3754, 2
        %v4822 = vsel %vm1044, %v4820, %v4821
        %v4823 = vrot.slane %v3755, 2
        %v4824 = vsel %vm1044, %v4821, %v4823
        %v4825 = vrot.slane %v3757, 2
        %v4826 = vrot.slane %v3758, 2
        %v4827 = vsel %vm1044, %v4825, %v4826
        %v4828 = vrot.slane %v3759, 2
        %v4829 = vsel %vm1044, %v4826, %v4828
        %v4830 = vrot.slane %v3761, 2
        %v4831 = vrot.slane %v3762, 2
        %v4832 = vsel %vm1044, %v4830, %v4831
        %v4833 = vrot.slane %v3763, 2
        %v4834 = vsel %vm1044, %v4831, %v4833
        %v4835 = vrot.slane %v3765, 2
        %v4836 = vrot.slane %v3766, 2
        %v4837 = vsel %vm1044, %v4835, %v4836
        %v4838 = vrot.slane %v3767, 2
        %v4839 = vsel %vm1044, %v4836, %v4838
        %v4840 = vrot.slane %v3769, 2
        %v4841 = vrot.slane %v3770, 2
        %v4842 = vsel %vm1044, %v4840, %v4841
        %v4843 = vrot.slane %v3771, 2
        %v4844 = vsel %vm1044, %v4841, %v4843
        %4845 = vrot.lane.b32.xlu0 %v4765, 40
        %v4846 = vpop.permute.xlu0 %4845
        %4847 = vrot.lane.b32.xlu0 %v4767, 40
        %v4848 = vpop.permute.xlu0 %4847
        %4849 = vrot.lane.b32.xlu0 %v4769, 40
        %v4850 = vpop.permute.xlu0 %4849
        %4851 = vrot.lane.b32.xlu0 %v4770, 40
        %v4852 = vpop.permute.xlu0 %4851
        %4853 = vrot.lane.b32.xlu0 %v4772, 40
        %v4854 = vpop.permute.xlu0 %4853
        %4855 = vrot.lane.b32.xlu0 %v4774, 40
        %v4856 = vpop.permute.xlu0 %4855
        %4857 = vrot.lane.b32.xlu0 %v4775, 40
        %v4858 = vpop.permute.xlu0 %4857
        %4859 = vrot.lane.b32.xlu0 %v4777, 40
        %v4860 = vpop.permute.xlu0 %4859
        %4861 = vrot.lane.b32.xlu0 %v4779, 40
        %v4862 = vpop.permute.xlu0 %4861
        %4863 = vrot.lane.b32.xlu0 %v4780, 40
        %v4864 = vpop.permute.xlu0 %4863
        %4865 = vrot.lane.b32.xlu0 %v4782, 40
        %v4866 = vpop.permute.xlu0 %4865
        %4867 = vrot.lane.b32.xlu0 %v4784, 40
        %v4868 = vpop.permute.xlu0 %4867
        %4869 = vrot.lane.b32.xlu0 %v4785, 40
        %v4870 = vpop.permute.xlu0 %4869
        %4871 = vrot.lane.b32.xlu0 %v4787, 40
        %v4872 = vpop.permute.xlu0 %4871
        %4873 = vrot.lane.b32.xlu0 %v4789, 40
        %v4874 = vpop.permute.xlu0 %4873
        %4875 = vrot.lane.b32.xlu0 %v4790, 40
        %v4876 = vpop.permute.xlu0 %4875
        %4877 = vrot.lane.b32.xlu0 %v4792, 40
        %v4878 = vpop.permute.xlu0 %4877
        %4879 = vrot.lane.b32.xlu0 %v4794, 40
        %v4880 = vpop.permute.xlu0 %4879
        %4881 = vrot.lane.b32.xlu0 %v4795, 40
        %v4882 = vpop.permute.xlu0 %4881
        %4883 = vrot.lane.b32.xlu0 %v4797, 40
        %v4884 = vpop.permute.xlu0 %4883
        %4885 = vrot.lane.b32.xlu0 %v4799, 40
        %v4886 = vpop.permute.xlu0 %4885
        %4887 = vrot.lane.b32.xlu0 %v4800, 40
        %v4888 = vpop.permute.xlu0 %4887
        %4889 = vrot.lane.b32.xlu0 %v4802, 40
        %v4890 = vpop.permute.xlu0 %4889
        %4891 = vrot.lane.b32.xlu0 %v4804, 40
        %v4892 = vpop.permute.xlu0 %4891
        %4893 = vrot.lane.b32.xlu0 %v4805, 40
        %v4894 = vpop.permute.xlu0 %4893
        %4895 = vrot.lane.b32.xlu0 %v4807, 40
        %v4896 = vpop.permute.xlu0 %4895
        %4897 = vrot.lane.b32.xlu0 %v4809, 40
        %v4898 = vpop.permute.xlu0 %4897
        %4899 = vrot.lane.b32.xlu0 %v4810, 40
        %v4900 = vpop.permute.xlu0 %4899
        %4901 = vrot.lane.b32.xlu0 %v4812, 40
        %v4902 = vpop.permute.xlu0 %4901
        %4903 = vrot.lane.b32.xlu0 %v4814, 40
        %v4904 = vpop.permute.xlu0 %4903
        %4905 = vrot.lane.b32.xlu0 %v4815, 40
        %v4906 = vpop.permute.xlu0 %4905
        %4907 = vrot.lane.b32.xlu0 %v4817, 40
        %v4908 = vpop.permute.xlu0 %4907
        %4909 = vrot.lane.b32.xlu0 %v4819, 40
        %v4910 = vpop.permute.xlu0 %4909
        %4911 = vrot.lane.b32.xlu0 %v4820, 40
        %v4912 = vpop.permute.xlu0 %4911
        %4913 = vrot.lane.b32.xlu0 %v4822, 40
        %v4914 = vpop.permute.xlu0 %4913
        %4915 = vrot.lane.b32.xlu0 %v4824, 40
        %v4916 = vpop.permute.xlu0 %4915
        %4917 = vrot.lane.b32.xlu0 %v4825, 40
        %v4918 = vpop.permute.xlu0 %4917
        %4919 = vrot.lane.b32.xlu0 %v4827, 40
        %v4920 = vpop.permute.xlu0 %4919
        %4921 = vrot.lane.b32.xlu0 %v4829, 40
        %v4922 = vpop.permute.xlu0 %4921
        %4923 = vrot.lane.b32.xlu0 %v4830, 40
        %v4924 = vpop.permute.xlu0 %4923
        %4925 = vrot.lane.b32.xlu0 %v4832, 40
        %v4926 = vpop.permute.xlu0 %4925
        %4927 = vrot.lane.b32.xlu0 %v4834, 40
        %v4928 = vpop.permute.xlu0 %4927
        %4929 = vrot.lane.b32.xlu0 %v4835, 40
        %v4930 = vpop.permute.xlu0 %4929
        %4931 = vrot.lane.b32.xlu0 %v4837, 40
        %v4932 = vpop.permute.xlu0 %4931
        %4933 = vrot.lane.b32.xlu0 %v4839, 40
        %v4934 = vpop.permute.xlu0 %4933
        %4935 = vrot.lane.b32.xlu0 %v4840, 40
        %v4936 = vpop.permute.xlu0 %4935
        %4937 = vrot.lane.b32.xlu0 %v4842, 40
        %v4938 = vpop.permute.xlu0 %4937
        %4939 = vrot.lane.b32.xlu0 %v4844, 40
        %v4940 = vpop.permute.xlu0 %4939
        %5037 = vrot.lane.b32.xlu0 %v3837, 48
        %v5038 = vpop.permute.xlu0 %5037
        %5039 = vrot.lane.b32.xlu0 %v3838, 48
        %v5040 = vpop.permute.xlu0 %5039
        %5041 = vrot.lane.b32.xlu0 %v3839, 48
        %v5042 = vpop.permute.xlu0 %5041
        %5043 = vrot.lane.b32.xlu0 %v3841, 48
        %v5044 = vpop.permute.xlu0 %5043
        %5045 = vrot.lane.b32.xlu0 %v3842, 48
        %v5046 = vpop.permute.xlu0 %5045
        %5047 = vrot.lane.b32.xlu0 %v3843, 48
        %v5048 = vpop.permute.xlu0 %5047
        %5049 = vrot.lane.b32.xlu0 %v3845, 48
        %v5050 = vpop.permute.xlu0 %5049
        %5051 = vrot.lane.b32.xlu0 %v3846, 48
        %v5052 = vpop.permute.xlu0 %5051
        %5053 = vrot.lane.b32.xlu0 %v3847, 48
        %v5054 = vpop.permute.xlu0 %5053
        %5055 = vrot.lane.b32.xlu0 %v3849, 48
        %v5056 = vpop.permute.xlu0 %5055
        %5057 = vrot.lane.b32.xlu0 %v3850, 48
        %v5058 = vpop.permute.xlu0 %5057
        %5059 = vrot.lane.b32.xlu0 %v3851, 48
        %v5060 = vpop.permute.xlu0 %5059
        %5061 = vrot.lane.b32.xlu0 %v3853, 48
        %v5062 = vpop.permute.xlu0 %5061
        %5063 = vrot.lane.b32.xlu0 %v3854, 48
        %v5064 = vpop.permute.xlu0 %5063
        %5065 = vrot.lane.b32.xlu0 %v3855, 48
        %v5066 = vpop.permute.xlu0 %5065
        %5067 = vrot.lane.b32.xlu0 %v3857, 48
        %v5068 = vpop.permute.xlu0 %5067
        %5069 = vrot.lane.b32.xlu0 %v3858, 48
        %v5070 = vpop.permute.xlu0 %5069
        %5071 = vrot.lane.b32.xlu0 %v3859, 48
        %v5072 = vpop.permute.xlu0 %5071
        %5073 = vrot.lane.b32.xlu0 %v3861, 48
        %v5074 = vpop.permute.xlu0 %5073
        %5075 = vrot.lane.b32.xlu0 %v3862, 48
        %v5076 = vpop.permute.xlu0 %5075
        %5077 = vrot.lane.b32.xlu0 %v3863, 48
        %v5078 = vpop.permute.xlu0 %5077
        %5079 = vrot.lane.b32.xlu0 %v3865, 48
        %v5080 = vpop.permute.xlu0 %5079
        %5081 = vrot.lane.b32.xlu0 %v3866, 48
        %v5082 = vpop.permute.xlu0 %5081
        %5083 = vrot.lane.b32.xlu0 %v3867, 48
        %v5084 = vpop.permute.xlu0 %5083
        %5085 = vrot.lane.b32.xlu0 %v3869, 48
        %v5086 = vpop.permute.xlu0 %5085
        %5087 = vrot.lane.b32.xlu0 %v3870, 48
        %v5088 = vpop.permute.xlu0 %5087
        %5089 = vrot.lane.b32.xlu0 %v3871, 48
        %v5090 = vpop.permute.xlu0 %5089
        %5091 = vrot.lane.b32.xlu0 %v3873, 48
        %v5092 = vpop.permute.xlu0 %5091
        %5093 = vrot.lane.b32.xlu0 %v3874, 48
        %v5094 = vpop.permute.xlu0 %5093
        %5095 = vrot.lane.b32.xlu0 %v3875, 48
        %v5096 = vpop.permute.xlu0 %5095
        %5097 = vrot.lane.b32.xlu0 %v3877, 48
        %v5098 = vpop.permute.xlu0 %5097
        %5099 = vrot.lane.b32.xlu0 %v3878, 48
        %v5100 = vpop.permute.xlu0 %5099
        %5101 = vrot.lane.b32.xlu0 %v3879, 48
        %v5102 = vpop.permute.xlu0 %5101
        %5103 = vrot.lane.b32.xlu0 %v3881, 48
        %v5104 = vpop.permute.xlu0 %5103
        %5105 = vrot.lane.b32.xlu0 %v3882, 48
        %v5106 = vpop.permute.xlu0 %5105
        %5107 = vrot.lane.b32.xlu0 %v3883, 48
        %v5108 = vpop.permute.xlu0 %5107
        %5109 = vrot.lane.b32.xlu0 %v3885, 48
        %v5110 = vpop.permute.xlu0 %5109
        %5111 = vrot.lane.b32.xlu0 %v3886, 48
        %v5112 = vpop.permute.xlu0 %5111
        %5113 = vrot.lane.b32.xlu0 %v3887, 48
        %v5114 = vpop.permute.xlu0 %5113
        %5115 = vrot.lane.b32.xlu0 %v3889, 48
        %v5116 = vpop.permute.xlu0 %5115
        %5117 = vrot.lane.b32.xlu0 %v3890, 48
        %v5118 = vpop.permute.xlu0 %5117
        %5119 = vrot.lane.b32.xlu0 %v3891, 48
        %v5120 = vpop.permute.xlu0 %5119
        %5121 = vrot.lane.b32.xlu0 %v3893, 48
        %v5122 = vpop.permute.xlu0 %5121
        %5123 = vrot.lane.b32.xlu0 %v3894, 48
        %v5124 = vpop.permute.xlu0 %5123
        %5125 = vrot.lane.b32.xlu0 %v3895, 48
        %v5126 = vpop.permute.xlu0 %5125
        %5127 = vrot.lane.b32.xlu0 %v3897, 48
        %v5128 = vpop.permute.xlu0 %5127
        %5129 = vrot.lane.b32.xlu0 %v3898, 48
        %v5130 = vpop.permute.xlu0 %5129
        %5131 = vrot.lane.b32.xlu0 %v3899, 48
        %v5132 = vpop.permute.xlu0 %5131
        %v5181 = vrot.slane %v3838, 1
        %v5182 = vrot.slane %v3839, 1
        %v5183 = vsel %vm835, %v5181, %v5182
        %v5184 = vrot.slane %v3842, 1
        %v5185 = vrot.slane %v3843, 1
        %v5186 = vsel %vm835, %v5184, %v5185
        %v5187 = vrot.slane %v3846, 1
        %v5188 = vrot.slane %v3847, 1
        %v5189 = vsel %vm835, %v5187, %v5188
        %v5190 = vrot.slane %v3850, 1
        %v5191 = vrot.slane %v3851, 1
        %v5192 = vsel %vm835, %v5190, %v5191
        %v5193 = vrot.slane %v3854, 1
        %v5194 = vrot.slane %v3855, 1
        %v5195 = vsel %vm835, %v5193, %v5194
        %v5196 = vrot.slane %v3858, 1
        %v5197 = vrot.slane %v3859, 1
        %v5198 = vsel %vm835, %v5196, %v5197
        %v5199 = vrot.slane %v3862, 1
        %v5200 = vrot.slane %v3863, 1
        %v5201 = vsel %vm835, %v5199, %v5200
        %v5202 = vrot.slane %v3866, 1
        %v5203 = vrot.slane %v3867, 1
        %v5204 = vsel %vm835, %v5202, %v5203
        %v5205 = vrot.slane %v3870, 1
        %v5206 = vrot.slane %v3871, 1
        %v5207 = vsel %vm835, %v5205, %v5206
        %v5208 = vrot.slane %v3874, 1
        %v5209 = vrot.slane %v3875, 1
        %v5210 = vsel %vm835, %v5208, %v5209
        %v5211 = vrot.slane %v3878, 1
        %v5212 = vrot.slane %v3879, 1
        %v5213 = vsel %vm835, %v5211, %v5212
        %v5214 = vrot.slane %v3882, 1
        %v5215 = vrot.slane %v3883, 1
        %v5216 = vsel %vm835, %v5214, %v5215
        %v5217 = vrot.slane %v3886, 1
        %v5218 = vrot.slane %v3887, 1
        %v5219 = vsel %vm835, %v5217, %v5218
        %v5220 = vrot.slane %v3890, 1
        %v5221 = vrot.slane %v3891, 1
        %v5222 = vsel %vm835, %v5220, %v5221
        %v5223 = vrot.slane %v3894, 1
        %v5224 = vrot.slane %v3895, 1
        %v5225 = vsel %vm835, %v5223, %v5224
        %v5226 = vrot.slane %v3898, 1
        %v5227 = vrot.slane %v3899, 1
        %v5228 = vsel %vm835, %v5226, %v5227
        %5229 = vrot.lane.b32.xlu0 %v5181, 56
        %v5230 = vpop.permute.xlu0 %5229
        %5231 = vrot.lane.b32.xlu0 %v5183, 56
        %v5232 = vpop.permute.xlu0 %5231
        %5233 = vrot.lane.b32.xlu0 %v5182, 56
        %v5234 = vpop.permute.xlu0 %5233
        %5235 = vrot.lane.b32.xlu0 %v5184, 56
        %v5236 = vpop.permute.xlu0 %5235
        %5237 = vrot.lane.b32.xlu0 %v5186, 56
        %v5238 = vpop.permute.xlu0 %5237
        %5239 = vrot.lane.b32.xlu0 %v5185, 56
        %v5240 = vpop.permute.xlu0 %5239
        %5241 = vrot.lane.b32.xlu0 %v5187, 56
        %v5242 = vpop.permute.xlu0 %5241
        %5243 = vrot.lane.b32.xlu0 %v5189, 56
        %v5244 = vpop.permute.xlu0 %5243
        %5245 = vrot.lane.b32.xlu0 %v5188, 56
        %v5246 = vpop.permute.xlu0 %5245
        %5247 = vrot.lane.b32.xlu0 %v5190, 56
        %v5248 = vpop.permute.xlu0 %5247
        %5249 = vrot.lane.b32.xlu0 %v5192, 56
        %v5250 = vpop.permute.xlu0 %5249
        %5251 = vrot.lane.b32.xlu0 %v5191, 56
        %v5252 = vpop.permute.xlu0 %5251
        %5253 = vrot.lane.b32.xlu0 %v5193, 56
        %v5254 = vpop.permute.xlu0 %5253
        %5255 = vrot.lane.b32.xlu0 %v5195, 56
        %v5256 = vpop.permute.xlu0 %5255
        %5257 = vrot.lane.b32.xlu0 %v5194, 56
        %v5258 = vpop.permute.xlu0 %5257
        %5259 = vrot.lane.b32.xlu0 %v5196, 56
        %v5260 = vpop.permute.xlu0 %5259
        %5261 = vrot.lane.b32.xlu0 %v5198, 56
        %v5262 = vpop.permute.xlu0 %5261
        %5263 = vrot.lane.b32.xlu0 %v5197, 56
        %v5264 = vpop.permute.xlu0 %5263
        %5265 = vrot.lane.b32.xlu0 %v5199, 56
        %v5266 = vpop.permute.xlu0 %5265
        %5267 = vrot.lane.b32.xlu0 %v5201, 56
        %v5268 = vpop.permute.xlu0 %5267
        %5269 = vrot.lane.b32.xlu0 %v5200, 56
        %v5270 = vpop.permute.xlu0 %5269
        %5271 = vrot.lane.b32.xlu0 %v5202, 56
        %v5272 = vpop.permute.xlu0 %5271
        %5273 = vrot.lane.b32.xlu0 %v5204, 56
        %v5274 = vpop.permute.xlu0 %5273
        %5275 = vrot.lane.b32.xlu0 %v5203, 56
        %v5276 = vpop.permute.xlu0 %5275
        %5277 = vrot.lane.b32.xlu0 %v5205, 56
        %v5278 = vpop.permute.xlu0 %5277
        %5279 = vrot.lane.b32.xlu0 %v5207, 56
        %v5280 = vpop.permute.xlu0 %5279
        %5281 = vrot.lane.b32.xlu0 %v5206, 56
        %v5282 = vpop.permute.xlu0 %5281
        %5283 = vrot.lane.b32.xlu0 %v5208, 56
        %v5284 = vpop.permute.xlu0 %5283
        %5285 = vrot.lane.b32.xlu0 %v5210, 56
        %v5286 = vpop.permute.xlu0 %5285
        %5287 = vrot.lane.b32.xlu0 %v5209, 56
        %v5288 = vpop.permute.xlu0 %5287
        %5289 = vrot.lane.b32.xlu0 %v5211, 56
        %v5290 = vpop.permute.xlu0 %5289
        %5291 = vrot.lane.b32.xlu0 %v5213, 56
        %v5292 = vpop.permute.xlu0 %5291
        %5293 = vrot.lane.b32.xlu0 %v5212, 56
        %v5294 = vpop.permute.xlu0 %5293
        %5295 = vrot.lane.b32.xlu0 %v5214, 56
        %v5296 = vpop.permute.xlu0 %5295
        %5297 = vrot.lane.b32.xlu0 %v5216, 56
        %v5298 = vpop.permute.xlu0 %5297
        %5299 = vrot.lane.b32.xlu0 %v5215, 56
        %v5300 = vpop.permute.xlu0 %5299
        %5301 = vrot.lane.b32.xlu0 %v5217, 56
        %v5302 = vpop.permute.xlu0 %5301
        %5303 = vrot.lane.b32.xlu0 %v5219, 56
        %v5304 = vpop.permute.xlu0 %5303
        %5305 = vrot.lane.b32.xlu0 %v5218, 56
        %v5306 = vpop.permute.xlu0 %5305
        %5307 = vrot.lane.b32.xlu0 %v5220, 56
        %v5308 = vpop.permute.xlu0 %5307
        %5309 = vrot.lane.b32.xlu0 %v5222, 56
        %v5310 = vpop.permute.xlu0 %5309
        %5311 = vrot.lane.b32.xlu0 %v5221, 56
        %v5312 = vpop.permute.xlu0 %5311
        %5313 = vrot.lane.b32.xlu0 %v5223, 56
        %v5314 = vpop.permute.xlu0 %5313
        %5315 = vrot.lane.b32.xlu0 %v5225, 56
        %v5316 = vpop.permute.xlu0 %5315
        %5317 = vrot.lane.b32.xlu0 %v5224, 56
        %v5318 = vpop.permute.xlu0 %5317
        %5319 = vrot.lane.b32.xlu0 %v5226, 56
        %v5320 = vpop.permute.xlu0 %5319
        %5321 = vrot.lane.b32.xlu0 %v5228, 56
        %v5322 = vpop.permute.xlu0 %5321
        %5323 = vrot.lane.b32.xlu0 %v5227, 56
        %v5324 = vpop.permute.xlu0 %5323
        %v5389 = vrot.slane %v3838, 2
        %v5390 = vrot.slane %v3839, 2
        %v5391 = vsel %vm1044, %v5389, %v5390
        %v5392 = vrot.slane %v3840, 2
        %v5393 = vsel %vm1044, %v5390, %v5392
        %v5394 = vrot.slane %v3842, 2
        %v5395 = vrot.slane %v3843, 2
        %v5396 = vsel %vm1044, %v5394, %v5395
        %v5397 = vrot.slane %v3844, 2
        %v5398 = vsel %vm1044, %v5395, %v5397
        %v5399 = vrot.slane %v3846, 2
        %v5400 = vrot.slane %v3847, 2
        %v5401 = vsel %vm1044, %v5399, %v5400
        %v5402 = vrot.slane %v3848, 2
        %v5403 = vsel %vm1044, %v5400, %v5402
        %v5404 = vrot.slane %v3850, 2
        %v5405 = vrot.slane %v3851, 2
        %v5406 = vsel %vm1044, %v5404, %v5405
        %v5407 = vrot.slane %v3852, 2
        %v5408 = vsel %vm1044, %v5405, %v5407
        %v5409 = vrot.slane %v3854, 2
        %v5410 = vrot.slane %v3855, 2
        %v5411 = vsel %vm1044, %v5409, %v5410
        %v5412 = vrot.slane %v3856, 2
        %v5413 = vsel %vm1044, %v5410, %v5412
        %v5414 = vrot.slane %v3858, 2
        %v5415 = vrot.slane %v3859, 2
        %v5416 = vsel %vm1044, %v5414, %v5415
        %v5417 = vrot.slane %v3860, 2
        %v5418 = vsel %vm1044, %v5415, %v5417
        %v5419 = vrot.slane %v3862, 2
        %v5420 = vrot.slane %v3863, 2
        %v5421 = vsel %vm1044, %v5419, %v5420
        %v5422 = vrot.slane %v3864, 2
        %v5423 = vsel %vm1044, %v5420, %v5422
        %v5424 = vrot.slane %v3866, 2
        %v5425 = vrot.slane %v3867, 2
        %v5426 = vsel %vm1044, %v5424, %v5425
        %v5427 = vrot.slane %v3868, 2
        %v5428 = vsel %vm1044, %v5425, %v5427
        %v5429 = vrot.slane %v3870, 2
        %v5430 = vrot.slane %v3871, 2
        %v5431 = vsel %vm1044, %v5429, %v5430
        %v5432 = vrot.slane %v3872, 2
        %v5433 = vsel %vm1044, %v5430, %v5432
        %v5434 = vrot.slane %v3874, 2
        %v5435 = vrot.slane %v3875, 2
        %v5436 = vsel %vm1044, %v5434, %v5435
        %v5437 = vrot.slane %v3876, 2
        %v5438 = vsel %vm1044, %v5435, %v5437
        %v5439 = vrot.slane %v3878, 2
        %v5440 = vrot.slane %v3879, 2
        %v5441 = vsel %vm1044, %v5439, %v5440
        %v5442 = vrot.slane %v3880, 2
        %v5443 = vsel %vm1044, %v5440, %v5442
        %v5444 = vrot.slane %v3882, 2
        %v5445 = vrot.slane %v3883, 2
        %v5446 = vsel %vm1044, %v5444, %v5445
        %v5447 = vrot.slane %v3884, 2
        %v5448 = vsel %vm1044, %v5445, %v5447
        %v5449 = vrot.slane %v3886, 2
        %v5450 = vrot.slane %v3887, 2
        %v5451 = vsel %vm1044, %v5449, %v5450
        %v5452 = vrot.slane %v3888, 2
        %v5453 = vsel %vm1044, %v5450, %v5452
        %v5454 = vrot.slane %v3890, 2
        %v5455 = vrot.slane %v3891, 2
        %v5456 = vsel %vm1044, %v5454, %v5455
        %v5457 = vrot.slane %v3892, 2
        %v5458 = vsel %vm1044, %v5455, %v5457
        %v5459 = vrot.slane %v3894, 2
        %v5460 = vrot.slane %v3895, 2
        %v5461 = vsel %vm1044, %v5459, %v5460
        %v5462 = vrot.slane %v3896, 2
        %v5463 = vsel %vm1044, %v5460, %v5462
        %v5464 = vrot.slane %v3898, 2
        %v5465 = vrot.slane %v3899, 2
        %v5466 = vsel %vm1044, %v5464, %v5465
        %v5467 = vrot.slane %v3900, 2
        %v5468 = vsel %vm1044, %v5465, %v5467
        %5469 = vrot.lane.b32.xlu0 %v5389, 64
        %v5470 = vpop.permute.xlu0 %5469
        %5471 = vrot.lane.b32.xlu0 %v5391, 64
        %v5472 = vpop.permute.xlu0 %5471
        %5473 = vrot.lane.b32.xlu0 %v5393, 64
        %v5474 = vpop.permute.xlu0 %5473
        %5475 = vrot.lane.b32.xlu0 %v5394, 64
        %v5476 = vpop.permute.xlu0 %5475
        %5477 = vrot.lane.b32.xlu0 %v5396, 64
        %v5478 = vpop.permute.xlu0 %5477
        %5479 = vrot.lane.b32.xlu0 %v5398, 64
        %v5480 = vpop.permute.xlu0 %5479
        %5481 = vrot.lane.b32.xlu0 %v5399, 64
        %v5482 = vpop.permute.xlu0 %5481
        %5483 = vrot.lane.b32.xlu0 %v5401, 64
        %v5484 = vpop.permute.xlu0 %5483
        %5485 = vrot.lane.b32.xlu0 %v5403, 64
        %v5486 = vpop.permute.xlu0 %5485
        %5487 = vrot.lane.b32.xlu0 %v5404, 64
        %v5488 = vpop.permute.xlu0 %5487
        %5489 = vrot.lane.b32.xlu0 %v5406, 64
        %v5490 = vpop.permute.xlu0 %5489
        %5491 = vrot.lane.b32.xlu0 %v5408, 64
        %v5492 = vpop.permute.xlu0 %5491
        %5493 = vrot.lane.b32.xlu0 %v5409, 64
        %v5494 = vpop.permute.xlu0 %5493
        %5495 = vrot.lane.b32.xlu0 %v5411, 64
        %v5496 = vpop.permute.xlu0 %5495
        %5497 = vrot.lane.b32.xlu0 %v5413, 64
        %v5498 = vpop.permute.xlu0 %5497
        %5499 = vrot.lane.b32.xlu0 %v5414, 64
        %v5500 = vpop.permute.xlu0 %5499
        %5501 = vrot.lane.b32.xlu0 %v5416, 64
        %v5502 = vpop.permute.xlu0 %5501
        %5503 = vrot.lane.b32.xlu0 %v5418, 64
        %v5504 = vpop.permute.xlu0 %5503
        %5505 = vrot.lane.b32.xlu0 %v5419, 64
        %v5506 = vpop.permute.xlu0 %5505
        %5507 = vrot.lane.b32.xlu0 %v5421, 64
        %v5508 = vpop.permute.xlu0 %5507
        %5509 = vrot.lane.b32.xlu0 %v5423, 64
        %v5510 = vpop.permute.xlu0 %5509
        %5511 = vrot.lane.b32.xlu0 %v5424, 64
        %v5512 = vpop.permute.xlu0 %5511
        %5513 = vrot.lane.b32.xlu0 %v5426, 64
        %v5514 = vpop.permute.xlu0 %5513
        %5515 = vrot.lane.b32.xlu0 %v5428, 64
        %v5516 = vpop.permute.xlu0 %5515
        %5517 = vrot.lane.b32.xlu0 %v5429, 64
        %v5518 = vpop.permute.xlu0 %5517
        %5519 = vrot.lane.b32.xlu0 %v5431, 64
        %v5520 = vpop.permute.xlu0 %5519
        %5521 = vrot.lane.b32.xlu0 %v5433, 64
        %v5522 = vpop.permute.xlu0 %5521
        %5523 = vrot.lane.b32.xlu0 %v5434, 64
        %v5524 = vpop.permute.xlu0 %5523
        %5525 = vrot.lane.b32.xlu0 %v5436, 64
        %v5526 = vpop.permute.xlu0 %5525
        %5527 = vrot.lane.b32.xlu0 %v5438, 64
        %v5528 = vpop.permute.xlu0 %5527
        %5529 = vrot.lane.b32.xlu0 %v5439, 64
        %v5530 = vpop.permute.xlu0 %5529
        %5531 = vrot.lane.b32.xlu0 %v5441, 64
        %v5532 = vpop.permute.xlu0 %5531
        %5533 = vrot.lane.b32.xlu0 %v5443, 64
        %v5534 = vpop.permute.xlu0 %5533
        %5535 = vrot.lane.b32.xlu0 %v5444, 64
        %v5536 = vpop.permute.xlu0 %5535
        %5537 = vrot.lane.b32.xlu0 %v5446, 64
        %v5538 = vpop.permute.xlu0 %5537
        %5539 = vrot.lane.b32.xlu0 %v5448, 64
        %v5540 = vpop.permute.xlu0 %5539
        %5541 = vrot.lane.b32.xlu0 %v5449, 64
        %v5542 = vpop.permute.xlu0 %5541
        %5543 = vrot.lane.b32.xlu0 %v5451, 64
        %v5544 = vpop.permute.xlu0 %5543
        %5545 = vrot.lane.b32.xlu0 %v5453, 64
        %v5546 = vpop.permute.xlu0 %5545
        %5547 = vrot.lane.b32.xlu0 %v5454, 64
        %v5548 = vpop.permute.xlu0 %5547
        %5549 = vrot.lane.b32.xlu0 %v5456, 64
        %v5550 = vpop.permute.xlu0 %5549
        %5551 = vrot.lane.b32.xlu0 %v5458, 64
        %v5552 = vpop.permute.xlu0 %5551
        %5553 = vrot.lane.b32.xlu0 %v5459, 64
        %v5554 = vpop.permute.xlu0 %5553
        %5555 = vrot.lane.b32.xlu0 %v5461, 64
        %v5556 = vpop.permute.xlu0 %5555
        %5557 = vrot.lane.b32.xlu0 %v5463, 64
        %v5558 = vpop.permute.xlu0 %5557
        %5559 = vrot.lane.b32.xlu0 %v5464, 64
        %v5560 = vpop.permute.xlu0 %5559
        %5561 = vrot.lane.b32.xlu0 %v5466, 64
        %v5562 = vpop.permute.xlu0 %5561
        %5563 = vrot.lane.b32.xlu0 %v5468, 64
        %v5564 = vpop.permute.xlu0 %5563
        %vm5613 = vcmask 64512
        %v5614 = vsel %vm5613, %v3580, %v3982
        %v5615 = vsel %vm5613, %v3581, %v3984
        %v5616 = vsel %vm5613, %v3582, %v3986
        %v5617 = vsel %vm5613, %v3584, %v3988
        %v5618 = vsel %vm5613, %v3585, %v3990
        %v5619 = vsel %vm5613, %v3586, %v3992
        %v5620 = vsel %vm5613, %v3588, %v3994
        %v5621 = vsel %vm5613, %v3589, %v3996
        %v5622 = vsel %vm5613, %v3590, %v3998
        %v5623 = vsel %vm5613, %v3592, %v4000
        %v5624 = vsel %vm5613, %v3593, %v4002
        %v5625 = vsel %vm5613, %v3594, %v4004
        %v5626 = vsel %vm5613, %v3596, %v4006
        %v5627 = vsel %vm5613, %v3597, %v4008
        %v5628 = vsel %vm5613, %v3598, %v4010
        %v5629 = vsel %vm5613, %v3600, %v4012
        %v5630 = vsel %vm5613, %v3601, %v4014
        %v5631 = vsel %vm5613, %v3602, %v4016
        %v5632 = vsel %vm5613, %v3604, %v4018
        %v5633 = vsel %vm5613, %v3605, %v4020
        %v5634 = vsel %vm5613, %v3606, %v4022
        %v5635 = vsel %vm5613, %v3608, %v4024
        %v5636 = vsel %vm5613, %v3609, %v4026
        %v5637 = vsel %vm5613, %v3610, %v4028
        %v5638 = vsel %vm5613, %v3612, %v4030
        %v5639 = vsel %vm5613, %v3613, %v4032
        %v5640 = vsel %vm5613, %v3614, %v4034
        %v5641 = vsel %vm5613, %v3616, %v4036
        %v5642 = vsel %vm5613, %v3617, %v4038
        %v5643 = vsel %vm5613, %v3618, %v4040
        %v5644 = vsel %vm5613, %v3620, %v4042
        %v5645 = vsel %vm5613, %v3621, %v4044
        %v5646 = vsel %vm5613, %v3622, %v4046
        %v5647 = vsel %vm5613, %v3624, %v4048
        %v5648 = vsel %vm5613, %v3625, %v4050
        %v5649 = vsel %vm5613, %v3626, %v4052
        %v5650 = vsel %vm5613, %v3628, %v4054
        %v5651 = vsel %vm5613, %v3629, %v4056
        %v5652 = vsel %vm5613, %v3630, %v4058
        %v5653 = vsel %vm5613, %v3632, %v4060
        %v5654 = vsel %vm5613, %v3633, %v4062
        %v5655 = vsel %vm5613, %v3634, %v4064
        %v5656 = vsel %vm5613, %v3636, %v4066
        %v5657 = vsel %vm5613, %v3637, %v4068
        %v5658 = vsel %vm5613, %v3638, %v4070
        %v5659 = vsel %vm5613, %v3640, %v4072
        %v5660 = vsel %vm5613, %v3641, %v4074
        %v5661 = vsel %vm5613, %v3642, %v4076
        %vm5662 = vcmask 130048
        %v5663 = vsel %vm5662, %v5614, %v4222
        %v5664 = vsel %vm5662, %v5615, %v4224
        %v5665 = vsel %vm5662, %v5616, %v4226
        %v5666 = vsel %vm5662, %v5617, %v4228
        %v5667 = vsel %vm5662, %v5618, %v4230
        %v5668 = vsel %vm5662, %v5619, %v4232
        %v5669 = vsel %vm5662, %v5620, %v4234
        %v5670 = vsel %vm5662, %v5621, %v4236
        %v5671 = vsel %vm5662, %v5622, %v4238
        %v5672 = vsel %vm5662, %v5623, %v4240
        %v5673 = vsel %vm5662, %v5624, %v4242
        %v5674 = vsel %vm5662, %v5625, %v4244
        %v5675 = vsel %vm5662, %v5626, %v4246
        %v5676 = vsel %vm5662, %v5627, %v4248
        %v5677 = vsel %vm5662, %v5628, %v4250
        %v5678 = vsel %vm5662, %v5629, %v4252
        %v5679 = vsel %vm5662, %v5630, %v4254
        %v5680 = vsel %vm5662, %v5631, %v4256
        %v5681 = vsel %vm5662, %v5632, %v4258
        %v5682 = vsel %vm5662, %v5633, %v4260
        %v5683 = vsel %vm5662, %v5634, %v4262
        %v5684 = vsel %vm5662, %v5635, %v4264
        %v5685 = vsel %vm5662, %v5636, %v4266
        %v5686 = vsel %vm5662, %v5637, %v4268
        %v5687 = vsel %vm5662, %v5638, %v4270
        %v5688 = vsel %vm5662, %v5639, %v4272
        %v5689 = vsel %vm5662, %v5640, %v4274
        %v5690 = vsel %vm5662, %v5641, %v4276
        %v5691 = vsel %vm5662, %v5642, %v4278
        %v5692 = vsel %vm5662, %v5643, %v4280
        %v5693 = vsel %vm5662, %v5644, %v4282
        %v5694 = vsel %vm5662, %v5645, %v4284
        %v5695 = vsel %vm5662, %v5646, %v4286
        %v5696 = vsel %vm5662, %v5647, %v4288
        %v5697 = vsel %vm5662, %v5648, %v4290
        %v5698 = vsel %vm5662, %v5649, %v4292
        %v5699 = vsel %vm5662, %v5650, %v4294
        %v5700 = vsel %vm5662, %v5651, %v4296
        %v5701 = vsel %vm5662, %v5652, %v4298
        %v5702 = vsel %vm5662, %v5653, %v4300
        %v5703 = vsel %vm5662, %v5654, %v4302
        %v5704 = vsel %vm5662, %v5655, %v4304
        %v5705 = vsel %vm5662, %v5656, %v4306
        %v5706 = vsel %vm5662, %v5657, %v4308
        %v5707 = vsel %vm5662, %v5658, %v4310
        %v5708 = vsel %vm5662, %v5659, %v4312
        %v5709 = vsel %vm5662, %v5660, %v4314
        %v5710 = vsel %vm5662, %v5661, %v4316
        %v5711 = vsel %vm2860, %v5663, %v4414
        %v5712 = vsel %vm2860, %v5664, %v4416
        %v5713 = vsel %vm2860, %v5665, %v4418
        %v5714 = vsel %vm2860, %v5666, %v4420
        %v5715 = vsel %vm2860, %v5667, %v4422
        %v5716 = vsel %vm2860, %v5668, %v4424
        %v5717 = vsel %vm2860, %v5669, %v4426
        %v5718 = vsel %vm2860, %v5670, %v4428
        %v5719 = vsel %vm2860, %v5671, %v4430
        %v5720 = vsel %vm2860, %v5672, %v4432
        %v5721 = vsel %vm2860, %v5673, %v4434
        %v5722 = vsel %vm2860, %v5674, %v4436
        %v5723 = vsel %vm2860, %v5675, %v4438
        %v5724 = vsel %vm2860, %v5676, %v4440
        %v5725 = vsel %vm2860, %v5677, %v4442
        %v5726 = vsel %vm2860, %v5678, %v4444
        %v5727 = vsel %vm2860, %v5679, %v4446
        %v5728 = vsel %vm2860, %v5680, %v4448
        %v5729 = vsel %vm2860, %v5681, %v4450
        %v5730 = vsel %vm2860, %v5682, %v4452
        %v5731 = vsel %vm2860, %v5683, %v4454
        %v5732 = vsel %vm2860, %v5684, %v4456
        %v5733 = vsel %vm2860, %v5685, %v4458
        %v5734 = vsel %vm2860, %v5686, %v4460
        %v5735 = vsel %vm2860, %v5687, %v4462
        %v5736 = vsel %vm2860, %v5688, %v4464
        %v5737 = vsel %vm2860, %v5689, %v4466
        %v5738 = vsel %vm2860, %v5690, %v4468
        %v5739 = vsel %vm2860, %v5691, %v4470
        %v5740 = vsel %vm2860, %v5692, %v4472
        %v5741 = vsel %vm2860, %v5693, %v4474
        %v5742 = vsel %vm2860, %v5694, %v4476
        %v5743 = vsel %vm2860, %v5695, %v4478
        %v5744 = vsel %vm2860, %v5696, %v4480
        %v5745 = vsel %vm2860, %v5697, %v4482
        %v5746 = vsel %vm2860, %v5698, %v4484
        %v5747 = vsel %vm2860, %v5699, %v4486
        %v5748 = vsel %vm2860, %v5700, %v4488
        %v5749 = vsel %vm2860, %v5701, %v4490
        %v5750 = vsel %vm2860, %v5702, %v4492
        %v5751 = vsel %vm2860, %v5703, %v4494
        %v5752 = vsel %vm2860, %v5704, %v4496
        %v5753 = vsel %vm2860, %v5705, %v4498
        %v5754 = vsel %vm2860, %v5706, %v4500
        %v5755 = vsel %vm2860, %v5707, %v4502
        %v5756 = vsel %vm2860, %v5708, %v4504
        %v5757 = vsel %vm2860, %v5709, %v4506
        %v5758 = vsel %vm2860, %v5710, %v4508
        %vm5759 = vcmask 261120
        %v5760 = vsel %vm5759, %v5711, %v4606
        %v5761 = vsel %vm5759, %v5712, %v4608
        %v5762 = vsel %vm5759, %v5713, %v4610
        %v5763 = vsel %vm5759, %v5714, %v4612
        %v5764 = vsel %vm5759, %v5715, %v4614
        %v5765 = vsel %vm5759, %v5716, %v4616
        %v5766 = vsel %vm5759, %v5717, %v4618
        %v5767 = vsel %vm5759, %v5718, %v4620
        %v5768 = vsel %vm5759, %v5719, %v4622
        %v5769 = vsel %vm5759, %v5720, %v4624
        %v5770 = vsel %vm5759, %v5721, %v4626
        %v5771 = vsel %vm5759, %v5722, %v4628
        %v5772 = vsel %vm5759, %v5723, %v4630
        %v5773 = vsel %vm5759, %v5724, %v4632
        %v5774 = vsel %vm5759, %v5725, %v4634
        %v5775 = vsel %vm5759, %v5726, %v4636
        %v5776 = vsel %vm5759, %v5727, %v4638
        %v5777 = vsel %vm5759, %v5728, %v4640
        %v5778 = vsel %vm5759, %v5729, %v4642
        %v5779 = vsel %vm5759, %v5730, %v4644
        %v5780 = vsel %vm5759, %v5731, %v4646
        %v5781 = vsel %vm5759, %v5732, %v4648
        %v5782 = vsel %vm5759, %v5733, %v4650
        %v5783 = vsel %vm5759, %v5734, %v4652
        %v5784 = vsel %vm5759, %v5735, %v4654
        %v5785 = vsel %vm5759, %v5736, %v4656
        %v5786 = vsel %vm5759, %v5737, %v4658
        %v5787 = vsel %vm5759, %v5738, %v4660
        %v5788 = vsel %vm5759, %v5739, %v4662
        %v5789 = vsel %vm5759, %v5740, %v4664
        %v5790 = vsel %vm5759, %v5741, %v4666
        %v5791 = vsel %vm5759, %v5742, %v4668
        %v5792 = vsel %vm5759, %v5743, %v4670
        %v5793 = vsel %vm5759, %v5744, %v4672
        %v5794 = vsel %vm5759, %v5745, %v4674
        %v5795 = vsel %vm5759, %v5746, %v4676
        %v5796 = vsel %vm5759, %v5747, %v4678
        %v5797 = vsel %vm5759, %v5748, %v4680
        %v5798 = vsel %vm5759, %v5749, %v4682
        %v5799 = vsel %vm5759, %v5750, %v4684
        %v5800 = vsel %vm5759, %v5751, %v4686
        %v5801 = vsel %vm5759, %v5752, %v4688
        %v5802 = vsel %vm5759, %v5753, %v4690
        %v5803 = vsel %vm5759, %v5754, %v4692
        %v5804 = vsel %vm5759, %v5755, %v4694
        %v5805 = vsel %vm5759, %v5756, %v4696
        %v5806 = vsel %vm5759, %v5757, %v4698
        %v5807 = vsel %vm5759, %v5758, %v4700
        %vm5808 = vcmask 326656
        %v5809 = vsel %vm5808, %v5760, %v4846
        %v5810 = vsel %vm5808, %v5761, %v4848
        %v5811 = vsel %vm5808, %v5762, %v4850
        %v5812 = vsel %vm5808, %v5763, %v4852
        %v5813 = vsel %vm5808, %v5764, %v4854
        %v5814 = vsel %vm5808, %v5765, %v4856
        %v5815 = vsel %vm5808, %v5766, %v4858
        %v5816 = vsel %vm5808, %v5767, %v4860
        %v5817 = vsel %vm5808, %v5768, %v4862
        %v5818 = vsel %vm5808, %v5769, %v4864
        %v5819 = vsel %vm5808, %v5770, %v4866
        %v5820 = vsel %vm5808, %v5771, %v4868
        %v5821 = vsel %vm5808, %v5772, %v4870
        %v5822 = vsel %vm5808, %v5773, %v4872
        %v5823 = vsel %vm5808, %v5774, %v4874
        %v5824 = vsel %vm5808, %v5775, %v4876
        %v5825 = vsel %vm5808, %v5776, %v4878
        %v5826 = vsel %vm5808, %v5777, %v4880
        %v5827 = vsel %vm5808, %v5778, %v4882
        %v5828 = vsel %vm5808, %v5779, %v4884
        %v5829 = vsel %vm5808, %v5780, %v4886
        %v5830 = vsel %vm5808, %v5781, %v4888
        %v5831 = vsel %vm5808, %v5782, %v4890
        %v5832 = vsel %vm5808, %v5783, %v4892
        %v5833 = vsel %vm5808, %v5784, %v4894
        %v5834 = vsel %vm5808, %v5785, %v4896
        %v5835 = vsel %vm5808, %v5786, %v4898
        %v5836 = vsel %vm5808, %v5787, %v4900
        %v5837 = vsel %vm5808, %v5788, %v4902
        %v5838 = vsel %vm5808, %v5789, %v4904
        %v5839 = vsel %vm5808, %v5790, %v4906
        %v5840 = vsel %vm5808, %v5791, %v4908
        %v5841 = vsel %vm5808, %v5792, %v4910
        %v5842 = vsel %vm5808, %v5793, %v4912
        %v5843 = vsel %vm5808, %v5794, %v4914
        %v5844 = vsel %vm5808, %v5795, %v4916
        %v5845 = vsel %vm5808, %v5796, %v4918
        %v5846 = vsel %vm5808, %v5797, %v4920
        %v5847 = vsel %vm5808, %v5798, %v4922
        %v5848 = vsel %vm5808, %v5799, %v4924
        %v5849 = vsel %vm5808, %v5800, %v4926
        %v5850 = vsel %vm5808, %v5801, %v4928
        %v5851 = vsel %vm5808, %v5802, %v4930
        %v5852 = vsel %vm5808, %v5803, %v4932
        %v5853 = vsel %vm5808, %v5804, %v4934
        %v5854 = vsel %vm5808, %v5805, %v4936
        %v5855 = vsel %vm5808, %v5806, %v4938
        %v5856 = vsel %vm5808, %v5807, %v4940
        %vm5857 = vcmask 392192
        %v5858 = vsel %vm5857, %v5809, %v5038
        %v5859 = vsel %vm5857, %v5810, %v5040
        %v5860 = vsel %vm5857, %v5811, %v5042
        %v5861 = vsel %vm5857, %v5812, %v5044
        %v5862 = vsel %vm5857, %v5813, %v5046
        %v5863 = vsel %vm5857, %v5814, %v5048
        %v5864 = vsel %vm5857, %v5815, %v5050
        %v5865 = vsel %vm5857, %v5816, %v5052
        %v5866 = vsel %vm5857, %v5817, %v5054
        %v5867 = vsel %vm5857, %v5818, %v5056
        %v5868 = vsel %vm5857, %v5819, %v5058
        %v5869 = vsel %vm5857, %v5820, %v5060
        %v5870 = vsel %vm5857, %v5821, %v5062
        %v5871 = vsel %vm5857, %v5822, %v5064
        %v5872 = vsel %vm5857, %v5823, %v5066
        %v5873 = vsel %vm5857, %v5824, %v5068
        %v5874 = vsel %vm5857, %v5825, %v5070
        %v5875 = vsel %vm5857, %v5826, %v5072
        %v5876 = vsel %vm5857, %v5827, %v5074
        %v5877 = vsel %vm5857, %v5828, %v5076
        %v5878 = vsel %vm5857, %v5829, %v5078
        %v5879 = vsel %vm5857, %v5830, %v5080
        %v5880 = vsel %vm5857, %v5831, %v5082
        %v5881 = vsel %vm5857, %v5832, %v5084
        %v5882 = vsel %vm5857, %v5833, %v5086
        %v5883 = vsel %vm5857, %v5834, %v5088
        %v5884 = vsel %vm5857, %v5835, %v5090
        %v5885 = vsel %vm5857, %v5836, %v5092
        %v5886 = vsel %vm5857, %v5837, %v5094
        %v5887 = vsel %vm5857, %v5838, %v5096
        %v5888 = vsel %vm5857, %v5839, %v5098
        %v5889 = vsel %vm5857, %v5840, %v5100
        %v5890 = vsel %vm5857, %v5841, %v5102
        %v5891 = vsel %vm5857, %v5842, %v5104
        %v5892 = vsel %vm5857, %v5843, %v5106
        %v5893 = vsel %vm5857, %v5844, %v5108
        %v5894 = vsel %vm5857, %v5845, %v5110
        %v5895 = vsel %vm5857, %v5846, %v5112
        %v5896 = vsel %vm5857, %v5847, %v5114
        %v5897 = vsel %vm5857, %v5848, %v5116
        %v5898 = vsel %vm5857, %v5849, %v5118
        %v5899 = vsel %vm5857, %v5850, %v5120
        %v5900 = vsel %vm5857, %v5851, %v5122
        %v5901 = vsel %vm5857, %v5852, %v5124
        %v5902 = vsel %vm5857, %v5853, %v5126
        %v5903 = vsel %vm5857, %v5854, %v5128
        %v5904 = vsel %vm5857, %v5855, %v5130
        %v5905 = vsel %vm5857, %v5856, %v5132
        %vm5906 = vcmask 457728
        %v5907 = vsel %vm5906, %v5858, %v5230
        %v5908 = vsel %vm5906, %v5859, %v5232
        %v5909 = vsel %vm5906, %v5860, %v5234
        %v5910 = vsel %vm5906, %v5861, %v5236
        %v5911 = vsel %vm5906, %v5862, %v5238
        %v5912 = vsel %vm5906, %v5863, %v5240
        %v5913 = vsel %vm5906, %v5864, %v5242
        %v5914 = vsel %vm5906, %v5865, %v5244
        %v5915 = vsel %vm5906, %v5866, %v5246
        %v5916 = vsel %vm5906, %v5867, %v5248
        %v5917 = vsel %vm5906, %v5868, %v5250
        %v5918 = vsel %vm5906, %v5869, %v5252
        %v5919 = vsel %vm5906, %v5870, %v5254
        %v5920 = vsel %vm5906, %v5871, %v5256
        %v5921 = vsel %vm5906, %v5872, %v5258
        %v5922 = vsel %vm5906, %v5873, %v5260
        %v5923 = vsel %vm5906, %v5874, %v5262
        %v5924 = vsel %vm5906, %v5875, %v5264
        %v5925 = vsel %vm5906, %v5876, %v5266
        %v5926 = vsel %vm5906, %v5877, %v5268
        %v5927 = vsel %vm5906, %v5878, %v5270
        %v5928 = vsel %vm5906, %v5879, %v5272
        %v5929 = vsel %vm5906, %v5880, %v5274
        %v5930 = vsel %vm5906, %v5881, %v5276
        %v5931 = vsel %vm5906, %v5882, %v5278
        %v5932 = vsel %vm5906, %v5883, %v5280
        %v5933 = vsel %vm5906, %v5884, %v5282
        %v5934 = vsel %vm5906, %v5885, %v5284
        %v5935 = vsel %vm5906, %v5886, %v5286
        %v5936 = vsel %vm5906, %v5887, %v5288
        %v5937 = vsel %vm5906, %v5888, %v5290
        %v5938 = vsel %vm5906, %v5889, %v5292
        %v5939 = vsel %vm5906, %v5890, %v5294
        %v5940 = vsel %vm5906, %v5891, %v5296
        %v5941 = vsel %vm5906, %v5892, %v5298
        %v5942 = vsel %vm5906, %v5893, %v5300
        %v5943 = vsel %vm5906, %v5894, %v5302
        %v5944 = vsel %vm5906, %v5895, %v5304
        %v5945 = vsel %vm5906, %v5896, %v5306
        %v5946 = vsel %vm5906, %v5897, %v5308
        %v5947 = vsel %vm5906, %v5898, %v5310
        %v5948 = vsel %vm5906, %v5899, %v5312
        %v5949 = vsel %vm5906, %v5900, %v5314
        %v5950 = vsel %vm5906, %v5901, %v5316
        %v5951 = vsel %vm5906, %v5902, %v5318
        %v5952 = vsel %vm5906, %v5903, %v5320
        %v5953 = vsel %vm5906, %v5904, %v5322
        %v5954 = vsel %vm5906, %v5905, %v5324
        %vm5955 = vcmask 523264
        %v5956 = vsel %vm5955, %v5907, %v5470
        %v5957 = vsel %vm5955, %v5908, %v5472
        %v5958 = vsel %vm5955, %v5909, %v5474
        %v5959 = vsel %vm5955, %v5910, %v5476
        %v5960 = vsel %vm5955, %v5911, %v5478
        %v5961 = vsel %vm5955, %v5912, %v5480
        %v5962 = vsel %vm5955, %v5913, %v5482
        %v5963 = vsel %vm5955, %v5914, %v5484
        %v5964 = vsel %vm5955, %v5915, %v5486
        %v5965 = vsel %vm5955, %v5916, %v5488
        %v5966 = vsel %vm5955, %v5917, %v5490
        %v5967 = vsel %vm5955, %v5918, %v5492
        %v5968 = vsel %vm5955, %v5919, %v5494
        %v5969 = vsel %vm5955, %v5920, %v5496
        %v5970 = vsel %vm5955, %v5921, %v5498
        %v5971 = vsel %vm5955, %v5922, %v5500
        %v5972 = vsel %vm5955, %v5923, %v5502
        %v5973 = vsel %vm5955, %v5924, %v5504
        %v5974 = vsel %vm5955, %v5925, %v5506
        %v5975 = vsel %vm5955, %v5926, %v5508
        %v5976 = vsel %vm5955, %v5927, %v5510
        %v5977 = vsel %vm5955, %v5928, %v5512
        %v5978 = vsel %vm5955, %v5929, %v5514
        %v5979 = vsel %vm5955, %v5930, %v5516
        %v5980 = vsel %vm5955, %v5931, %v5518
        %v5981 = vsel %vm5955, %v5932, %v5520
        %v5982 = vsel %vm5955, %v5933, %v5522
        %v5983 = vsel %vm5955, %v5934, %v5524
        %v5984 = vsel %vm5955, %v5935, %v5526
        %v5985 = vsel %vm5955, %v5936, %v5528
        %v5986 = vsel %vm5955, %v5937, %v5530
        %v5987 = vsel %vm5955, %v5938, %v5532
        %v5988 = vsel %vm5955, %v5939, %v5534
        %v5989 = vsel %vm5955, %v5940, %v5536
        %v5990 = vsel %vm5955, %v5941, %v5538
        %v5991 = vsel %vm5955, %v5942, %v5540
        %v5992 = vsel %vm5955, %v5943, %v5542
        %v5993 = vsel %vm5955, %v5944, %v5544
        %v5994 = vsel %vm5955, %v5945, %v5546
        %v5995 = vsel %vm5955, %v5946, %v5548
        %v5996 = vsel %vm5955, %v5947, %v5550
        %v5997 = vsel %vm5955, %v5948, %v5552
        %v5998 = vsel %vm5955, %v5949, %v5554
        %v5999 = vsel %vm5955, %v5950, %v5556
        %v6000 = vsel %vm5955, %v5951, %v5558
        %v6001 = vsel %vm5955, %v5952, %v5560
        %v6002 = vsel %vm5955, %v5953, %v5562
        %v6003 = vsel %vm5955, %v5954, %v5564
        %v6052 = vrot.slane %v5956, 7
        %v6053 = vrot.slane %v5957, 7
        %v6054 = vsel %vm2957, %v6052, %v6053
        %v6055 = vrot.slane %v5958, 7
        %v6056 = vsel %vm2957, %v6053, %v6055
        %v6057 = vrot.slane %v5959, 7
        %v6058 = vrot.slane %v5960, 7
        %v6059 = vsel %vm2957, %v6057, %v6058
        %v6060 = vrot.slane %v5961, 7
        %v6061 = vsel %vm2957, %v6058, %v6060
        %v6062 = vrot.slane %v5962, 7
        %v6063 = vrot.slane %v5963, 7
        %v6064 = vsel %vm2957, %v6062, %v6063
        %v6065 = vrot.slane %v5964, 7
        %v6066 = vsel %vm2957, %v6063, %v6065
        %v6067 = vrot.slane %v5965, 7
        %v6068 = vrot.slane %v5966, 7
        %v6069 = vsel %vm2957, %v6067, %v6068
        %v6070 = vrot.slane %v5967, 7
        %v6071 = vsel %vm2957, %v6068, %v6070
        %v6072 = vrot.slane %v5968, 7
        %v6073 = vrot.slane %v5969, 7
        %v6074 = vsel %vm2957, %v6072, %v6073
        %v6075 = vrot.slane %v5970, 7
        %v6076 = vsel %vm2957, %v6073, %v6075
        %v6077 = vrot.slane %v5971, 7
        %v6078 = vrot.slane %v5972, 7
        %v6079 = vsel %vm2957, %v6077, %v6078
        %v6080 = vrot.slane %v5973, 7
        %v6081 = vsel %vm2957, %v6078, %v6080
        %v6082 = vrot.slane %v5974, 7
        %v6083 = vrot.slane %v5975, 7
        %v6084 = vsel %vm2957, %v6082, %v6083
        %v6085 = vrot.slane %v5976, 7
        %v6086 = vsel %vm2957, %v6083, %v6085
        %v6087 = vrot.slane %v5977, 7
        %v6088 = vrot.slane %v5978, 7
        %v6089 = vsel %vm2957, %v6087, %v6088
        %v6090 = vrot.slane %v5979, 7
        %v6091 = vsel %vm2957, %v6088, %v6090
        %v6092 = vrot.slane %v5980, 7
        %v6093 = vrot.slane %v5981, 7
        %v6094 = vsel %vm2957, %v6092, %v6093
        %v6095 = vrot.slane %v5982, 7
        %v6096 = vsel %vm2957, %v6093, %v6095
        %v6097 = vrot.slane %v5983, 7
        %v6098 = vrot.slane %v5984, 7
        %v6099 = vsel %vm2957, %v6097, %v6098
        %v6100 = vrot.slane %v5985, 7
        %v6101 = vsel %vm2957, %v6098, %v6100
        %v6102 = vrot.slane %v5986, 7
        %v6103 = vrot.slane %v5987, 7
        %v6104 = vsel %vm2957, %v6102, %v6103
        %v6105 = vrot.slane %v5988, 7
        %v6106 = vsel %vm2957, %v6103, %v6105
        %v6107 = vrot.slane %v5989, 7
        %v6108 = vrot.slane %v5990, 7
        %v6109 = vsel %vm2957, %v6107, %v6108
        %v6110 = vrot.slane %v5991, 7
        %v6111 = vsel %vm2957, %v6108, %v6110
        %v6112 = vrot.slane %v5992, 7
        %v6113 = vrot.slane %v5993, 7
        %v6114 = vsel %vm2957, %v6112, %v6113
        %v6115 = vrot.slane %v5994, 7
        %v6116 = vsel %vm2957, %v6113, %v6115
        %v6117 = vrot.slane %v5995, 7
        %v6118 = vrot.slane %v5996, 7
        %v6119 = vsel %vm2957, %v6117, %v6118
        %v6120 = vrot.slane %v5997, 7
        %v6121 = vsel %vm2957, %v6118, %v6120
        %v6122 = vrot.slane %v5998, 7
        %v6123 = vrot.slane %v5999, 7
        %v6124 = vsel %vm2957, %v6122, %v6123
        %v6125 = vrot.slane %v6000, 7
        %v6126 = vsel %vm2957, %v6123, %v6125
        %v6127 = vrot.slane %v6001, 7
        %v6128 = vrot.slane %v6002, 7
        %v6129 = vsel %vm2957, %v6127, %v6128
        %v6130 = vrot.slane %v6003, 7
        %v6131 = vsel %vm2957, %v6128, %v6130
        %v6164 = vpack.c.bf16 %v6056, %v6054
        %v6165 = vpack.c.bf16 %v6061, %v6059
        %v6166 = vpack.c.bf16 %v6066, %v6064
        %v6167 = vpack.c.bf16 %v6071, %v6069
        %v6168 = vpack.c.bf16 %v6076, %v6074
        %v6169 = vpack.c.bf16 %v6081, %v6079
        %v6170 = vpack.c.bf16 %v6086, %v6084
        %v6171 = vpack.c.bf16 %v6091, %v6089
        %v6172 = vpack.c.bf16 %v6096, %v6094
        %v6173 = vpack.c.bf16 %v6101, %v6099
        %v6174 = vpack.c.bf16 %v6106, %v6104
        %v6175 = vpack.c.bf16 %v6111, %v6109
        %v6176 = vpack.c.bf16 %v6116, %v6114
        %v6177 = vpack.c.bf16 %v6121, %v6119
        %v6178 = vpack.c.bf16 %v6126, %v6124
        %v6179 = vpack.c.bf16 %v6131, %v6129
        %v6180 = vld [vmem:[%s3] sm:$0xf]
        %v6181 = vld [vmem:[%s3 + $0x4] sm:$0xf]
        %v6182 = vld [vmem:[%s3 + $0x8] sm:$0xf]
        %v6183 = vld [vmem:[%s3 + $0xc] sm:$0xf]
        %v6184 = vld [vmem:[%s3 + $0x10] sm:$0xf]
        %v6185 = vld [vmem:[%s3 + $0x14] sm:$0xf]
        %v6186 = vld [vmem:[%s3 + $0x18] sm:$0xf]
        %v6187 = vld [vmem:[%s3 + $0x1c] sm:$0xf]
        %v6188 = vld [vmem:[%s3 + $0x20] sm:$0xf]
        %v6189 = vld [vmem:[%s4] sm:$0x1]
        %v6191 = vlaneseq
        %v6192 = vshrl.u32 %v6191, 7
        %v6193 = vsub.s32 0, %v6192
        %v6194 = vrot.slane %v6189, %v6193
        %v6205 = vunpack.c.l.b16 %v6180
        %v6206 = vunpack.c.l.b16 %v6181
        %v6207 = vunpack.c.l.b16 %v6182
        %v6208 = vunpack.c.l.b16 %v6183
        %v6209 = vunpack.c.l.b16 %v6184
        %v6210 = vunpack.c.l.b16 %v6185
        %v6211 = vunpack.c.l.b16 %v6186
        %v6212 = vunpack.c.l.b16 %v6187
        %v6213 = vunpack.c.l.b16 %v6188
        %v6214 = vpack.c.b16 %v6206, %v6205
        %v6215 = vpack.c.b16 %v6208, %v6207
        %v6216 = vpack.c.b16 %v6210, %v6209
        %v6217 = vpack.c.b16 %v6212, %v6211
        %v6218 = vpack.c.b16 %v6213, %v6213
        %vm6223 = vcmask 588800
        %v6225 = vsel %vm6223, %v6164, 0
        %v6228 = vsel %vm6223, %v6165, 0
        %v6231 = vsel %vm6223, %v6166, 0
        %v6234 = vsel %vm6223, %v6167, 0
        %v6237 = vsel %vm6223, %v6168, 0
        %v6240 = vsel %vm6223, %v6169, 0
        %v6243 = vsel %vm6223, %v6170, 0
        %v6246 = vsel %vm6223, %v6171, 0
        %v6249 = vsel %vm6223, %v6172, 0
        %v6252 = vsel %vm6223, %v6173, 0
        %v6255 = vsel %vm6223, %v6174, 0
        %v6258 = vsel %vm6223, %v6175, 0
        %v6261 = vsel %vm6223, %v6176, 0
        %v6264 = vsel %vm6223, %v6177, 0
        %v6267 = vsel %vm6223, %v6178, 0
        %v6270 = vsel %vm6223, %v6179, 0
        %vm6272 = vcmask 1043456
        %v6274 = vsel %vm6272, %v6218, 0
        %6276 = vmatprep.subr.bf16.mxu0 0
        %6277 = vmatpush1.bf16.msra.mxu0 0
        %6278 = vmatprep.subr.bf16.mxu0 0
        %6279 = vmatpush1.bf16.msra.mxu0 0
        %6280 = vmatprep.subr.bf16.mxu0 0
        %6281 = vmatpush1.bf16.msra.mxu0 0
        %6282 = vmatprep.subr.bf16.mxu0 0
        %6283 = vmatpush1.bf16.msra.mxu0 %v6274
        %6284 = vmatprep.subr.bf16.mxu0 0
        %6285 = vmatpush1.bf16.msra.mxu0 %v6217
        %6286 = vmatprep.subr.bf16.mxu0 0
        %6287 = vmatpush1.bf16.msra.mxu0 %v6216
        %6288 = vmatprep.subr.bf16.mxu0 0
        %6289 = vmatpush1.bf16.msra.mxu0 %v6215
        %6290 = vmatprep.subr.bf16.mxu0 0
        %6291 = vmatpush1.bf16.msra.mxu0 %v6214
        %6292 = vmatprep.subr.bf16.mxu0 0
        %6293 = vmatpush2.bf16.msra.mxu0 0
        %6294 = vmatprep.subr.bf16.mxu0 0
        %6295 = vmatpush2.bf16.msra.mxu0 0
        %6296 = vmatprep.subr.bf16.mxu0 0
        %6297 = vmatpush2.bf16.msra.mxu0 0
        %6298 = vmatprep.subr.bf16.mxu0 0
        %6299 = vmatpush2.bf16.msra.mxu0 0
        %6300 = vmatprep.subr.bf16.mxu0 0
        %6301 = vmatpush2.bf16.msra.mxu0 0
        %6302 = vmatprep.subr.bf16.mxu0 0
        %6303 = vmatpush2.bf16.msra.mxu0 0
        %6304 = vmatprep.subr.bf16.mxu0 0
        %6305 = vmatpush2.bf16.msra.mxu0 0
        %6306 = vmatprep.subr.bf16.mxu0 0
        %6307 = vmatpush2.bf16.msra.mxu0 0
        %6308 = vmatprep.mubr.bf16.mxu0 0
        %6309 = vmatmul.mubr.bf16.gmra.mxu0 %v6225
        %v6310 = vpop.f32.mrf.mxu0
        %v6311 = vadd.f32 %v6194, %v6310
        %v6312 = vpop.f32.mrf.mxu0
        %v6313 = vpop.f32.mrf.mxu0
        %v6314 = vadd.f32 %v6194, %v6313
        %v6315 = vpop.f32.mrf.mxu0
        %6316 = vmatprep.mubr.bf16.mxu0 0
        %6317 = vmatmul.mubr.bf16.gmra.mxu0 %v6228
        %v6318 = vpop.f32.mrf.mxu0
        %v6319 = vadd.f32 %v6194, %v6318
        %v6320 = vpop.f32.mrf.mxu0
        %v6321 = vpop.f32.mrf.mxu0
        %v6322 = vadd.f32 %v6194, %v6321
        %v6323 = vpop.f32.mrf.mxu0
        %6324 = vmatprep.mubr.bf16.mxu0 0
        %6325 = vmatmul.mubr.bf16.gmra.mxu0 %v6231
        %v6326 = vpop.f32.mrf.mxu0
        %v6327 = vadd.f32 %v6194, %v6326
        %v6328 = vpop.f32.mrf.mxu0
        %v6329 = vpop.f32.mrf.mxu0
        %v6330 = vadd.f32 %v6194, %v6329
        %v6331 = vpop.f32.mrf.mxu0
        %6332 = vmatprep.mubr.bf16.mxu0 0
        %6333 = vmatmul.mubr.bf16.gmra.mxu0 %v6234
        %v6334 = vpop.f32.mrf.mxu0
        %v6335 = vadd.f32 %v6194, %v6334
        %v6336 = vpop.f32.mrf.mxu0
        %v6337 = vpop.f32.mrf.mxu0
        %v6338 = vadd.f32 %v6194, %v6337
        %v6339 = vpop.f32.mrf.mxu0
        %6340 = vmatprep.mubr.bf16.mxu0 0
        %6341 = vmatmul.mubr.bf16.gmra.mxu0 %v6237
        %v6342 = vpop.f32.mrf.mxu0
        %v6343 = vadd.f32 %v6194, %v6342
        %v6344 = vpop.f32.mrf.mxu0
        %v6345 = vpop.f32.mrf.mxu0
        %v6346 = vadd.f32 %v6194, %v6345
        %v6347 = vpop.f32.mrf.mxu0
        %6348 = vmatprep.mubr.bf16.mxu0 0
        %6349 = vmatmul.mubr.bf16.gmra.mxu0 %v6240
        %v6350 = vpop.f32.mrf.mxu0
        %v6351 = vadd.f32 %v6194, %v6350
        %v6352 = vpop.f32.mrf.mxu0
        %v6353 = vpop.f32.mrf.mxu0
        %v6354 = vadd.f32 %v6194, %v6353
        %v6355 = vpop.f32.mrf.mxu0
        %6356 = vmatprep.mubr.bf16.mxu0 0
        %6357 = vmatmul.mubr.bf16.gmra.mxu0 %v6243
        %v6358 = vpop.f32.mrf.mxu0
        %v6359 = vadd.f32 %v6194, %v6358
        %v6360 = vpop.f32.mrf.mxu0
        %v6361 = vpop.f32.mrf.mxu0
        %v6362 = vadd.f32 %v6194, %v6361
        %v6363 = vpop.f32.mrf.mxu0
        %6364 = vmatprep.mubr.bf16.mxu0 0
        %6365 = vmatmul.mubr.bf16.gmra.mxu0 %v6246
        %v6366 = vpop.f32.mrf.mxu0
        %v6367 = vadd.f32 %v6194, %v6366
        %v6368 = vpop.f32.mrf.mxu0
        %v6369 = vpop.f32.mrf.mxu0
        %v6370 = vadd.f32 %v6194, %v6369
        %v6371 = vpop.f32.mrf.mxu0
        %6372 = vmatprep.mubr.bf16.mxu0 0
        %6373 = vmatmul.mubr.bf16.gmra.mxu0 %v6249
        %v6374 = vpop.f32.mrf.mxu0
        %v6375 = vadd.f32 %v6194, %v6374
        %v6376 = vpop.f32.mrf.mxu0
        %v6377 = vpop.f32.mrf.mxu0
        %v6378 = vadd.f32 %v6194, %v6377
        %v6379 = vpop.f32.mrf.mxu0
        %6380 = vmatprep.mubr.bf16.mxu0 0
        %6381 = vmatmul.mubr.bf16.gmra.mxu0 %v6252
        %v6382 = vpop.f32.mrf.mxu0
        %v6383 = vadd.f32 %v6194, %v6382
        %v6384 = vpop.f32.mrf.mxu0
        %v6385 = vpop.f32.mrf.mxu0
        %v6386 = vadd.f32 %v6194, %v6385
        %v6387 = vpop.f32.mrf.mxu0
        %6388 = vmatprep.mubr.bf16.mxu0 0
        %6389 = vmatmul.mubr.bf16.gmra.mxu0 %v6255
        %v6390 = vpop.f32.mrf.mxu0
        %v6391 = vadd.f32 %v6194, %v6390
        %v6392 = vpop.f32.mrf.mxu0
        %v6393 = vpop.f32.mrf.mxu0
        %v6394 = vadd.f32 %v6194, %v6393
        %v6395 = vpop.f32.mrf.mxu0
        %6396 = vmatprep.mubr.bf16.mxu0 0
        %6397 = vmatmul.mubr.bf16.gmra.mxu0 %v6258
        %v6398 = vpop.f32.mrf.mxu0
        %v6399 = vadd.f32 %v6194, %v6398
        %v6400 = vpop.f32.mrf.mxu0
        %v6401 = vpop.f32.mrf.mxu0
        %v6402 = vadd.f32 %v6194, %v6401
        %v6403 = vpop.f32.mrf.mxu0
        %6404 = vmatprep.mubr.bf16.mxu0 0
        %6405 = vmatmul.mubr.bf16.gmra.mxu0 %v6261
        %v6406 = vpop.f32.mrf.mxu0
        %v6407 = vadd.f32 %v6194, %v6406
        %v6408 = vpop.f32.mrf.mxu0
        %v6409 = vpop.f32.mrf.mxu0
        %v6410 = vadd.f32 %v6194, %v6409
        %v6411 = vpop.f32.mrf.mxu0
        %6412 = vmatprep.mubr.bf16.mxu0 0
        %6413 = vmatmul.mubr.bf16.gmra.mxu0 %v6264
        %v6414 = vpop.f32.mrf.mxu0
        %v6415 = vadd.f32 %v6194, %v6414
        %v6416 = vpop.f32.mrf.mxu0
        %v6417 = vpop.f32.mrf.mxu0
        %v6418 = vadd.f32 %v6194, %v6417
        %v6419 = vpop.f32.mrf.mxu0
        %6420 = vmatprep.mubr.bf16.mxu0 0
        %6421 = vmatmul.mubr.bf16.gmra.mxu0 %v6267
        %v6422 = vpop.f32.mrf.mxu0
        %v6423 = vadd.f32 %v6194, %v6422
        %v6424 = vpop.f32.mrf.mxu0
        %v6425 = vpop.f32.mrf.mxu0
        %v6426 = vadd.f32 %v6194, %v6425
        %v6427 = vpop.f32.mrf.mxu0
        %6428 = vmatprep.mubr.bf16.mxu0 0
        %6429 = vmatmul.mubr.bf16.gmra.mxu0 %v6270
        %v6430 = vpop.f32.mrf.mxu0
        %v6431 = vadd.f32 %v6194, %v6430
        %v6432 = vpop.f32.mrf.mxu0
        %v6433 = vpop.f32.mrf.mxu0
        %v6434 = vadd.f32 %v6194, %v6433
        %v6435 = vpop.f32.mrf.mxu0
        %6436 = vdwg.mxu0
        %v6437 = vmax.f32 %v6311, 0.0
        %v6438 = vmax.f32 %v6314, 0.0
        %v6439 = vmax.f32 %v6319, 0.0
        %v6440 = vmax.f32 %v6322, 0.0
        %v6441 = vmax.f32 %v6327, 0.0
        %v6442 = vmax.f32 %v6330, 0.0
        %v6443 = vmax.f32 %v6335, 0.0
        %v6444 = vmax.f32 %v6338, 0.0
        %v6445 = vmax.f32 %v6343, 0.0
        %v6446 = vmax.f32 %v6346, 0.0
        %v6447 = vmax.f32 %v6351, 0.0
        %v6448 = vmax.f32 %v6354, 0.0
        %v6449 = vmax.f32 %v6359, 0.0
        %v6450 = vmax.f32 %v6362, 0.0
        %v6451 = vmax.f32 %v6367, 0.0
        %v6452 = vmax.f32 %v6370, 0.0
        %v6453 = vmax.f32 %v6375, 0.0
        %v6454 = vmax.f32 %v6378, 0.0
        %v6455 = vmax.f32 %v6383, 0.0
        %v6456 = vmax.f32 %v6386, 0.0
        %v6457 = vmax.f32 %v6391, 0.0
        %v6458 = vmax.f32 %v6394, 0.0
        %v6459 = vmax.f32 %v6399, 0.0
        %v6460 = vmax.f32 %v6402, 0.0
        %v6461 = vmax.f32 %v6407, 0.0
        %v6462 = vmax.f32 %v6410, 0.0
        %v6463 = vmax.f32 %v6415, 0.0
        %v6464 = vmax.f32 %v6418, 0.0
        %v6465 = vmax.f32 %v6423, 0.0
        %v6466 = vmax.f32 %v6426, 0.0
        %v6467 = vmax.f32 %v6431, 0.0
        %v6468 = vmax.f32 %v6434, 0.0
        %v6469 = vpack.c.bf16 %v6438, %v6437
        %v6470 = vpack.c.bf16 %v6440, %v6439
        %v6471 = vpack.c.bf16 %v6442, %v6441
        %v6472 = vpack.c.bf16 %v6444, %v6443
        %v6473 = vpack.c.bf16 %v6446, %v6445
        %v6474 = vpack.c.bf16 %v6448, %v6447
        %v6475 = vpack.c.bf16 %v6450, %v6449
        %v6476 = vpack.c.bf16 %v6452, %v6451
        %v6477 = vpack.c.bf16 %v6454, %v6453
        %v6478 = vpack.c.bf16 %v6456, %v6455
        %v6479 = vpack.c.bf16 %v6458, %v6457
        %v6480 = vpack.c.bf16 %v6460, %v6459
        %v6481 = vpack.c.bf16 %v6462, %v6461
        %v6482 = vpack.c.bf16 %v6464, %v6463
        %v6483 = vpack.c.bf16 %v6466, %v6465
        %v6484 = vpack.c.bf16 %v6468, %v6467
        %v6501 = vunpack.c.l.b16 %v6469
        %v6502 = vunpack.c.h.b16 %v6469
        %v6503 = vunpack.c.l.b16 %v6470
        %v6504 = vunpack.c.h.b16 %v6470
        %v6505 = vunpack.c.l.b16 %v6471
        %v6506 = vunpack.c.h.b16 %v6471
        %v6507 = vunpack.c.l.b16 %v6472
        %v6508 = vunpack.c.h.b16 %v6472
        %v6509 = vunpack.c.l.b16 %v6473
        %v6510 = vunpack.c.h.b16 %v6473
        %v6511 = vunpack.c.l.b16 %v6474
        %v6512 = vunpack.c.h.b16 %v6474
        %v6513 = vunpack.c.l.b16 %v6475
        %v6514 = vunpack.c.h.b16 %v6475
        %v6515 = vunpack.c.l.b16 %v6476
        %v6516 = vunpack.c.h.b16 %v6476
        %v6517 = vunpack.c.l.b16 %v6477
        %v6518 = vunpack.c.h.b16 %v6477
        %v6519 = vunpack.c.l.b16 %v6478
        %v6520 = vunpack.c.h.b16 %v6478
        %v6521 = vunpack.c.l.b16 %v6479
        %v6522 = vunpack.c.h.b16 %v6479
        %v6523 = vunpack.c.l.b16 %v6480
        %v6524 = vunpack.c.h.b16 %v6480
        %v6525 = vunpack.c.l.b16 %v6481
        %v6526 = vunpack.c.h.b16 %v6481
        %v6527 = vunpack.c.l.b16 %v6482
        %v6528 = vunpack.c.h.b16 %v6482
        %v6529 = vunpack.c.l.b16 %v6483
        %v6530 = vunpack.c.h.b16 %v6483
        %v6531 = vunpack.c.l.b16 %v6484
        %v6532 = vunpack.c.h.b16 %v6484
        %v6533 = vpack.c.b16 %v6501, %v6501
        %v6534 = vpack.c.b16 %v6502, %v6502
        %v6535 = vpack.c.b16 %v6503, %v6503
        %v6536 = vpack.c.b16 %v6504, %v6504
        %v6537 = vpack.c.b16 %v6505, %v6505
        %v6538 = vpack.c.b16 %v6506, %v6506
        %v6539 = vpack.c.b16 %v6507, %v6507
        %v6540 = vpack.c.b16 %v6508, %v6508
        %v6541 = vpack.c.b16 %v6509, %v6509
        %v6542 = vpack.c.b16 %v6510, %v6510
        %v6543 = vpack.c.b16 %v6511, %v6511
        %v6544 = vpack.c.b16 %v6512, %v6512
        %v6545 = vpack.c.b16 %v6513, %v6513
        %v6546 = vpack.c.b16 %v6514, %v6514
        %v6547 = vpack.c.b16 %v6515, %v6515
        %v6548 = vpack.c.b16 %v6516, %v6516
        %v6549 = vpack.c.b16 %v6517, %v6517
        %v6550 = vpack.c.b16 %v6518, %v6518
        %v6551 = vpack.c.b16 %v6519, %v6519
        %v6552 = vpack.c.b16 %v6520, %v6520
        %v6553 = vpack.c.b16 %v6521, %v6521
        %v6554 = vpack.c.b16 %v6522, %v6522
        %v6555 = vpack.c.b16 %v6523, %v6523
        %v6556 = vpack.c.b16 %v6524, %v6524
        %v6557 = vpack.c.b16 %v6525, %v6525
        %v6558 = vpack.c.b16 %v6526, %v6526
        %v6559 = vpack.c.b16 %v6527, %v6527
        %v6560 = vpack.c.b16 %v6528, %v6528
        %v6561 = vpack.c.b16 %v6529, %v6529
        %v6562 = vpack.c.b16 %v6530, %v6530
        %v6563 = vpack.c.b16 %v6531, %v6531
        %v6564 = vpack.c.b16 %v6532, %v6532
        %6597 = vst.msk [vmem:[%s262] sm:$0xf] %vm311, %v6533
        %6598 = vst.msk [vmem:[%s262 + $0x4] sm:$0xf] %vm311, %v6534
        %6599 = vst.msk [vmem:[%s262 + $0x8] sm:$0xf] %vm311, %v6535
        %6600 = vst.msk [vmem:[%s262 + $0xc] sm:$0xf] %vm311, %v6536
        %6601 = vst.msk [vmem:[%s262 + $0x10] sm:$0xf] %vm311, %v6537
        %6602 = vst.msk [vmem:[%s262 + $0x14] sm:$0xf] %vm311, %v6538
        %6603 = vst.msk [vmem:[%s262 + $0x18] sm:$0xf] %vm311, %v6539
        %6604 = vst.msk [vmem:[%s262 + $0x1c] sm:$0xf] %vm311, %v6540
        %6605 = vst.msk [vmem:[%s262 + $0x20] sm:$0xf] %vm311, %v6541
        %6606 = vst.msk [vmem:[%s262 + $0x24] sm:$0xf] %vm311, %v6542
        %6607 = vst.msk [vmem:[%s262 + $0x28] sm:$0xf] %vm311, %v6543
        %6608 = vst.msk [vmem:[%s262 + $0x2c] sm:$0xf] %vm311, %v6544
        %6609 = vst.msk [vmem:[%s262 + $0x30] sm:$0xf] %vm311, %v6545
        %6610 = vst.msk [vmem:[%s262 + $0x34] sm:$0xf] %vm311, %v6546
        %6611 = vst.msk [vmem:[%s262 + $0x38] sm:$0xf] %vm311, %v6547
        %6612 = vst.msk [vmem:[%s262 + $0x3c] sm:$0xf] %vm311, %v6548
        %6613 = vst.msk [vmem:[%s262 + $0x40] sm:$0xf] %vm311, %v6549
        %6614 = vst.msk [vmem:[%s262 + $0x44] sm:$0xf] %vm311, %v6550
        %6615 = vst.msk [vmem:[%s262 + $0x48] sm:$0xf] %vm311, %v6551
        %6616 = vst.msk [vmem:[%s262 + $0x4c] sm:$0xf] %vm311, %v6552
        %6617 = vst.msk [vmem:[%s262 + $0x50] sm:$0xf] %vm311, %v6553
        %6618 = vst.msk [vmem:[%s262 + $0x54] sm:$0xf] %vm311, %v6554
        %6619 = vst.msk [vmem:[%s262 + $0x58] sm:$0xf] %vm311, %v6555
        %6620 = vst.msk [vmem:[%s262 + $0x5c] sm:$0xf] %vm311, %v6556
        %6621 = vst.msk [vmem:[%s262 + $0x60] sm:$0xf] %vm311, %v6557
        %6622 = vst.msk [vmem:[%s262 + $0x64] sm:$0xf] %vm311, %v6558
        %6623 = vst.msk [vmem:[%s262 + $0x68] sm:$0xf] %vm311, %v6559
        %6624 = vst.msk [vmem:[%s262 + $0x6c] sm:$0xf] %vm311, %v6560
        %6625 = vst.msk [vmem:[%s262 + $0x70] sm:$0xf] %vm311, %v6561
        %6626 = vst.msk [vmem:[%s262 + $0x74] sm:$0xf] %vm311, %v6562
        %6627 = vst.msk [vmem:[%s262 + $0x78] sm:$0xf] %vm311, %v6563
        %6628 = vst.msk [vmem:[%s262 + $0x7c] sm:$0xf] %vm311, %v6564
        %v6629 = vmax.f32 %v6437, %v6439
        %v6630 = vmax.f32 %v6438, %v6440
        %v6631 = vmax.f32 %v6441, %v6443
        %v6632 = vmax.f32 %v6442, %v6444
        %v6633 = vmax.f32 %v6445, %v6447
        %v6634 = vmax.f32 %v6446, %v6448
        %v6635 = vmax.f32 %v6449, %v6451
        %v6636 = vmax.f32 %v6450, %v6452
        %v6637 = vmax.f32 %v6453, %v6455
        %v6638 = vmax.f32 %v6454, %v6456
        %v6639 = vmax.f32 %v6457, %v6459
        %v6640 = vmax.f32 %v6458, %v6460
        %v6641 = vmax.f32 %v6461, %v6463
        %v6642 = vmax.f32 %v6462, %v6464
        %v6643 = vmax.f32 %v6465, %v6467
        %v6644 = vmax.f32 %v6466, %v6468
        %6645 = vst.msk [vmem:[#allocation4] sm:$0xff] %vm5613, %v6629
        %6646 = vst.msk [vmem:[#allocation4 + $0x8] sm:$0xff] %vm5613, %v6630
        %6647 = vst.msk [vmem:[#allocation4 + $0x10] sm:$0xff] %vm5613, %v6631
        %6648 = vst.msk [vmem:[#allocation4 + $0x18] sm:$0xff] %vm5613, %v6632
        %6649 = vst.msk [vmem:[#allocation4 + $0x20] sm:$0xff] %vm5613, %v6633
        %6650 = vst.msk [vmem:[#allocation4 + $0x28] sm:$0xff] %vm5613, %v6634
        %6651 = vst.msk [vmem:[#allocation4 + $0x30] sm:$0xff] %vm5613, %v6635
        %6652 = vst.msk [vmem:[#allocation4 + $0x38] sm:$0xff] %vm5613, %v6636
        %6653 = vst.msk [vmem:[#allocation4 + $0x40] sm:$0xff] %vm5613, %v6637
        %6654 = vst.msk [vmem:[#allocation4 + $0x48] sm:$0xff] %vm5613, %v6638
        %6655 = vst.msk [vmem:[#allocation4 + $0x50] sm:$0xff] %vm5613, %v6639
        %6656 = vst.msk [vmem:[#allocation4 + $0x58] sm:$0xff] %vm5613, %v6640
        %6657 = vst.msk [vmem:[#allocation4 + $0x60] sm:$0xff] %vm5613, %v6641
        %6658 = vst.msk [vmem:[#allocation4 + $0x68] sm:$0xff] %vm5613, %v6642
        %6659 = vst.msk [vmem:[#allocation4 + $0x70] sm:$0xff] %vm5613, %v6643
        %6660 = vst.msk [vmem:[#allocation4 + $0x78] sm:$0xff] %vm5613, %v6644
        %v6661 = vld [vmem:[#allocation4] ss:$2 sm:$0xff]
        %s6662 = scalar_lea.vmem [#allocation4], 16
        %v6663 = vld [vmem:[%s6662] ss:$2 sm:$0xff]
        %s6664 = scalar_lea.vmem [#allocation4], 32
        %v6665 = vld [vmem:[%s6664] ss:$2 sm:$0xff]
        %s6666 = scalar_lea.vmem [#allocation4], 48
        %v6667 = vld [vmem:[%s6666] ss:$2 sm:$0xff]
        %s6668 = scalar_lea.vmem [#allocation4], 64
        %v6669 = vld [vmem:[%s6668] ss:$2 sm:$0xff]
        %s6670 = scalar_lea.vmem [#allocation4], 80
        %v6671 = vld [vmem:[%s6670] ss:$2 sm:$0xff]
        %s6672 = scalar_lea.vmem [#allocation4], 96
        %v6673 = vld [vmem:[%s6672] ss:$2 sm:$0xff]
        %s6674 = scalar_lea.vmem [#allocation4], 112
        %v6675 = vld [vmem:[%s6674] ss:$2 sm:$0xff]
        %s6676 = scalar_lea.vmem [#allocation4], 1
        %v6677 = vld [vmem:[%s6676] ss:$2 sm:$0xff]
        %s6678 = scalar_lea.vmem [#allocation4], 17
        %v6679 = vld [vmem:[%s6678] ss:$2 sm:$0xff]
        %s6680 = scalar_lea.vmem [#allocation4], 33
        %v6681 = vld [vmem:[%s6680] ss:$2 sm:$0xff]
        %s6682 = scalar_lea.vmem [#allocation4], 49
        %v6683 = vld [vmem:[%s6682] ss:$2 sm:$0xff]
        %s6684 = scalar_lea.vmem [#allocation4], 65
        %v6685 = vld [vmem:[%s6684] ss:$2 sm:$0xff]
        %s6686 = scalar_lea.vmem [#allocation4], 81
        %v6687 = vld [vmem:[%s6686] ss:$2 sm:$0xff]
        %s6688 = scalar_lea.vmem [#allocation4], 97
        %v6689 = vld [vmem:[%s6688] ss:$2 sm:$0xff]
        %s6690 = scalar_lea.vmem [#allocation4], 113
        %v6691 = vld [vmem:[%s6690] ss:$2 sm:$0xff]
        %v6692 = vmax.f32 %v6661, %v6677
        %v6693 = vmax.f32 %v6663, %v6679
        %v6694 = vmax.f32 %v6665, %v6681
        %v6695 = vmax.f32 %v6667, %v6683
        %v6696 = vmax.f32 %v6669, %v6685
        %v6697 = vmax.f32 %v6671, %v6687
        %v6698 = vmax.f32 %v6673, %v6689
        %v6699 = vmax.f32 %v6675, %v6691
        %v6700 = vpack.c.bf16 %v6692, %v6692
        %v6701 = vpack.c.bf16 %v6693, %v6693
        %v6702 = vpack.c.bf16 %v6694, %v6694
        %v6703 = vpack.c.bf16 %v6695, %v6695
        %v6704 = vpack.c.bf16 %v6696, %v6696
        %v6705 = vpack.c.bf16 %v6697, %v6697
        %v6706 = vpack.c.bf16 %v6698, %v6698
        %v6707 = vpack.c.bf16 %v6699, %v6699
        %6708 = vst.msk [vmem:[%s252] sm:$0xf] %vm311, %v6700
        %6709 = vst.msk [vmem:[%s252 + $0x4] sm:$0xf] %vm311, %v6701
        %6710 = vst.msk [vmem:[%s252 + $0x8] sm:$0xf] %vm311, %v6702
        %6711 = vst.msk [vmem:[%s252 + $0xc] sm:$0xf] %vm311, %v6703
        %6712 = vst.msk [vmem:[%s252 + $0x10] sm:$0xf] %vm311, %v6704
        %6713 = vst.msk [vmem:[%s252 + $0x14] sm:$0xf] %vm311, %v6705
        %6714 = vst.msk [vmem:[%s252 + $0x18] sm:$0xf] %vm311, %v6706
        %6715 = vst.msk [vmem:[%s252 + $0x1c] sm:$0xf] %vm311, %v6707
        %p6716 = scmp.lt.s32.totalorder %s21, 1
        %s6717 = scalar_select %p6716, %s21, 1
        %s6718 = smul.addr %s6717, 32
        %s6719 = smul.addr %s6718, 4
        %s6720 = scalar_lea.vmem %s5, %s6719
        %s6721 = sand.u32 %s165, 1
        %s6722 = scalar_lea.sflag [#allocation6], %s6721
        %s6723 = sand.u32 %s165, 1
        %s6724 = smul.addr %s6723, 32
        %s6725 = scalar_lea.vmem [#allocation5], %s6724
        // Predicated region
        $region41: #{tpu_custom_call.1} parent=39 // pred_check
          %p6726 = pneg %p149
        $region42: #{tpu_custom_call.1} parent=39 // pred_check_branch
          %6728 = sbr.rel (%p6726) target = $region44
        $region43: #{tpu_custom_call.1} parent=39 // pred_region
          _
        $region44: #{tpu_custom_call.1} parent=39 // pred_fallthru
          _
        // Predicated region
        $region45: #{tpu_custom_call.1} parent=39 // pred_check
          %p6729 = pneg %p175
        $region46: #{tpu_custom_call.1} parent=39 // pred_check_branch
          %6731 = sbr.rel (%p6729) target = $region48
        $region47: #{tpu_custom_call.1} parent=39 // pred_region
          %s6733 = ssub.s32 512, 512
          %6734 = vsyncadd %s6722, %s6733
          %s6735 = smul.addr %s21, 8
          %s6736 = smul.addr %s6735, 64
          %s6737 = scalar_lea.hbm %s6, %s6736
          %s6738 = sshll.u32 %s6725, 4
          %s6739 = int_to_ptr.vmem [resolvable:$true] %s6738
          %6744 = dma.vmem_to_hbm [thread:$0]  %s6739, 512, %s6737, %s6722, 64, 64, 4
        $region48: #{tpu_custom_call.1} parent=39 // pred_fallthru
          _
      $region40: #{tpu_custom_call.1} parent=5 // pred_fallthru
        _
      %p6745 = scmp.le.s32.totalorder 2, %s16
      // Predicated region
      $region49: #{tpu_custom_call.1} parent=5 // pred_check
        %p6746 = pneg %p6745
      $region50: #{tpu_custom_call.1} parent=5 // pred_check_branch
        %6748 = sbr.rel (%p6746) target = $region52
      $region51: #{tpu_custom_call.1} parent=5 // pred_region
        %s6749 = ssub.s32 %s16, 2
        // Predicated region
        $region53: #{tpu_custom_call.1} parent=51 // pred_check
          %p6750 = pneg %p155
        $region54: #{tpu_custom_call.1} parent=51 // pred_check_branch
          %6752 = sbr.rel (%p6750) target = $region56
        $region55: #{tpu_custom_call.1} parent=51 // pred_region
          %p6753 = scmp.lt.s32.totalorder %s22, 1
          %s6754 = scalar_select %p6753, %s22, 1
          %s6755 = smul.addr %s6754, 32
          %s6756 = smul.addr %s6755, 4
          %s6757 = scalar_lea.vmem %s5, %s6756
        $region56: #{tpu_custom_call.1} parent=51 // pred_fallthru
          _
        // Predicated region
        $region57: #{tpu_custom_call.1} parent=51 // pred_check
          %p6758 = pneg %p181
        $region58: #{tpu_custom_call.1} parent=51 // pred_check_branch
          %6760 = sbr.rel (%p6758) target = $region60
        $region59: #{tpu_custom_call.1} parent=51 // pred_region
          %s6761 = sand.u32 %s166, 1
          %s6762 = scalar_lea.sflag [#allocation6], %s6761
          %s6763 = sand.u32 %s166, 1
          %s6764 = smul.addr %s6763, 32
          %s6765 = scalar_lea.vmem [#allocation5], %s6764
          %6766 = dma.done %s6762, 512
        $region60: #{tpu_custom_call.1} parent=51 // pred_fallthru
          _
      $region52: #{tpu_custom_call.1} parent=5 // pred_fallthru
        _
    $region6: #{tpu_custom_call.1} parent=1 // loop_footer
      %s20 = sadd.s32 1, %s16
    $region7: #{tpu_custom_call.1} parent=1 // loop_footer_branch
      %15 = sbr.rel target = $region3
    $region8: #{tpu_custom_call.1} parent=1 // loop_exit
      _
    %6767 = vsyncpa [#allocation6], 1
    %s6768 = scalar_lea.sflag [#allocation6], 1
    %6769 = vsyncpa %s6768, 1

</llo_original>
